<compile_context>
chip_gen: v7x
topology: tpu7x:2x2x1
jax: 0.10.0
libtpu: 0.0.40
codegen_flags: <defaults>
</compile_context>

<pallas_src>
import functools

import numpy as np
import jax
import jax.numpy as jnp
from jax.experimental import pallas as pl
from jax.experimental.pallas import tpu as pltpu

MAX_TN = 2048     # max voxel tile (sublanes); multiple of 16 for bf16 inputs
MIN_TN = 256
COARSE_OUT = 32   # bf16 slab: [occ(1) cls(7) | dist(1) res(21) | occupancy(1) pad(1)]
FINAL_OUT = 40    # bf16 slab: [occ(1) cls(7) | dist(1) res(21) off(3) | occupancy(1) pad(6)]


def _round_up(v, m):
    return (v + m - 1) // m * m


def _pick_tn(n):
    """Largest tile <= MAX_TN that keeps >= 2 grid steps (v7x has 2 TCs)."""
    tn = MAX_TN
    while tn > MIN_TN and pl.cdiv(n, tn) < 2:
        tn //= 2
    return tn


# ----------------------------- Pallas kernels -----------------------------

def _heads_core(x_ref, w1_ref, w2_ref, cv_ref):
    """Fused per-voxel heads.

    h_all  = x @ [W1_mlps(pad->hw) | W_occ W_cls]   (one wide MXU matmul, f32 acc)
    h      = relu(h_all[:, :hw] * s + t)            (folded eval-mode BN)
    heads2 = h @ block_diag(W2_heads)               (one MXU matmul, f32 acc)

    cv_ref rows: [b1cat | s | t | b2cat] (lane-aligned at 0).  Results are
    round-tripped through bf16 so stored heads == values used downstream.
    """
    x = x_ref[...].astype(jnp.bfloat16)
    hw = w2_ref.shape[0]                       # padded hidden width (mult of 128)
    d2 = w2_ref.shape[1]
    b1 = cv_ref[0:1, :]
    h_all = jnp.dot(x, w1_ref[...], preferred_element_type=jnp.float32) + b1
    s = cv_ref[1:2, :hw]
    t = cv_ref[2:3, :hw]
    h = jnp.maximum(h_all[:, :hw] * s + t, 0.0)
    occ_cls = h_all[:, hw:]                    # (TN, 8), lane-aligned slice
    b2 = cv_ref[3:4, :d2]
    heads2 = jnp.dot(h.astype(jnp.bfloat16), w2_ref[...],
                     preferred_element_type=jnp.float32) + b2
    return occ_cls.astype(jnp.bfloat16), heads2.astype(jnp.bfloat16)


def _coarse_heads_kernel(x_ref, w1_ref, w2_ref, cv_ref, gm_ref, o_ref, *,
                         threshold):
    occ_cls_bf, heads2_bf = _heads_core(x_ref, w1_ref, w2_ref, cv_ref)
    tn = occ_cls_bf.shape[0]
    occ = occ_cls_bf[:, 0:1].astype(jnp.float32)
    occup = jnp.logical_and(occ > threshold,
                            gm_ref[...] > 0.5).astype(jnp.bfloat16)
    pad = o_ref.shape[1] - (8 + heads2_bf.shape[1] + 1)
    parts = [occ_cls_bf, heads2_bf, occup]
    if pad:
        parts.append(jnp.zeros((tn, pad), jnp.bfloat16))
    o_ref[...] = jnp.concatenate(parts, axis=-1)


def _final_heads_kernel(x_ref, w1_ref, w2_ref, cv_ref, aux_ref, ap_ref,
                        wm2_ref, o_ref, emb_ref, *, threshold):
    occ_cls_bf, heads2_bf = _heads_core(x_ref, w1_ref, w2_ref, cv_ref)
    tn = occ_cls_bf.shape[0]
    occ_cls = occ_cls_bf.astype(jnp.float32)
    heads2 = heads2_bf.astype(jnp.float32)
    occ = occ_cls[:, 0:1]
    logits = occ_cls[:, 1:8]
    dist = heads2[:, 0:1]
    res = heads2[:, 1:22]                       # (TN,21) == (TN,7,3) row-major
    off = heads2[:, 22:25]

    aux = aux_ref[...]                          # [gm, batch_idx, rxyz, pad(3)]
    gm = aux[:, 0:1]
    bidx = aux[:, 1:2]                          # integer-valued f32 (exact ==)
    rxyz = aux[:, 2:5]

    occup = jnp.logical_and(occ > threshold, gm > 0.5).astype(jnp.bfloat16)

    # ---- class selection: softmax-argmax == logits-argmax, first-max tie-break
    ids7 = jax.lax.broadcasted_iota(jnp.int32, (tn, 7), 1)
    maxv = jnp.max(logits, axis=-1, keepdims=True)
    class_ids = jnp.min(jnp.where(logits == maxv, ids7, jnp.int32(7)),
                        axis=-1, keepdims=True)                 # (TN,1)
    onehot7 = (ids7 == class_ids).astype(jnp.bfloat16)          # (TN,7)

    # ---- normals = anchors[class] + residuals[class] as ONE exact bf16 matmul:
    #      [onehot7 | onehot7 | onehot21*res] @ [anchors_hi; anchors_lo; P]
    ids21 = jax.lax.broadcasted_iota(jnp.int32, (tn, 21), 1)
    lo3 = 3 * class_ids
    onehot21 = jnp.logical_and(ids21 >= lo3, ids21 < lo3 + 3)
    masked_res = jnp.where(onehot21, res, 0.0).astype(jnp.bfloat16)  # bf16-exact
    sel = jnp.concatenate([onehot7, onehot7, masked_res], axis=-1)   # (TN,35)
    normals = jnp.dot(sel, ap_ref[...],
                      preferred_element_type=jnp.float32)            # (TN,3)

    # ---- plane distance: fold 0.12*dist/|n| into one scalar, rsqrt on EUP
    sumsq = jnp.sum(normals * normals, axis=-1, keepdims=True)
    scale = 0.12 * dist * jax.lax.rsqrt(jnp.maximum(sumsq, 1e-24))
    rn = jnp.sum(rxyz * normals, axis=-1, keepdims=True)
    D = -rn - scale * sumsq        # == -(rxyz + scale*n) . n
    planes = jnp.concatenate([normals, D], axis=-1)                  # (TN,4)
    center_h = jnp.concatenate([rxyz + off, jnp.ones((tn, 1), jnp.float32)],
                               axis=-1)                              # (TN,4)

    # ---- per-batch 4x4 transforms gathered on the MXU (hi/lo split ~ f32):
    #      flat32 = [onehot_b | onehot_b] @ [Wcat_hi; Wcat_lo]   (TN, 32)
    bs = wm2_ref.shape[0] // 2
    ids_b = jax.lax.broadcasted_iota(jnp.int32, (tn, bs), 1)
    onehot_b = (ids_b == bidx.astype(jnp.int32)).astype(jnp.bfloat16)
    flat32 = jnp.dot(jnp.concatenate([onehot_b, onehot_b], axis=-1),
                     wm2_ref[...], preferred_element_type=jnp.float32)

    # ---- vec(1x4) @ mat(4x4) per voxel, accumulated on (TN,4) lane slices
    planes_t = jnp.zeros((tn, 4), jnp.float32)
    center_t = jnp.zeros((tn, 4), jnp.float32)
    for d in range(4):
        planes_t = planes_t + planes[:, d:d + 1] * flat32[:, 4 * d:4 * d + 4]
        center_t = center_t + center_h[:, d:d + 1] * flat32[:, 16 + 4 * d:16 + 4 * d + 4]

    emb_ref[...] = jnp.concatenate([planes_t[:, :3], center_t[:, :3],
                                    planes_t[:, 3:4], occ], axis=-1)  # (TN,8) f32

    pad = o_ref.shape[1] - (8 + heads2_bf.shape[1] + 1)
    parts = [occ_cls_bf, heads2_bf, occup]
    if pad:
        parts.append(jnp.zeros((tn, pad), jnp.bfloat16))
    o_ref[...] = jnp.concatenate(parts, axis=-1)


# ----------------------------- pallas_call wrappers -----------------------------

def _grid_spec(n_tiles, in_specs, out_specs):
    return pltpu.PrefetchScalarGridSpec(
        num_scalar_prefetch=0, grid=(n_tiles,),
        in_specs=in_specs, out_specs=out_specs)


def fused_heads_coarse(x, fp, grid_mask, threshold):
    n, c = x.shape
    tn = _pick_tn(n)
    w1, w2, cv = fp['w1cat'], fp['w2bd'], fp['cvec']
    d1, hw, d2 = w1.shape[1], w2.shape[0], w2.shape[1]
    gm = grid_mask.astype(jnp.float32).reshape(-1, 1)

    out = pl.pallas_call(
        functools.partial(_coarse_heads_kernel, threshold=float(threshold)),
        out_shape=jax.ShapeDtypeStruct((n, COARSE_OUT), jnp.bfloat16),
        grid_spec=_grid_spec(
            pl.cdiv(n, tn),
            [pl.BlockSpec((tn, c), lambda i: (i, 0)),     # x
             pl.BlockSpec((c, d1), lambda i: (0, 0)),     # W1cat (bf16)
             pl.BlockSpec((hw, d2), lambda i: (0, 0)),    # W2 block-diag (bf16)
             pl.BlockSpec((4, d1), lambda i: (0, 0)),     # [b1|s|t|b2] slab
             pl.BlockSpec((tn, 1), lambda i: (i, 0))],    # grid mask
            pl.BlockSpec((tn, COARSE_OUT), lambda i: (i, 0))),
        compiler_params=pltpu.CompilerParams(dimension_semantics=("parallel",)),
    )(x, w1, w2, cv, gm)

    return {'occ': out[:, 0:1], 'class_logits': out[:, 1:8],
            'distance': out[:, 8:9], 'residuals': out[:, 9:30],
            'off_center': None, 'occupancy': out[:, 30] > 0.5}


def fused_heads_final(x, fp, aux, ap, wm2, threshold):
    n, c = x.shape
    tn = _pick_tn(n)
    w1, w2, cv = fp['w1cat'], fp['w2bd'], fp['cvec']
    d1, hw, d2 = w1.shape[1], w2.shape[0], w2.shape[1]
    nb2 = wm2.shape[0]

    heads, emb = pl.pallas_call(
        functools.partial(_final_heads_kernel, threshold=float(threshold)),
        out_shape=(jax.ShapeDtypeStruct((n, FINAL_OUT), jnp.bfloat16),
                   jax.ShapeDtypeStruct((n, 8), jnp.float32)),
        grid_spec=_grid_spec(
            pl.cdiv(n, tn),
            [pl.BlockSpec((tn, c), lambda i: (i, 0)),     # x
             pl.BlockSpec((c, d1), lambda i: (0, 0)),     # W1cat
             pl.BlockSpec((hw, d2), lambda i: (0, 0)),    # W2 block-diag
             pl.BlockSpec((4, d1), lambda i: (0, 0)),     # [b1|s|t|b2] slab
             pl.BlockSpec((tn, 8), lambda i: (i, 0)),     # aux [gm,bidx,rxyz,pad]
             pl.BlockSpec((35, 3), lambda i: (0, 0)),     # [anchors_hi;lo;P]
             pl.BlockSpec((nb2, 32), lambda i: (0, 0))],  # [Wcat_hi; Wcat_lo]
            [pl.BlockSpec((tn, FINAL_OUT), lambda i: (i, 0)),
             pl.BlockSpec((tn, 8), lambda i: (i, 0))]),
        compiler_params=pltpu.CompilerParams(dimension_semantics=("parallel",)),
    )(x, w1, w2, cv, aux, ap, wm2)

    return {'occ': heads[:, 0:1], 'class_logits': heads[:, 1:8],
            'distance': heads[:, 8:9], 'residuals': heads[:, 9:30],
            'off_center': heads[:, 30:33], 'occupancy': heads[:, 33] > 0.5,
            'embedding': emb}


# ----------------------------- parameters (deterministic, synthetic) -----------------------------

def _fold_bn(gamma, beta, mean, var, eps=1e-5):
    s = gamma / jnp.sqrt(var + eps)
    t = beta - mean * s
    return s[None, :], t[None, :]


def init_params(key, channels=(96, 48, 24)):
    def lin(k, ci, co, scale=0.1):
        w = scale * jax.random.normal(k, (ci, co), jnp.float32)
        b = scale * jax.random.normal(jax.random.fold_in(k, 1), (1, co), jnp.float32)
        return w, b

    params = []
    for i, c in enumerate(channels):
        keys = jax.random.split(jax.random.fold_in(key, i), 12)
        w_occ, b_occ = lin(keys[0], c, 1)        # occ_preds[i]
        w_cls, b_cls = lin(keys[1], c, 7)        # plane_class[i]
        wc = jnp.concatenate([w_occ, w_cls], axis=1)   # (c, 8)
        bc = jnp.concatenate([b_occ, b_cls], axis=1)   # (1, 8)

        def mlp_params(k1, k2, k3, co):
            w1, b1 = lin(k1, c, c)
            gamma = 1.0 + 0.1 * jax.random.normal(k2, (c,), jnp.float32)
            beta = 0.1 * jax.random.normal(jax.random.fold_in(k2, 1), (c,), jnp.float32)
            s, t = _fold_bn(gamma, beta, jnp.zeros((c,), jnp.float32),
                            jnp.ones((c,), jnp.float32))
            w2, b2 = lin(k3, c, co)
            return (w1, b1, s, t, w2, b2)

        p = {'occ_cls': (wc, bc),
             'distance': mlp_params(keys[2], keys[3], keys[4], 1),
             'residual': mlp_params(keys[5], keys[6], keys[7], 7 * 3)}
        if i == len(channels) - 1:
            p['off_center'] = mlp_params(keys[8], keys[9], keys[10], 3)
        params.append(p)

    anc = jax.random.normal(jax.random.fold_in(key, 99), (7, 3), jnp.float32)
    anc = anc / jnp.linalg.norm(anc, axis=1, keepdims=True)   # normal_anchors (7,3)
    return params, anc


def prepare_fused_params(params):
    """Per-level fused weight slabs (hidden region padded to a 128 multiple)."""
    fused = []
    n_last = len(params) - 1
    for i, p in enumerate(params):
        wc, bc = p['occ_cls']
        c = wc.shape[0]
        head_names = ['distance', 'residual'] + (['off_center'] if i == n_last else [])
        hp = [p[h] for h in head_names]
        kc = len(head_names) * c
        hw = _round_up(kc, 128)
        d2 = sum(w2.shape[1] for (_, _, _, _, w2, _) in hp)

        w1h = jnp.pad(jnp.concatenate([h[0] for h in hp], axis=1),
                      ((0, 0), (0, hw - kc)))
        w1cat = jnp.concatenate([w1h, wc], axis=1).astype(jnp.bfloat16)   # (c, hw+8)
        b1cat = jnp.concatenate(
            [jnp.pad(jnp.concatenate([h[1] for h in hp], axis=1),
                     ((0, 0), (0, hw - kc))), bc], axis=1)                 # (1, hw+8)
        scat = jnp.pad(jnp.concatenate([h[2] for h in hp], axis=1),
                       ((0, 0), (0, hw - kc)))
        tcat = jnp.pad(jnp.concatenate([h[3] for h in hp], axis=1),
                       ((0, 0), (0, hw - kc)))
        b2cat = jnp.concatenate([h[5] for h in hp], axis=1)                # (1, d2)

        w2bd = jnp.zeros((hw, d2), jnp.float32)
        col = 0
        for j, (_, _, _, _, w2, _) in enumerate(hp):
            dw = w2.shape[1]
            w2bd = w2bd.at[j * c:(j + 1) * c, col:col + dw].set(w2)
            col += dw

        d1 = hw + 8
        cvec = jnp.zeros((4, d1), jnp.float32)
        cvec = cvec.at[0, :].set(b1cat[0])
        cvec = cvec.at[1, :hw].set(scat[0])
        cvec = cvec.at[2, :hw].set(tcat[0])
        cvec = cvec.at[3, :d2].set(b2cat[0])

        fused.append(dict(w1cat=w1cat, w2bd=w2bd.astype(jnp.bfloat16), cvec=cvec))
    return fused


def prepare_geometry_consts(anchors):
    """[anchors_hi; anchors_lo; P] (35,3) bf16 — hi/lo split keeps ~f32 accuracy."""
    a_hi = anchors.astype(jnp.bfloat16).astype(jnp.float32)
    a_lo = anchors - a_hi
    P = np.zeros((21, 3), np.float32)
    for cc in range(7):
        for d in range(3):
            P[3 * cc + d, d] = 1.0
    return jnp.concatenate([a_hi, a_lo, jnp.asarray(P)], axis=0).astype(jnp.bfloat16)


def prepare_w2ac_consts(w2ac):
    """[ [W | inv(W).T]_hi ; [W | inv(W).T]_lo ] (2*bs, 32) bf16, row-major 4x4."""
    wflat = w2ac.reshape(-1, 16)
    winvT = jnp.transpose(jnp.linalg.inv(w2ac), (0, 2, 1)).reshape(-1, 16)
    wm = jnp.concatenate([wflat, winvT], axis=1)           # (bs, 32)
    wm_hi = wm.astype(jnp.bfloat16).astype(jnp.float32)
    wm_lo = wm - wm_hi
    return jnp.concatenate([wm_hi, wm_lo], axis=0).astype(jnp.bfloat16)


# ----------------------------- forward -----------------------------

def fragnet_forward(feats, r_coords_xyz, batch_idx, grid_masks, w2ac,
                    fused_params, geo_ap, thresholds=(0.0, 0.0, 0.0)):
    """feats[i]: (N, channels[i]) — stands in for SPVCNN output at level i."""
    n_scales = len(thresholds) - 1
    wm2 = prepare_w2ac_consts(w2ac)          # hoisted once (includes inv(W))

    outputs = {'heads': [], 'occupancy': []}
    for i, feat in enumerate(feats):
        if i < n_scales:
            head = fused_heads_coarse(feat, fused_params[i], grid_masks[i],
                                      thresholds[i])
        else:
            n = feat.shape[0]
            aux = jnp.concatenate(
                [grid_masks[i].astype(jnp.float32).reshape(-1, 1),
                 batch_idx.astype(jnp.float32).reshape(-1, 1),
                 r_coords_xyz.astype(jnp.float32),
                 jnp.zeros((n, 3), jnp.float32)], axis=1)     # (N, 8)
            head = fused_heads_final(feat, fused_params[i], aux, geo_ap, wm2,
                                     thresholds[i])
            outputs['embedding'] = head['embedding']
            outputs['feat'] = feat
        # TODO(synk): dynamic compaction feat[occupancy] / upsample to the next
        # level has data-dependent shape; kept as a dense mask instead.
        outputs['occupancy'].append(head['occupancy'])
        outputs['heads'].append(head)
    return outputs


# ----------------------------- plain-JAX reference (sanity check) -----------------------------

def _ref_mlp(x_bf, p):
    w1, b1, s, t, w2, b2 = p
    h = jnp.dot(x_bf, w1.astype(jnp.bfloat16),
                preferred_element_type=jnp.float32) + b1
    h = jnp.maximum(h * s + t, 0.0)
    return jnp.dot(h.astype(jnp.bfloat16), w2.astype(jnp.bfloat16),
                   preferred_element_type=jnp.float32) + b2


def _ref_heads(feat, p, with_off):
    xb = feat.astype(jnp.bfloat16)
    wc, bc = p['occ_cls']
    oc = jnp.dot(xb, wc.astype(jnp.bfloat16),
                 preferred_element_type=jnp.float32) + bc
    return {'occ': oc[:, :1], 'class_logits': oc[:, 1:8],
            'residuals': _ref_mlp(xb, p['residual']),
            'distance': _ref_mlp(xb, p['distance']),
            'off_center': _ref_mlp(xb, p['off_center']) if with_off else None}


def _ref_embedding(cls, res, dist, occ, off, rxyz, Wv, WinvT, anchors):
    n = cls.shape[0]
    ids = jnp.argmax(cls, axis=-1)
    rp = res.reshape(-1, 7, 3)[jnp.arange(n), ids]
    normals = anchors[ids] + rp
    nrm = jnp.maximum(jnp.linalg.norm(normals, axis=1, keepdims=True), 1e-12)
    op = rxyz + 0.12 * dist * normals / nrm
    D = -jnp.sum(op * normals, axis=-1, keepdims=True)
    planes = jnp.concatenate([normals, D], axis=-1)
    planes_t = jnp.einsum('nd,ndk->nk', planes, Wv)
    center_h = jnp.concatenate([rxyz + off, jnp.ones_like(rxyz[:, :1])], axis=-1)
    center_t = jnp.einsum('nd,ndk->nk', center_h, WinvT)
    return jnp.concatenate([planes_t[:, :3], center_t[:, :3],
                            planes_t[:, 3:4], occ], -1)


def _np32(x):
    return np.asarray(jnp.asarray(x, jnp.float32))


# ----------------------------- main -----------------------------

if __name__ == "__main__":
    key = jax.random.PRNGKey(0)
    N, bs = 1000, 2                      # N not a TN multiple -> exercises masked tail
    channels = (96, 48, 24)
    n_scales = len(channels) - 1
    thresholds = (0.0, 0.0, 0.0)

    params, anchors = init_params(key, channels)
    fused = prepare_fused_params(params)
    geo_ap = prepare_geometry_consts(anchors)
    # upstream producer emits bf16 directly (no wrapper-side cast pass)
    feats = [jax.random.normal(jax.random.fold_in(key, 10 + i), (N, c),
                               jnp.float32).astype(jnp.bfloat16)
             for i, c in enumerate(channels)]
    grid_masks = [jax.random.bernoulli(jax.random.fold_in(key, 20 + i), 0.8, (N,))
                  for i in range(len(channels))]
    rxyz = jax.random.normal(jax.random.fold_in(key, 30), (N, 3), jnp.float32)
    batch_idx = jax.random.randint(jax.random.fold_in(key, 31), (N,), 0, bs)
    w2ac = (jnp.eye(4, dtype=jnp.float32)[None]
            + 0.1 * jax.random.normal(jax.random.fold_in(key, 32), (bs, 4, 4),
                                      jnp.float32))

    outputs = fragnet_forward(feats, rxyz, batch_idx, grid_masks, w2ac,
                              fused, geo_ap, thresholds)
    emb = jax.block_until_ready(outputs['embedding'])

    # numerical sanity check vs plain-JAX reference (bf16 operands, f32 acc,
    # bf16-stored heads -> 2e-2 tolerance; f32 embedding -> 1e-3)
    for i, feat in enumerate(feats):
        ref = _ref_heads(feat, params[i], with_off=(i == n_scales))
        got = outputs['heads'][i]
        for k in ('occ', 'class_logits', 'residuals', 'distance'):
            np.testing.assert_allclose(_np32(got[k]), _np32(ref[k]),
                                       rtol=2e-2, atol=2e-2)
        if i == n_scales:
            np.testing.assert_allclose(_np32(got['off_center']),
                                       _np32(ref['off_center']),
                                       rtol=2e-2, atol=2e-2)
        # occupancy logic check against the kernel's own (bf16-stored) occ
        ref_occup = np.logical_and(_np32(got['occ'])[:, 0] > thresholds[i],
                                   np.asarray(grid_masks[i]))
        np.testing.assert_array_equal(np.asarray(outputs['occupancy'][i]), ref_occup)

    # embedding geometry check, fed from the kernel's own stored head outputs
    h = outputs['heads'][n_scales]
    Wv = w2ac[batch_idx]
    WinvT = jnp.transpose(jnp.linalg.inv(w2ac), (0, 2, 1))[batch_idx]
    ref_emb = _ref_embedding(jnp.asarray(h['class_logits'], jnp.float32),
                             jnp.asarray(h['residuals'], jnp.float32),
                             jnp.asarray(h['distance'], jnp.float32),
                             jnp.asarray(h['occ'], jnp.float32),
                             jnp.asarray(h['off_center'], jnp.float32),
                             rxyz, Wv, WinvT, anchors)
    np.testing.assert_allclose(np.asarray(emb), np.asarray(ref_emb),
                               rtol=1e-3, atol=1e-3)

    print("KERNEL_OK")
</pallas_src>

<mosaic_0001>
module attributes {stable_mosaic.version = 11 : i64} {
  func.func @_coarse_heads_kernel(%arg0: i32, %arg1: memref<512x96xbf16, #tpu.memory_space<vmem>>, %arg2: memref<96x264xbf16, #tpu.memory_space<vmem>>, %arg3: memref<256x22xbf16, #tpu.memory_space<vmem>>, %arg4: memref<4x264xf32, #tpu.memory_space<vmem>>, %arg5: memref<512x1xf32, #tpu.memory_space<vmem>>, %arg6: memref<512x32xbf16, #tpu.memory_space<vmem>>) attributes {dimension_semantics = [#tpu.dimension_semantics<parallel>], iteration_bounds = array<i64: 2>, scalar_prefetch = 0 : i64, scratch_operands = 0 : i64, tpu.core_type = #tpu.core_type<tc>, window_params = [{transform_indices = @transform_0, window_bounds = array<i64: 512, 96>}, {pipeline_mode = #tpu.pipeline_mode<synchronous>, transform_indices = @transform_1, window_bounds = array<i64: 96, 264>}, {pipeline_mode = #tpu.pipeline_mode<synchronous>, transform_indices = @transform_2, window_bounds = array<i64: 256, 22>}, {pipeline_mode = #tpu.pipeline_mode<synchronous>, transform_indices = @transform_3, window_bounds = array<i64: 4, 264>}, {transform_indices = @transform_4, window_bounds = array<i64: 512, 1>}, {transform_indices = @transform_5, window_bounds = array<i64: 512, 32>}]} {
    %c0 = arith.constant 0 : index
    %c0_0 = arith.constant 0 : index
    %0 = vector.load %arg1[%c0, %c0_0] : memref<512x96xbf16, #tpu.memory_space<vmem>>, vector<512x96xbf16>
    %c0_1 = arith.constant 0 : index
    %c0_2 = arith.constant 0 : index
    %1 = vector.load %arg4[%c0_1, %c0_2] : memref<4x264xf32, #tpu.memory_space<vmem>>, vector<1x264xf32>
    %c0_3 = arith.constant 0 : index
    %c0_4 = arith.constant 0 : index
    %2 = vector.load %arg2[%c0_3, %c0_4] : memref<96x264xbf16, #tpu.memory_space<vmem>>, vector<96x264xbf16>
    %cst = arith.constant dense<0.000000e+00> : vector<512x264xf32>
    %3 = tpu.matmul %0, %2, %cst {dimension_numbers = #tpu.dot_dimension_numbers<[1], [0], [0], [1], [0, 0, 1, 1], [], []>} : vector<512x96xbf16>, vector<96x264xbf16>, vector<512x264xf32> -> vector<512x264xf32>
    %4 = vector.broadcast %1 : vector<1x264xf32> to vector<512x264xf32>
    %5 = arith.addf %3, %4 : vector<512x264xf32>
    %c1 = arith.constant 1 : index
    %c0_5 = arith.constant 0 : index
    %6 = vector.load %arg4[%c1, %c0_5] : memref<4x264xf32, #tpu.memory_space<vmem>>, vector<1x256xf32>
    %c2 = arith.constant 2 : index
    %c0_6 = arith.constant 0 : index
    %7 = vector.load %arg4[%c2, %c0_6] : memref<4x264xf32, #tpu.memory_space<vmem>>, vector<1x256xf32>
    %8 = vector.extract_strided_slice %5 {offsets = [0, 0], sizes = [512, 256], strides = [1, 1]} : vector<512x264xf32> to vector<512x256xf32>
    %9 = vector.broadcast %6 : vector<1x256xf32> to vector<512x256xf32>
    %10 = arith.mulf %8, %9 : vector<512x256xf32>
    %11 = vector.broadcast %7 : vector<1x256xf32> to vector<512x256xf32>
    %12 = arith.addf %10, %11 : vector<512x256xf32>
    %cst_7 = arith.constant 0.000000e+00 : f32
    %13 = vector.broadcast %cst_7 : f32 to vector<512x256xf32>
    %14 = arith.maximumf %12, %13 : vector<512x256xf32>
    %15 = vector.extract_strided_slice %5 {offsets = [0, 256], sizes = [512, 8], strides = [1, 1]} : vector<512x264xf32> to vector<512x8xf32>
    %c3 = arith.constant 3 : index
    %c0_8 = arith.constant 0 : index
    %16 = vector.load %arg4[%c3, %c0_8] : memref<4x264xf32, #tpu.memory_space<vmem>>, vector<1x22xf32>
    %17 = arith.truncf %14 : vector<512x256xf32> to vector<512x256xbf16>
    %c0_9 = arith.constant 0 : index
    %c0_10 = arith.constant 0 : index
    %18 = vector.load %arg3[%c0_9, %c0_10] : memref<256x22xbf16, #tpu.memory_space<vmem>>, vector<256x22xbf16>
    %cst_11 = arith.constant dense<0.000000e+00> : vector<512x22xf32>
    %19 = tpu.matmul %17, %18, %cst_11 {dimension_numbers = #tpu.dot_dimension_numbers<[1], [0], [0], [1], [0, 0, 1, 1], [], []>} : vector<512x256xbf16>, vector<256x22xbf16>, vector<512x22xf32> -> vector<512x22xf32>
    %20 = vector.broadcast %16 : vector<1x22xf32> to vector<512x22xf32>
    %21 = arith.addf %19, %20 : vector<512x22xf32>
    %22 = arith.truncf %15 : vector<512x8xf32> to vector<512x8xbf16>
    %23 = arith.truncf %21 : vector<512x22xf32> to vector<512x22xbf16>
    %24 = vector.extract_strided_slice %22 {offsets = [0, 0], sizes = [512, 1], strides = [1, 1]} : vector<512x8xbf16> to vector<512x1xbf16>
    %25 = arith.extf %24 : vector<512x1xbf16> to vector<512x1xf32>
    %cst_12 = arith.constant 0.000000e+00 : f32
    %26 = vector.broadcast %cst_12 : f32 to vector<512x1xf32>
    %27 = arith.cmpf ogt, %25, %26 : vector<512x1xf32>
    %c0_13 = arith.constant 0 : index
    %c0_14 = arith.constant 0 : index
    %28 = vector.load %arg5[%c0_13, %c0_14] : memref<512x1xf32, #tpu.memory_space<vmem>>, vector<512x1xf32>
    %cst_15 = arith.constant 5.000000e-01 : f32
    %29 = vector.broadcast %cst_15 : f32 to vector<512x1xf32>
    %30 = arith.cmpf ogt, %28, %29 : vector<512x1xf32>
    %31 = arith.andi %27, %30 : vector<512x1xi1>
    %32 = arith.extui %31 : vector<512x1xi1> to vector<512x1xi32>
    %33 = arith.sitofp %32 : vector<512x1xi32> to vector<512x1xf32>
    %34 = arith.truncf %33 : vector<512x1xf32> to vector<512x1xbf16>
    %cst_16 = arith.constant 0.000000e+00 : bf16
    %35 = vector.broadcast %cst_16 : bf16 to vector<512x1xbf16>
    %36 = tpu.concatenate %22, %23, %34, %35 in 1 : vector<512x8xbf16>, vector<512x22xbf16>, vector<512x1xbf16>, vector<512x1xbf16> -> vector<512x32xbf16>
    %c0_17 = arith.constant 0 : index
    %c0_18 = arith.constant 0 : index
    %37 = vector.load %arg6[%c0_17, %c0_18] : memref<512x32xbf16, #tpu.memory_space<vmem>>, vector<512x32xbf16>
    tpu.vector_store %arg6[%c0_17, %c0_18], %36 {strides = array<i32>} : memref<512x32xbf16, #tpu.memory_space<vmem>>, vector<512x32xbf16>,
    return
  }
  func.func @transform_0(%arg0: i32) -> (i32, i32) {
    %c0_i32 = arith.constant 0 : i32
    %c0_i32_0 = arith.constant 0 : i32
    return %arg0, %c0_i32 : i32, i32
  }
  func.func @transform_1(%arg0: i32) -> (i32, i32) {
    %c0_i32 = arith.constant 0 : i32
    %c0_i32_0 = arith.constant 0 : i32
    %c0_i32_1 = arith.constant 0 : i32
    return %c0_i32, %c0_i32_0 : i32, i32
  }
  func.func @transform_2(%arg0: i32) -> (i32, i32) {
    %c0_i32 = arith.constant 0 : i32
    %c0_i32_0 = arith.constant 0 : i32
    %c0_i32_1 = arith.constant 0 : i32
    return %c0_i32, %c0_i32_0 : i32, i32
  }
  func.func @transform_3(%arg0: i32) -> (i32, i32) {
    %c0_i32 = arith.constant 0 : i32
    %c0_i32_0 = arith.constant 0 : i32
    %c0_i32_1 = arith.constant 0 : i32
    return %c0_i32, %c0_i32_0 : i32, i32
  }
  func.func @transform_4(%arg0: i32) -> (i32, i32) {
    %c0_i32 = arith.constant 0 : i32
    %c0_i32_0 = arith.constant 0 : i32
    return %arg0, %c0_i32 : i32, i32
  }
  func.func @transform_5(%arg0: i32) -> (i32, i32) {
    %c0_i32 = arith.constant 0 : i32
    %c0_i32_0 = arith.constant 0 : i32
    return %arg0, %c0_i32 : i32, i32
  }
}

</mosaic_0001>

<llo_original>
// kernel: tpu_custom_call.1
$region0: #{tpu_custom_call.1}
  #allocation0 [shape = 'u32[]', space=smem, size = 0x4, offset = 0x4, fixed_abs, tag = 'smem constant byte address 0x4 - core index']
  #allocation1 [shape = 'u32[144,128]{1,0:T(1,128)}', space=vmem, size = 0x12000, scoped, tag = 'internal scratch']
  %s0 = inlined_call_operand.vmem [shape: bf16[1000,96], index: 0, kind: input, shape index: {}]
  %s1 = inlined_call_operand.vmem [shape: bf16[96,264], index: 1, kind: input, shape index: {}]
  %s2 = inlined_call_operand.vmem [shape: bf16[256,22], index: 2, kind: input, shape index: {}]
  %s3 = inlined_call_operand.vmem [shape: f32[4,264], index: 3, kind: input, shape index: {}]
  %s4 = inlined_call_operand.vmem [shape: f32[1000,1], index: 4, kind: input, shape index: {}]
  %s5 = inlined_call_operand.vmem [shape: bf16[1000,32], index: 5, kind: output, shape index: {}]
  %s6 = sld [smem:[#allocation0]]
  $region97: #{tpu_custom_call.1} parent=0
    _
  %s8 = ssub.s32 1, %s6
  %s9 = scalar_select 0, %s8, %s6
  $region1: #{tpu_custom_call.1} parent=0
    #allocation2 [shape = 'u8[262144]{0}', space=vmem, size = 0x40000, scoped, tag = 'output window, operand 0']
    loop: start=0, step=1, limit=4
    $region2: #{tpu_custom_call.1} parent=1 // loop_pre_header
      _
    $region3: #{tpu_custom_call.1} parent=1 // loop_header
      %s11 = sphi 0, %s15
      %p12 = scmp.ge.s32.totalorder %s11, 4
      %s21 = sphi 0, %s23
      %s24 = sphi 0, %s21
      %s25 = sphi 0, %s24
      %s41 = sphi 0, %s25
      %s45 = sphi 0, %s45
      %s47 = sphi 0, %s45
      %s48 = sphi 0, %s47
      %s62 = sphi 0, %s48
      %s66 = sphi 0, %s66
      %s68 = sphi 0, %s66
      %s69 = sphi 0, %s68
      %s83 = sphi 0, %s69
      %s87 = sphi 0, %s87
      %s89 = sphi 0, %s87
      %s90 = sphi 0, %s89
      %s104 = sphi 0, %s90
      %s110 = sphi 0, %s112
      %s113 = sphi 0, %s110
      %s114 = sphi 0, %s113
      %s130 = sphi 0, %s114
      %s136 = sphi 0, %s138
      %s139 = sphi 0, %s136
      %s140 = sphi 0, %s139
      %s156 = sphi 0, %s140
    $region4: #{tpu_custom_call.1} parent=1 // loop_header_branch
      %14 = sbr.rel (%p12) target = $region8
    $region5: #{tpu_custom_call.1} parent=1 // loop_body
      %s16 = ssub.s32 %s11, 1
      %s17 = ssub.s32 %s11, 2
      %s18 = sadd.s32 %s11, 1
      %s19 = ssub.s32 %s11, %s18
      %p20 = scmp.eq.s32.totalorder %s19, 0
      %s22 = sadd.s32 %s21, 1
      %s23 = scalar_select %p20, %s21, %s22
      %p26 = pneg %p20
      %p27 = scmp.eq.s32.totalorder %s11, 1
      %p28 = por %p26, %p27
      %p29 = scmp.ne.s32.totalorder %s21, %s24
      %p30 = scmp.eq.s32.totalorder %s11, 0
      %p31 = por %p29, %p30
      %p32 = scmp.ne.s32.totalorder %s21, %s24
      %p33 = scmp.eq.s32.totalorder %s16, 1
      %p34 = por %p32, %p33
      %p35 = scmp.ne.s32.totalorder %s24, %s25
      %p36 = scmp.eq.s32.totalorder %s16, 0
      %p37 = por %p35, %p36
      %p38 = scmp.ne.s32.totalorder %s24, %s25
      %p39 = scmp.eq.s32.totalorder %s17, 1
      %p40 = por %p38, %p39
      %p42 = scmp.ne.s32.totalorder %s25, %s41
      %p43 = scmp.eq.s32.totalorder %s17, 0
      %p44 = por %p42, %p43
      %s46 = sadd.s32 %s45, 1
      %p49 = scmp.eq.s32.totalorder %s11, 1
      %p50 = scmp.ne.s32.totalorder %s45, %s47
      %p51 = scmp.eq.s32.totalorder %s11, 0
      %p52 = por %p50, %p51
      %p53 = scmp.ne.s32.totalorder %s45, %s47
      %p54 = scmp.eq.s32.totalorder %s16, 1
      %p55 = por %p53, %p54
      %p56 = scmp.ne.s32.totalorder %s47, %s48
      %p57 = scmp.eq.s32.totalorder %s16, 0
      %p58 = por %p56, %p57
      %p59 = scmp.ne.s32.totalorder %s47, %s48
      %p60 = scmp.eq.s32.totalorder %s17, 1
      %p61 = por %p59, %p60
      %p63 = scmp.ne.s32.totalorder %s48, %s62
      %p64 = scmp.eq.s32.totalorder %s17, 0
      %p65 = por %p63, %p64
      %s67 = sadd.s32 %s66, 1
      %p70 = scmp.eq.s32.totalorder %s11, 1
      %p71 = scmp.ne.s32.totalorder %s66, %s68
      %p72 = scmp.eq.s32.totalorder %s11, 0
      %p73 = por %p71, %p72
      %p74 = scmp.ne.s32.totalorder %s66, %s68
      %p75 = scmp.eq.s32.totalorder %s16, 1
      %p76 = por %p74, %p75
      %p77 = scmp.ne.s32.totalorder %s68, %s69
      %p78 = scmp.eq.s32.totalorder %s16, 0
      %p79 = por %p77, %p78
      %p80 = scmp.ne.s32.totalorder %s68, %s69
      %p81 = scmp.eq.s32.totalorder %s17, 1
      %p82 = por %p80, %p81
      %p84 = scmp.ne.s32.totalorder %s69, %s83
      %p85 = scmp.eq.s32.totalorder %s17, 0
      %p86 = por %p84, %p85
      %s88 = sadd.s32 %s87, 1
      %p91 = scmp.eq.s32.totalorder %s11, 1
      %p92 = scmp.ne.s32.totalorder %s87, %s89
      %p93 = scmp.eq.s32.totalorder %s11, 0
      %p94 = por %p92, %p93
      %p95 = scmp.ne.s32.totalorder %s87, %s89
      %p96 = scmp.eq.s32.totalorder %s16, 1
      %p97 = por %p95, %p96
      %p98 = scmp.ne.s32.totalorder %s89, %s90
      %p99 = scmp.eq.s32.totalorder %s16, 0
      %p100 = por %p98, %p99
      %p101 = scmp.ne.s32.totalorder %s89, %s90
      %p102 = scmp.eq.s32.totalorder %s17, 1
      %p103 = por %p101, %p102
      %p105 = scmp.ne.s32.totalorder %s90, %s104
      %p106 = scmp.eq.s32.totalorder %s17, 0
      %p107 = por %p105, %p106
      %s108 = ssub.s32 %s11, %s18
      %p109 = scmp.eq.s32.totalorder %s108, 0
      %s111 = sadd.s32 %s110, 1
      %s112 = scalar_select %p109, %s110, %s111
      %p115 = pneg %p109
      %p116 = scmp.eq.s32.totalorder %s11, 1
      %p117 = por %p115, %p116
      %p118 = scmp.ne.s32.totalorder %s110, %s113
      %p119 = scmp.eq.s32.totalorder %s11, 0
      %p120 = por %p118, %p119
      %p121 = scmp.ne.s32.totalorder %s110, %s113
      %p122 = scmp.eq.s32.totalorder %s16, 1
      %p123 = por %p121, %p122
      %p124 = scmp.ne.s32.totalorder %s113, %s114
      %p125 = scmp.eq.s32.totalorder %s16, 0
      %p126 = por %p124, %p125
      %p127 = scmp.ne.s32.totalorder %s113, %s114
      %p128 = scmp.eq.s32.totalorder %s17, 1
      %p129 = por %p127, %p128
      %p131 = scmp.ne.s32.totalorder %s114, %s130
      %p132 = scmp.eq.s32.totalorder %s17, 0
      %p133 = por %p131, %p132
      %s134 = ssub.s32 %s11, %s18
      %p135 = scmp.eq.s32.totalorder %s134, 0
      %s137 = sadd.s32 %s136, 1
      %s138 = scalar_select %p135, %s136, %s137
      %p141 = pneg %p135
      %p142 = scmp.eq.s32.totalorder %s11, 1
      %p143 = por %p141, %p142
      %p144 = scmp.ne.s32.totalorder %s136, %s139
      %p145 = scmp.eq.s32.totalorder %s11, 0
      %p146 = por %p144, %p145
      %p147 = scmp.ne.s32.totalorder %s136, %s139
      %p148 = scmp.eq.s32.totalorder %s16, 1
      %p149 = por %p147, %p148
      %p150 = scmp.ne.s32.totalorder %s139, %s140
      %p151 = scmp.eq.s32.totalorder %s16, 0
      %p152 = por %p150, %p151
      %p153 = scmp.ne.s32.totalorder %s139, %s140
      %p154 = scmp.eq.s32.totalorder %s17, 1
      %p155 = por %p153, %p154
      %p157 = scmp.ne.s32.totalorder %s140, %s156
      %p158 = scmp.eq.s32.totalorder %s17, 0
      %p159 = por %p157, %p158
      %p160 = scmp.le.s32.totalorder 1, %s11
      %p161 = scmp.lt.s32.totalorder %s11, 3
      %p162 = pnand %p160, %p161
      %p163 = pneg %p162
      // Predicated region
      $region9: #{tpu_custom_call.1} parent=5 // pred_check
        _
      $region10: #{tpu_custom_call.1} parent=5 // pred_check_branch
        %165 = sbr.rel (%p162) target = $region12
      $region11: #{tpu_custom_call.1} parent=5 // pred_region
        %s166 = ssub.s32 %s11, 1
        // Predicated region
        $region13: #{tpu_custom_call.1} parent=11 // pred_check
          %p167 = pneg %p58
        $region14: #{tpu_custom_call.1} parent=11 // pred_check_branch
          %169 = sbr.rel (%p167) target = $region16
        $region15: #{tpu_custom_call.1} parent=11 // pred_region
          _
        $region16: #{tpu_custom_call.1} parent=11 // pred_fallthru
          _
        // Predicated region
        $region17: #{tpu_custom_call.1} parent=11 // pred_check
          %p170 = pneg %p79
        $region18: #{tpu_custom_call.1} parent=11 // pred_check_branch
          %172 = sbr.rel (%p170) target = $region20
        $region19: #{tpu_custom_call.1} parent=11 // pred_region
          _
        $region20: #{tpu_custom_call.1} parent=11 // pred_fallthru
          _
        // Predicated region
        $region21: #{tpu_custom_call.1} parent=11 // pred_check
          %p173 = pneg %p100
        $region22: #{tpu_custom_call.1} parent=11 // pred_check_branch
          %175 = sbr.rel (%p173) target = $region24
        $region23: #{tpu_custom_call.1} parent=11 // pred_region
          _
        $region24: #{tpu_custom_call.1} parent=11 // pred_fallthru
          _
      $region12: #{tpu_custom_call.1} parent=5 // pred_fallthru
        _
      %p176 = scmp.lt.s32.totalorder %s11, 2
      // Predicated region
      $region25: #{tpu_custom_call.1} parent=5 // pred_check
        %p177 = pneg %p176
      $region26: #{tpu_custom_call.1} parent=5 // pred_check_branch
        %179 = sbr.rel (%p177) target = $region28
      $region27: #{tpu_custom_call.1} parent=5 // pred_region
        // Predicated region
        $region29: #{tpu_custom_call.1} parent=27 // pred_check
          %p180 = pneg %p31
        $region30: #{tpu_custom_call.1} parent=27 // pred_check_branch
          %182 = sbr.rel (%p180) target = $region32
        $region31: #{tpu_custom_call.1} parent=27 // pred_region
          %s183 = smul.u32 64, %s11
          %s184 = ssub.s32 125, %s183
          %p185 = scmp.lt.s32.totalorder %s184, 64
          %s186 = scalar_select %p185, %s184, 64
          %s187 = smul.u32 64, %s186
          %p188 = scmp.lt.s32.totalorder %s183, 124
          %s189 = scalar_select %p188, %s183, 124
          %s190 = smul.addr %s189, 4
          %s191 = scalar_lea.vmem %s0, %s190
          %s192 = smul.u32 64, %s11
          %s193 = ssub.s32 125, %s192
          %p194 = scmp.lt.s32.totalorder %s193, 64
          %s195 = scalar_select %p194, %s193, 64
          %s196 = smul.u32 64, %s195
        $region32: #{tpu_custom_call.1} parent=27 // pred_fallthru
          _
        // Predicated region
        $region33: #{tpu_custom_call.1} parent=27 // pred_check
          %p197 = pneg %p120
        $region34: #{tpu_custom_call.1} parent=27 // pred_check_branch
          %199 = sbr.rel (%p197) target = $region36
        $region35: #{tpu_custom_call.1} parent=27 // pred_region
          %s200 = smul.u32 64, %s11
          %s201 = ssub.s32 125, %s200
          %p202 = scmp.lt.s32.totalorder %s201, 64
          %s203 = scalar_select %p202, %s201, 64
          %s204 = smul.u32 128, %s203
          %p205 = scmp.lt.s32.totalorder %s200, 124
          %s206 = scalar_select %p205, %s200, 124
          %s207 = smul.addr %s206, 8
          %s208 = scalar_lea.vmem %s4, %s207
          %s209 = smul.u32 64, %s11
          %s210 = ssub.s32 125, %s209
          %p211 = scmp.lt.s32.totalorder %s210, 64
          %s212 = scalar_select %p211, %s210, 64
          %s213 = smul.u32 128, %s212
        $region36: #{tpu_custom_call.1} parent=27 // pred_fallthru
          _
      $region28: #{tpu_custom_call.1} parent=5 // pred_fallthru
        _
      %p214 = scmp.le.s32.totalorder 1, %s11
      %p215 = scmp.lt.s32.totalorder %s11, 3
      %p216 = pnand %p214, %p215
      %p217 = pneg %p216
      // Predicated region
      $region37: #{tpu_custom_call.1} parent=5 // pred_check
        _
      $region38: #{tpu_custom_call.1} parent=5 // pred_check_branch
        %219 = sbr.rel (%p216) target = $region40
      $region39: #{tpu_custom_call.1} parent=5 // pred_region
        %s220 = ssub.s32 %s11, 1
        %s221 = smul.u32 64, %s16
        %s222 = ssub.s32 125, %s221
        %p223 = scmp.lt.s32.totalorder %s222, 64
        %s224 = scalar_select %p223, %s222, 64
        %s225 = smul.u32 64, %s224
        %p226 = scmp.lt.s32.totalorder %s221, 124
        %s227 = scalar_select %p226, %s221, 124
        %s228 = smul.addr %s227, 4
        %s229 = scalar_lea.vmem %s0, %s228
        %p230 = pneg %p37
        %p231 = pneg %p34
        %p232 = pneg %p58
        %p233 = pneg %p55
        %p234 = pneg %p79
        %p235 = pneg %p76
        %p236 = pneg %p100
        %p237 = pneg %p97
        %s238 = smul.u32 64, %s16
        %s239 = ssub.s32 125, %s238
        %p240 = scmp.lt.s32.totalorder %s239, 64
        %s241 = scalar_select %p240, %s239, 64
        %s242 = smul.u32 128, %s241
        %p243 = scmp.lt.s32.totalorder %s238, 124
        %s244 = scalar_select %p243, %s238, 124
        %s245 = smul.addr %s244, 8
        %s246 = scalar_lea.vmem %s4, %s245
        %p247 = pneg %p126
        %p248 = pneg %p123
        %p249 = pneg %p152
        %p250 = pneg %p149
        %s251 = sand.u32 %s139, 1
        %s252 = sand.u32 %s139, 1
        %s253 = smul.addr %s252, 256
        %s254 = scalar_lea.vmem [#allocation2], %s253
        %s255 = smul.u32 64, %s16
        %s256 = ssub.s32 125, %s255
        %p257 = scmp.lt.s32.totalorder %s256, 64
        %s258 = scalar_select %p257, %s256, 64
        %s259 = smul.u32 64, %s258
        %p260 = scmp.lt.s32.totalorder %s255, 124
        %s261 = scalar_select %p260, %s255, 124
        %s262 = smul.addr %s261, 4
        %s263 = scalar_lea.vmem %s0, %s262
        %s264 = smul.u32 64, %s16
        %s265 = ssub.s32 125, %s264
        %p266 = scmp.lt.s32.totalorder %s265, 64
        %s267 = scalar_select %p266, %s265, 64
        %s268 = smul.u32 64, %s267
        %s269 = smul.u32 64, %s16
        %s270 = ssub.s32 125, %s269
        %p271 = scmp.lt.s32.totalorder %s270, 64
        %s272 = scalar_select %p271, %s270, 64
        %s273 = smul.u32 128, %s272
        %p274 = scmp.lt.s32.totalorder %s269, 124
        %s275 = scalar_select %p274, %s269, 124
        %s276 = smul.addr %s275, 8
        %s277 = scalar_lea.vmem %s4, %s276
        %s278 = smul.u32 64, %s16
        %s279 = ssub.s32 125, %s278
        %p280 = scmp.lt.s32.totalorder %s279, 64
        %s281 = scalar_select %p280, %s279, 64
        %s282 = smul.u32 128, %s281
        %s283 = smul.u32 64, %s16
        %s284 = ssub.s32 125, %s283
        %p285 = scmp.lt.s32.totalorder %s284, 64
        %s286 = scalar_select %p285, %s284, 64
        %s287 = smul.u32 64, %s286
        %v289 = vld [vmem:[%s263] sm:$0xf]
        %v290 = vld [vmem:[%s263 + $0x4] sm:$0xf]
        %v291 = vld [vmem:[%s263 + $0x8] sm:$0xf]
        %v292 = vld [vmem:[%s263 + $0xc] sm:$0xf]
        %v293 = vld [vmem:[%s263 + $0x10] sm:$0xf]
        %v294 = vld [vmem:[%s263 + $0x14] sm:$0xf]
        %v295 = vld [vmem:[%s263 + $0x18] sm:$0xf]
        %v296 = vld [vmem:[%s263 + $0x1c] sm:$0xf]
        %v297 = vld [vmem:[%s263 + $0x20] sm:$0xf]
        %v298 = vld [vmem:[%s263 + $0x24] sm:$0xf]
        %v299 = vld [vmem:[%s263 + $0x28] sm:$0xf]
        %v300 = vld [vmem:[%s263 + $0x2c] sm:$0xf]
        %v301 = vld [vmem:[%s263 + $0x30] sm:$0xf]
        %v302 = vld [vmem:[%s263 + $0x34] sm:$0xf]
        %v303 = vld [vmem:[%s263 + $0x38] sm:$0xf]
        %v304 = vld [vmem:[%s263 + $0x3c] sm:$0xf]
        %v305 = vld [vmem:[%s263 + $0x40] sm:$0xf]
        %v306 = vld [vmem:[%s263 + $0x44] sm:$0xf]
        %v307 = vld [vmem:[%s263 + $0x48] sm:$0xf]
        %v308 = vld [vmem:[%s263 + $0x4c] sm:$0xf]
        %v309 = vld [vmem:[%s263 + $0x50] sm:$0xf]
        %v310 = vld [vmem:[%s263 + $0x54] sm:$0xf]
        %v311 = vld [vmem:[%s263 + $0x58] sm:$0xf]
        %v312 = vld [vmem:[%s263 + $0x5c] sm:$0xf]
        %v313 = vld [vmem:[%s263 + $0x60] sm:$0xf]
        %v314 = vld [vmem:[%s263 + $0x64] sm:$0xf]
        %v315 = vld [vmem:[%s263 + $0x68] sm:$0xf]
        %v316 = vld [vmem:[%s263 + $0x6c] sm:$0xf]
        %v317 = vld [vmem:[%s263 + $0x70] sm:$0xf]
        %v318 = vld [vmem:[%s263 + $0x74] sm:$0xf]
        %v319 = vld [vmem:[%s263 + $0x78] sm:$0xf]
        %v320 = vld [vmem:[%s263 + $0x7c] sm:$0xf]
        %v321 = vld [vmem:[%s263 + $0x80] sm:$0xf]
        %v322 = vld [vmem:[%s263 + $0x84] sm:$0xf]
        %v323 = vld [vmem:[%s263 + $0x88] sm:$0xf]
        %v324 = vld [vmem:[%s263 + $0x8c] sm:$0xf]
        %v325 = vld [vmem:[%s263 + $0x90] sm:$0xf]
        %v326 = vld [vmem:[%s263 + $0x94] sm:$0xf]
        %v327 = vld [vmem:[%s263 + $0x98] sm:$0xf]
        %v328 = vld [vmem:[%s263 + $0x9c] sm:$0xf]
        %v329 = vld [vmem:[%s263 + $0xa0] sm:$0xf]
        %v330 = vld [vmem:[%s263 + $0xa4] sm:$0xf]
        %v331 = vld [vmem:[%s263 + $0xa8] sm:$0xf]
        %v332 = vld [vmem:[%s263 + $0xac] sm:$0xf]
        %v333 = vld [vmem:[%s263 + $0xb0] sm:$0xf]
        %v334 = vld [vmem:[%s263 + $0xb4] sm:$0xf]
        %v335 = vld [vmem:[%s263 + $0xb8] sm:$0xf]
        %v336 = vld [vmem:[%s263 + $0xbc] sm:$0xf]
        %v337 = vld [vmem:[%s263 + $0xc0] sm:$0xf]
        %v338 = vld [vmem:[%s263 + $0xc4] sm:$0xf]
        %v339 = vld [vmem:[%s263 + $0xc8] sm:$0xf]
        %v340 = vld [vmem:[%s263 + $0xcc] sm:$0xf]
        %v341 = vld [vmem:[%s263 + $0xd0] sm:$0xf]
        %v342 = vld [vmem:[%s263 + $0xd4] sm:$0xf]
        %v343 = vld [vmem:[%s263 + $0xd8] sm:$0xf]
        %v344 = vld [vmem:[%s263 + $0xdc] sm:$0xf]
        %v345 = vld [vmem:[%s263 + $0xe0] sm:$0xf]
        %v346 = vld [vmem:[%s263 + $0xe4] sm:$0xf]
        %v347 = vld [vmem:[%s263 + $0xe8] sm:$0xf]
        %v348 = vld [vmem:[%s263 + $0xec] sm:$0xf]
        %v349 = vld [vmem:[%s263 + $0xf0] sm:$0xf]
        %v350 = vld [vmem:[%s263 + $0xf4] sm:$0xf]
        %v351 = vld [vmem:[%s263 + $0xf8] sm:$0xf]
        %v352 = vld [vmem:[%s263 + $0xfc] sm:$0xf]
        %v353 = vld [vmem:[%s3] ss:$4 sm:$0x7]
        %v354 = vld [vmem:[%s1] sm:$0xff]
        %v355 = vld [vmem:[%s1 + $0x8] sm:$0xf]
        %v356 = vld [vmem:[%s1 + $0xc] sm:$0xff]
        %v357 = vld [vmem:[%s1 + $0x14] sm:$0xf]
        %v358 = vld [vmem:[%s1 + $0x18] sm:$0xff]
        %v359 = vld [vmem:[%s1 + $0x20] sm:$0xf]
        %v360 = vld [vmem:[%s1 + $0x24] sm:$0xff]
        %v361 = vld [vmem:[%s1 + $0x2c] sm:$0xf]
        %v362 = vld [vmem:[%s1 + $0x30] sm:$0xff]
        %v363 = vld [vmem:[%s1 + $0x38] sm:$0xf]
        %v364 = vld [vmem:[%s1 + $0x3c] sm:$0xff]
        %v365 = vld [vmem:[%s1 + $0x44] sm:$0xf]
        %v366 = vld [vmem:[%s1 + $0x48] sm:$0xff]
        %v367 = vld [vmem:[%s1 + $0x50] sm:$0xf]
        %v368 = vld [vmem:[%s1 + $0x54] sm:$0xff]
        %v369 = vld [vmem:[%s1 + $0x5c] sm:$0xf]
        %v370 = vld [vmem:[%s1 + $0x60] sm:$0xff]
        %v371 = vld [vmem:[%s1 + $0x68] sm:$0xf]
        %v372 = vld [vmem:[%s1 + $0x6c] sm:$0xff]
        %v373 = vld [vmem:[%s1 + $0x74] sm:$0xf]
        %v374 = vld [vmem:[%s1 + $0x78] sm:$0xff]
        %v375 = vld [vmem:[%s1 + $0x80] sm:$0xf]
        %v376 = vld [vmem:[%s1 + $0x84] sm:$0xff]
        %v377 = vld [vmem:[%s1 + $0x8c] sm:$0xf]
        %v379 = vlaneseq
        %v380 = vshrl.u32 %v379, 7
        %v381 = vsub.s32 0, %v380
        %v382 = vrot.slane %v353, %v381
        %v383 = vlaneseq
        %v384 = vshrl.u32 %v383, 7
        %v385 = vsub.s32 1, %v384
        %v386 = vrot.slane %v353, %v385
        %v387 = vlaneseq
        %v388 = vshrl.u32 %v387, 7
        %v389 = vsub.s32 2, %v388
        %v390 = vrot.slane %v353, %v389
        %v458 = vunpack.c.l.b16 %v289
        %v459 = vunpack.c.l.b16 %v290
        %v460 = vunpack.c.l.b16 %v291
        %v461 = vunpack.c.l.b16 %v292
        %v462 = vunpack.c.l.b16 %v293
        %v463 = vunpack.c.l.b16 %v294
        %v464 = vunpack.c.l.b16 %v295
        %v465 = vunpack.c.l.b16 %v296
        %v466 = vunpack.c.l.b16 %v297
        %v467 = vunpack.c.l.b16 %v298
        %v468 = vunpack.c.l.b16 %v299
        %v469 = vunpack.c.l.b16 %v300
        %v470 = vunpack.c.l.b16 %v301
        %v471 = vunpack.c.l.b16 %v302
        %v472 = vunpack.c.l.b16 %v303
        %v473 = vunpack.c.l.b16 %v304
        %v474 = vunpack.c.l.b16 %v305
        %v475 = vunpack.c.l.b16 %v306
        %v476 = vunpack.c.l.b16 %v307
        %v477 = vunpack.c.l.b16 %v308
        %v478 = vunpack.c.l.b16 %v309
        %v479 = vunpack.c.l.b16 %v310
        %v480 = vunpack.c.l.b16 %v311
        %v481 = vunpack.c.l.b16 %v312
        %v482 = vunpack.c.l.b16 %v313
        %v483 = vunpack.c.l.b16 %v314
        %v484 = vunpack.c.l.b16 %v315
        %v485 = vunpack.c.l.b16 %v316
        %v486 = vunpack.c.l.b16 %v317
        %v487 = vunpack.c.l.b16 %v318
        %v488 = vunpack.c.l.b16 %v319
        %v489 = vunpack.c.l.b16 %v320
        %v490 = vunpack.c.l.b16 %v321
        %v491 = vunpack.c.l.b16 %v322
        %v492 = vunpack.c.l.b16 %v323
        %v493 = vunpack.c.l.b16 %v324
        %v494 = vunpack.c.l.b16 %v325
        %v495 = vunpack.c.l.b16 %v326
        %v496 = vunpack.c.l.b16 %v327
        %v497 = vunpack.c.l.b16 %v328
        %v498 = vunpack.c.l.b16 %v329
        %v499 = vunpack.c.l.b16 %v330
        %v500 = vunpack.c.l.b16 %v331
        %v501 = vunpack.c.l.b16 %v332
        %v502 = vunpack.c.l.b16 %v333
        %v503 = vunpack.c.l.b16 %v334
        %v504 = vunpack.c.l.b16 %v335
        %v505 = vunpack.c.l.b16 %v336
        %v506 = vunpack.c.l.b16 %v337
        %v507 = vunpack.c.l.b16 %v338
        %v508 = vunpack.c.l.b16 %v339
        %v509 = vunpack.c.l.b16 %v340
        %v510 = vunpack.c.l.b16 %v341
        %v511 = vunpack.c.l.b16 %v342
        %v512 = vunpack.c.l.b16 %v343
        %v513 = vunpack.c.l.b16 %v344
        %v514 = vunpack.c.l.b16 %v345
        %v515 = vunpack.c.l.b16 %v346
        %v516 = vunpack.c.l.b16 %v347
        %v517 = vunpack.c.l.b16 %v348
        %v518 = vunpack.c.l.b16 %v349
        %v519 = vunpack.c.l.b16 %v350
        %v520 = vunpack.c.l.b16 %v351
        %v521 = vunpack.c.l.b16 %v352
        %v522 = vpack.c.b16 %v459, %v458
        %v523 = vpack.c.b16 %v461, %v460
        %v524 = vpack.c.b16 %v463, %v462
        %v525 = vpack.c.b16 %v465, %v464
        %v526 = vpack.c.b16 %v467, %v466
        %v527 = vpack.c.b16 %v469, %v468
        %v528 = vpack.c.b16 %v471, %v470
        %v529 = vpack.c.b16 %v473, %v472
        %v530 = vpack.c.b16 %v475, %v474
        %v531 = vpack.c.b16 %v477, %v476
        %v532 = vpack.c.b16 %v479, %v478
        %v533 = vpack.c.b16 %v481, %v480
        %v534 = vpack.c.b16 %v483, %v482
        %v535 = vpack.c.b16 %v485, %v484
        %v536 = vpack.c.b16 %v487, %v486
        %v537 = vpack.c.b16 %v489, %v488
        %v538 = vpack.c.b16 %v491, %v490
        %v539 = vpack.c.b16 %v493, %v492
        %v540 = vpack.c.b16 %v495, %v494
        %v541 = vpack.c.b16 %v497, %v496
        %v542 = vpack.c.b16 %v499, %v498
        %v543 = vpack.c.b16 %v501, %v500
        %v544 = vpack.c.b16 %v503, %v502
        %v545 = vpack.c.b16 %v505, %v504
        %v546 = vpack.c.b16 %v507, %v506
        %v547 = vpack.c.b16 %v509, %v508
        %v548 = vpack.c.b16 %v511, %v510
        %v549 = vpack.c.b16 %v513, %v512
        %v550 = vpack.c.b16 %v515, %v514
        %v551 = vpack.c.b16 %v517, %v516
        %v552 = vpack.c.b16 %v519, %v518
        %v553 = vpack.c.b16 %v521, %v520
        %v578 = vunpack.c.l.b16 %v354
        %v579 = vunpack.c.h.b16 %v354
        %v580 = vunpack.c.l.b16 %v355
        %v581 = vunpack.c.l.b16 %v356
        %v582 = vunpack.c.h.b16 %v356
        %v583 = vunpack.c.l.b16 %v357
        %v584 = vunpack.c.l.b16 %v358
        %v585 = vunpack.c.h.b16 %v358
        %v586 = vunpack.c.l.b16 %v359
        %v587 = vunpack.c.l.b16 %v360
        %v588 = vunpack.c.h.b16 %v360
        %v589 = vunpack.c.l.b16 %v361
        %v590 = vunpack.c.l.b16 %v362
        %v591 = vunpack.c.h.b16 %v362
        %v592 = vunpack.c.l.b16 %v363
        %v593 = vunpack.c.l.b16 %v364
        %v594 = vunpack.c.h.b16 %v364
        %v595 = vunpack.c.l.b16 %v365
        %v596 = vunpack.c.l.b16 %v366
        %v597 = vunpack.c.h.b16 %v366
        %v598 = vunpack.c.l.b16 %v367
        %v599 = vunpack.c.l.b16 %v368
        %v600 = vunpack.c.h.b16 %v368
        %v601 = vunpack.c.l.b16 %v369
        %v602 = vunpack.c.l.b16 %v370
        %v603 = vunpack.c.h.b16 %v370
        %v604 = vunpack.c.l.b16 %v371
        %v605 = vunpack.c.l.b16 %v372
        %v606 = vunpack.c.h.b16 %v372
        %v607 = vunpack.c.l.b16 %v373
        %v608 = vunpack.c.l.b16 %v374
        %v609 = vunpack.c.h.b16 %v374
        %v610 = vunpack.c.l.b16 %v375
        %v611 = vunpack.c.l.b16 %v376
        %v612 = vunpack.c.h.b16 %v376
        %v613 = vunpack.c.l.b16 %v377
        %v614 = vpack.c.b16 %v581, %v578
        %v615 = vpack.c.b16 %v582, %v579
        %v616 = vpack.c.b16 %v583, %v580
        %v617 = vpack.c.b16 %v587, %v584
        %v618 = vpack.c.b16 %v588, %v585
        %v619 = vpack.c.b16 %v589, %v586
        %v620 = vpack.c.b16 %v593, %v590
        %v621 = vpack.c.b16 %v594, %v591
        %v622 = vpack.c.b16 %v595, %v592
        %v623 = vpack.c.b16 %v599, %v596
        %v624 = vpack.c.b16 %v600, %v597
        %v625 = vpack.c.b16 %v601, %v598
        %v626 = vpack.c.b16 %v605, %v602
        %v627 = vpack.c.b16 %v606, %v603
        %v628 = vpack.c.b16 %v607, %v604
        %v629 = vpack.c.b16 %v611, %v608
        %v630 = vpack.c.b16 %v612, %v609
        %v631 = vpack.c.b16 %v613, %v610
        %vm650 = vcmask 785408
        %v652 = vsel %vm650, %v522, 0
        %v655 = vsel %vm650, %v523, 0
        %v658 = vsel %vm650, %v524, 0
        %v661 = vsel %vm650, %v525, 0
        %v664 = vsel %vm650, %v526, 0
        %v667 = vsel %vm650, %v527, 0
        %v670 = vsel %vm650, %v528, 0
        %v673 = vsel %vm650, %v529, 0
        %v676 = vsel %vm650, %v530, 0
        %v679 = vsel %vm650, %v531, 0
        %v682 = vsel %vm650, %v532, 0
        %v685 = vsel %vm650, %v533, 0
        %v688 = vsel %vm650, %v534, 0
        %v691 = vsel %vm650, %v535, 0
        %v694 = vsel %vm650, %v536, 0
        %v697 = vsel %vm650, %v537, 0
        %v700 = vsel %vm650, %v538, 0
        %v703 = vsel %vm650, %v539, 0
        %v706 = vsel %vm650, %v540, 0
        %v709 = vsel %vm650, %v541, 0
        %v712 = vsel %vm650, %v542, 0
        %v715 = vsel %vm650, %v543, 0
        %v718 = vsel %vm650, %v544, 0
        %v721 = vsel %vm650, %v545, 0
        %v724 = vsel %vm650, %v546, 0
        %v727 = vsel %vm650, %v547, 0
        %v730 = vsel %vm650, %v548, 0
        %v733 = vsel %vm650, %v549, 0
        %v736 = vsel %vm650, %v550, 0
        %v739 = vsel %vm650, %v551, 0
        %v742 = vsel %vm650, %v552, 0
        %v745 = vsel %vm650, %v553, 0
        %747 = vmatprep.subr.bf16.mxu0 %v615
        %748 = vmatpush1.bf16.msra.mxu0 %v614
        %749 = vmatprep.subr.bf16.mxu0 %v618
        %750 = vmatpush1.bf16.msra.mxu0 %v617
        %751 = vmatprep.subr.bf16.mxu0 %v621
        %752 = vmatpush1.bf16.msra.mxu0 %v620
        %753 = vmatprep.subr.bf16.mxu0 %v624
        %754 = vmatpush1.bf16.msra.mxu0 %v623
        %755 = vmatprep.subr.bf16.mxu0 %v627
        %756 = vmatpush1.bf16.msra.mxu0 %v626
        %757 = vmatprep.subr.bf16.mxu0 %v630
        %758 = vmatpush1.bf16.msra.mxu0 %v629
        %759 = vmatprep.subr.bf16.mxu0 0
        %760 = vmatpush1.bf16.msra.mxu0 0
        %761 = vmatprep.subr.bf16.mxu0 0
        %762 = vmatpush1.bf16.msra.mxu0 0
        %763 = vmatprep.subr.bf16.mxu0 0
        %764 = vmatpush1.bf16.msra.mxu0 0
        %765 = vmatprep.subr.bf16.mxu0 0
        %766 = vmatpush1.bf16.msra.mxu0 0
        %767 = vmatprep.subr.bf16.mxu0 0
        %768 = vmatpush1.bf16.msra.mxu0 0
        %769 = vmatprep.subr.bf16.mxu0 0
        %770 = vmatpush1.bf16.msra.mxu0 0
        %771 = vmatprep.subr.bf16.mxu0 0
        %772 = vmatpush1.bf16.msra.mxu0 0
        %773 = vmatprep.subr.bf16.mxu0 0
        %774 = vmatpush1.bf16.msra.mxu0 0
        %775 = vmatprep.subr.bf16.mxu0 0
        %776 = vmatpush1.bf16.msra.mxu0 0
        %777 = vmatprep.subr.bf16.mxu0 0
        %778 = vmatpush1.bf16.msra.mxu0 0
        %779 = vmatprep.mubr.bf16.mxu0 0
        %780 = vmatmul.mubr.bf16.gmra.mrb[0].mxu0 %v652
        %v781 = vpop.f32.mrb[0].mxu0
        %v782 = vadd.f32 %v382, %v781
        %v783 = vpop.f32.mrb[0].mxu0
        %v784 = vadd.f32 %v386, %v783
        %v785 = vpop.f32.mrb[0].mxu0
        %v786 = vadd.f32 %v382, %v785
        %v787 = vpop.f32.mrb[0].mxu0
        %v788 = vadd.f32 %v386, %v787
        %789 = vmatprep.mubr.bf16.mxu0 0
        %790 = vmatmul.mubr.bf16.gmra.mrb[0].mxu0 %v655
        %v791 = vpop.f32.mrb[0].mxu0
        %v792 = vadd.f32 %v382, %v791
        %v793 = vpop.f32.mrb[0].mxu0
        %v794 = vadd.f32 %v386, %v793
        %v795 = vpop.f32.mrb[0].mxu0
        %v796 = vadd.f32 %v382, %v795
        %v797 = vpop.f32.mrb[0].mxu0
        %v798 = vadd.f32 %v386, %v797
        %799 = vmatprep.mubr.bf16.mxu0 0
        %800 = vmatmul.mubr.bf16.gmra.mrb[0].mxu0 %v658
        %v801 = vpop.f32.mrb[0].mxu0
        %v802 = vadd.f32 %v382, %v801
        %v803 = vpop.f32.mrb[0].mxu0
        %v804 = vadd.f32 %v386, %v803
        %v805 = vpop.f32.mrb[0].mxu0
        %v806 = vadd.f32 %v382, %v805
        %v807 = vpop.f32.mrb[0].mxu0
        %v808 = vadd.f32 %v386, %v807
        %809 = vmatprep.mubr.bf16.mxu0 0
        %810 = vmatmul.mubr.bf16.gmra.mrb[0].mxu0 %v661
        %v811 = vpop.f32.mrb[0].mxu0
        %v812 = vadd.f32 %v382, %v811
        %v813 = vpop.f32.mrb[0].mxu0
        %v814 = vadd.f32 %v386, %v813
        %v815 = vpop.f32.mrb[0].mxu0
        %v816 = vadd.f32 %v382, %v815
        %v817 = vpop.f32.mrb[0].mxu0
        %v818 = vadd.f32 %v386, %v817
        %819 = vmatprep.mubr.bf16.mxu0 0
        %820 = vmatmul.mubr.bf16.gmra.mrb[0].mxu0 %v664
        %v821 = vpop.f32.mrb[0].mxu0
        %v822 = vadd.f32 %v382, %v821
        %v823 = vpop.f32.mrb[0].mxu0
        %v824 = vadd.f32 %v386, %v823
        %v825 = vpop.f32.mrb[0].mxu0
        %v826 = vadd.f32 %v382, %v825
        %v827 = vpop.f32.mrb[0].mxu0
        %v828 = vadd.f32 %v386, %v827
        %829 = vmatprep.mubr.bf16.mxu0 0
        %830 = vmatmul.mubr.bf16.gmra.mrb[0].mxu0 %v667
        %v831 = vpop.f32.mrb[0].mxu0
        %v832 = vadd.f32 %v382, %v831
        %v833 = vpop.f32.mrb[0].mxu0
        %v834 = vadd.f32 %v386, %v833
        %v835 = vpop.f32.mrb[0].mxu0
        %v836 = vadd.f32 %v382, %v835
        %v837 = vpop.f32.mrb[0].mxu0
        %v838 = vadd.f32 %v386, %v837
        %839 = vmatprep.mubr.bf16.mxu0 0
        %840 = vmatmul.mubr.bf16.gmra.mrb[0].mxu0 %v670
        %v841 = vpop.f32.mrb[0].mxu0
        %v842 = vadd.f32 %v382, %v841
        %v843 = vpop.f32.mrb[0].mxu0
        %v844 = vadd.f32 %v386, %v843
        %v845 = vpop.f32.mrb[0].mxu0
        %v846 = vadd.f32 %v382, %v845
        %v847 = vpop.f32.mrb[0].mxu0
        %v848 = vadd.f32 %v386, %v847
        %849 = vmatprep.mubr.bf16.mxu0 0
        %850 = vmatmul.mubr.bf16.gmra.mrb[0].mxu0 %v673
        %v851 = vpop.f32.mrb[0].mxu0
        %v852 = vadd.f32 %v382, %v851
        %v853 = vpop.f32.mrb[0].mxu0
        %v854 = vadd.f32 %v386, %v853
        %v855 = vpop.f32.mrb[0].mxu0
        %v856 = vadd.f32 %v382, %v855
        %v857 = vpop.f32.mrb[0].mxu0
        %v858 = vadd.f32 %v386, %v857
        %859 = vmatprep.mubr.bf16.mxu0 0
        %860 = vmatmul.mubr.bf16.gmra.mrb[0].mxu0 %v676
        %v861 = vpop.f32.mrb[0].mxu0
        %v862 = vadd.f32 %v382, %v861
        %v863 = vpop.f32.mrb[0].mxu0
        %v864 = vadd.f32 %v386, %v863
        %v865 = vpop.f32.mrb[0].mxu0
        %v866 = vadd.f32 %v382, %v865
        %v867 = vpop.f32.mrb[0].mxu0
        %v868 = vadd.f32 %v386, %v867
        %869 = vmatprep.mubr.bf16.mxu0 0
        %870 = vmatmul.mubr.bf16.gmra.mrb[0].mxu0 %v679
        %v871 = vpop.f32.mrb[0].mxu0
        %v872 = vadd.f32 %v382, %v871
        %v873 = vpop.f32.mrb[0].mxu0
        %v874 = vadd.f32 %v386, %v873
        %v875 = vpop.f32.mrb[0].mxu0
        %v876 = vadd.f32 %v382, %v875
        %v877 = vpop.f32.mrb[0].mxu0
        %v878 = vadd.f32 %v386, %v877
        %879 = vmatprep.mubr.bf16.mxu0 0
        %880 = vmatmul.mubr.bf16.gmra.mrb[0].mxu0 %v682
        %v881 = vpop.f32.mrb[0].mxu0
        %v882 = vadd.f32 %v382, %v881
        %v883 = vpop.f32.mrb[0].mxu0
        %v884 = vadd.f32 %v386, %v883
        %v885 = vpop.f32.mrb[0].mxu0
        %v886 = vadd.f32 %v382, %v885
        %v887 = vpop.f32.mrb[0].mxu0
        %v888 = vadd.f32 %v386, %v887
        %889 = vmatprep.mubr.bf16.mxu0 0
        %890 = vmatmul.mubr.bf16.gmra.mrb[0].mxu0 %v685
        %v891 = vpop.f32.mrb[0].mxu0
        %v892 = vadd.f32 %v382, %v891
        %v893 = vpop.f32.mrb[0].mxu0
        %v894 = vadd.f32 %v386, %v893
        %v895 = vpop.f32.mrb[0].mxu0
        %v896 = vadd.f32 %v382, %v895
        %v897 = vpop.f32.mrb[0].mxu0
        %v898 = vadd.f32 %v386, %v897
        %899 = vmatprep.mubr.bf16.mxu0 0
        %900 = vmatmul.mubr.bf16.gmra.mrb[0].mxu0 %v688
        %v901 = vpop.f32.mrb[0].mxu0
        %v902 = vadd.f32 %v382, %v901
        %v903 = vpop.f32.mrb[0].mxu0
        %v904 = vadd.f32 %v386, %v903
        %v905 = vpop.f32.mrb[0].mxu0
        %v906 = vadd.f32 %v382, %v905
        %v907 = vpop.f32.mrb[0].mxu0
        %v908 = vadd.f32 %v386, %v907
        %909 = vmatprep.mubr.bf16.mxu0 0
        %910 = vmatmul.mubr.bf16.gmra.mrb[0].mxu0 %v691
        %v911 = vpop.f32.mrb[0].mxu0
        %v912 = vadd.f32 %v382, %v911
        %v913 = vpop.f32.mrb[0].mxu0
        %v914 = vadd.f32 %v386, %v913
        %v915 = vpop.f32.mrb[0].mxu0
        %v916 = vadd.f32 %v382, %v915
        %v917 = vpop.f32.mrb[0].mxu0
        %v918 = vadd.f32 %v386, %v917
        %919 = vmatprep.mubr.bf16.mxu0 0
        %920 = vmatmul.mubr.bf16.gmra.mrb[0].mxu0 %v694
        %v921 = vpop.f32.mrb[0].mxu0
        %v922 = vadd.f32 %v382, %v921
        %v923 = vpop.f32.mrb[0].mxu0
        %v924 = vadd.f32 %v386, %v923
        %v925 = vpop.f32.mrb[0].mxu0
        %v926 = vadd.f32 %v382, %v925
        %v927 = vpop.f32.mrb[0].mxu0
        %v928 = vadd.f32 %v386, %v927
        %929 = vmatprep.mubr.bf16.mxu0 0
        %930 = vmatmul.mubr.bf16.gmra.mrb[0].mxu0 %v697
        %v931 = vpop.f32.mrb[0].mxu0
        %v932 = vadd.f32 %v382, %v931
        %v933 = vpop.f32.mrb[0].mxu0
        %v934 = vadd.f32 %v386, %v933
        %v935 = vpop.f32.mrb[0].mxu0
        %v936 = vadd.f32 %v382, %v935
        %v937 = vpop.f32.mrb[0].mxu0
        %v938 = vadd.f32 %v386, %v937
        %939 = vmatprep.mubr.bf16.mxu0 0
        %940 = vmatmul.mubr.bf16.gmra.mrb[0].mxu0 %v700
        %v941 = vpop.f32.mrb[0].mxu0
        %v942 = vadd.f32 %v382, %v941
        %v943 = vpop.f32.mrb[0].mxu0
        %v944 = vadd.f32 %v386, %v943
        %v945 = vpop.f32.mrb[0].mxu0
        %v946 = vadd.f32 %v382, %v945
        %v947 = vpop.f32.mrb[0].mxu0
        %v948 = vadd.f32 %v386, %v947
        %949 = vmatprep.mubr.bf16.mxu0 0
        %950 = vmatmul.mubr.bf16.gmra.mrb[0].mxu0 %v703
        %v951 = vpop.f32.mrb[0].mxu0
        %v952 = vadd.f32 %v382, %v951
        %v953 = vpop.f32.mrb[0].mxu0
        %v954 = vadd.f32 %v386, %v953
        %v955 = vpop.f32.mrb[0].mxu0
        %v956 = vadd.f32 %v382, %v955
        %v957 = vpop.f32.mrb[0].mxu0
        %v958 = vadd.f32 %v386, %v957
        %959 = vmatprep.mubr.bf16.mxu0 0
        %960 = vmatmul.mubr.bf16.gmra.mrb[0].mxu0 %v706
        %v961 = vpop.f32.mrb[0].mxu0
        %v962 = vadd.f32 %v382, %v961
        %v963 = vpop.f32.mrb[0].mxu0
        %v964 = vadd.f32 %v386, %v963
        %v965 = vpop.f32.mrb[0].mxu0
        %v966 = vadd.f32 %v382, %v965
        %v967 = vpop.f32.mrb[0].mxu0
        %v968 = vadd.f32 %v386, %v967
        %969 = vmatprep.mubr.bf16.mxu0 0
        %970 = vmatmul.mubr.bf16.gmra.mrb[0].mxu0 %v709
        %v971 = vpop.f32.mrb[0].mxu0
        %v972 = vadd.f32 %v382, %v971
        %v973 = vpop.f32.mrb[0].mxu0
        %v974 = vadd.f32 %v386, %v973
        %v975 = vpop.f32.mrb[0].mxu0
        %v976 = vadd.f32 %v382, %v975
        %v977 = vpop.f32.mrb[0].mxu0
        %v978 = vadd.f32 %v386, %v977
        %979 = vmatprep.mubr.bf16.mxu0 0
        %980 = vmatmul.mubr.bf16.gmra.mrb[0].mxu0 %v712
        %v981 = vpop.f32.mrb[0].mxu0
        %v982 = vadd.f32 %v382, %v981
        %v983 = vpop.f32.mrb[0].mxu0
        %v984 = vadd.f32 %v386, %v983
        %v985 = vpop.f32.mrb[0].mxu0
        %v986 = vadd.f32 %v382, %v985
        %v987 = vpop.f32.mrb[0].mxu0
        %v988 = vadd.f32 %v386, %v987
        %989 = vmatprep.mubr.bf16.mxu0 0
        %990 = vmatmul.mubr.bf16.gmra.mrb[0].mxu0 %v715
        %v991 = vpop.f32.mrb[0].mxu0
        %v992 = vadd.f32 %v382, %v991
        %v993 = vpop.f32.mrb[0].mxu0
        %v994 = vadd.f32 %v386, %v993
        %v995 = vpop.f32.mrb[0].mxu0
        %v996 = vadd.f32 %v382, %v995
        %v997 = vpop.f32.mrb[0].mxu0
        %v998 = vadd.f32 %v386, %v997
        %999 = vmatprep.mubr.bf16.mxu0 0
        %1000 = vmatmul.mubr.bf16.gmra.mrb[0].mxu0 %v718
        %v1001 = vpop.f32.mrb[0].mxu0
        %v1002 = vadd.f32 %v382, %v1001
        %v1003 = vpop.f32.mrb[0].mxu0
        %v1004 = vadd.f32 %v386, %v1003
        %v1005 = vpop.f32.mrb[0].mxu0
        %v1006 = vadd.f32 %v382, %v1005
        %v1007 = vpop.f32.mrb[0].mxu0
        %v1008 = vadd.f32 %v386, %v1007
        %1009 = vmatprep.mubr.bf16.mxu0 0
        %1010 = vmatmul.mubr.bf16.gmra.mrb[0].mxu0 %v721
        %v1011 = vpop.f32.mrb[0].mxu0
        %v1012 = vadd.f32 %v382, %v1011
        %v1013 = vpop.f32.mrb[0].mxu0
        %v1014 = vadd.f32 %v386, %v1013
        %v1015 = vpop.f32.mrb[0].mxu0
        %v1016 = vadd.f32 %v382, %v1015
        %v1017 = vpop.f32.mrb[0].mxu0
        %v1018 = vadd.f32 %v386, %v1017
        %1019 = vmatprep.mubr.bf16.mxu0 0
        %1020 = vmatmul.mubr.bf16.gmra.mrb[0].mxu0 %v724
        %v1021 = vpop.f32.mrb[0].mxu0
        %v1022 = vadd.f32 %v382, %v1021
        %v1023 = vpop.f32.mrb[0].mxu0
        %v1024 = vadd.f32 %v386, %v1023
        %v1025 = vpop.f32.mrb[0].mxu0
        %v1026 = vadd.f32 %v382, %v1025
        %v1027 = vpop.f32.mrb[0].mxu0
        %v1028 = vadd.f32 %v386, %v1027
        %1029 = vmatprep.mubr.bf16.mxu0 0
        %1030 = vmatmul.mubr.bf16.gmra.mrb[0].mxu0 %v727
        %v1031 = vpop.f32.mrb[0].mxu0
        %v1032 = vadd.f32 %v382, %v1031
        %v1033 = vpop.f32.mrb[0].mxu0
        %v1034 = vadd.f32 %v386, %v1033
        %v1035 = vpop.f32.mrb[0].mxu0
        %v1036 = vadd.f32 %v382, %v1035
        %v1037 = vpop.f32.mrb[0].mxu0
        %v1038 = vadd.f32 %v386, %v1037
        %1039 = vmatprep.mubr.bf16.mxu0 0
        %1040 = vmatmul.mubr.bf16.gmra.mrb[0].mxu0 %v730
        %v1041 = vpop.f32.mrb[0].mxu0
        %v1042 = vadd.f32 %v382, %v1041
        %v1043 = vpop.f32.mrb[0].mxu0
        %v1044 = vadd.f32 %v386, %v1043
        %v1045 = vpop.f32.mrb[0].mxu0
        %v1046 = vadd.f32 %v382, %v1045
        %v1047 = vpop.f32.mrb[0].mxu0
        %v1048 = vadd.f32 %v386, %v1047
        %1049 = vmatprep.mubr.bf16.mxu0 0
        %1050 = vmatmul.mubr.bf16.gmra.mrb[0].mxu0 %v733
        %v1051 = vpop.f32.mrb[0].mxu0
        %v1052 = vadd.f32 %v382, %v1051
        %v1053 = vpop.f32.mrb[0].mxu0
        %v1054 = vadd.f32 %v386, %v1053
        %v1055 = vpop.f32.mrb[0].mxu0
        %v1056 = vadd.f32 %v382, %v1055
        %v1057 = vpop.f32.mrb[0].mxu0
        %v1058 = vadd.f32 %v386, %v1057
        %1059 = vmatprep.mubr.bf16.mxu0 0
        %1060 = vmatmul.mubr.bf16.gmra.mrb[0].mxu0 %v736
        %v1061 = vpop.f32.mrb[0].mxu0
        %v1062 = vadd.f32 %v382, %v1061
        %v1063 = vpop.f32.mrb[0].mxu0
        %v1064 = vadd.f32 %v386, %v1063
        %v1065 = vpop.f32.mrb[0].mxu0
        %v1066 = vadd.f32 %v382, %v1065
        %v1067 = vpop.f32.mrb[0].mxu0
        %v1068 = vadd.f32 %v386, %v1067
        %1069 = vmatprep.mubr.bf16.mxu0 0
        %1070 = vmatmul.mubr.bf16.gmra.mrb[0].mxu0 %v739
        %v1071 = vpop.f32.mrb[0].mxu0
        %v1072 = vadd.f32 %v382, %v1071
        %v1073 = vpop.f32.mrb[0].mxu0
        %v1074 = vadd.f32 %v386, %v1073
        %v1075 = vpop.f32.mrb[0].mxu0
        %v1076 = vadd.f32 %v382, %v1075
        %v1077 = vpop.f32.mrb[0].mxu0
        %v1078 = vadd.f32 %v386, %v1077
        %1079 = vmatprep.mubr.bf16.mxu0 0
        %1080 = vmatmul.mubr.bf16.gmra.mrb[0].mxu0 %v742
        %v1081 = vpop.f32.mrb[0].mxu0
        %v1082 = vadd.f32 %v382, %v1081
        %v1083 = vpop.f32.mrb[0].mxu0
        %v1084 = vadd.f32 %v386, %v1083
        %v1085 = vpop.f32.mrb[0].mxu0
        %v1086 = vadd.f32 %v382, %v1085
        %v1087 = vpop.f32.mrb[0].mxu0
        %v1088 = vadd.f32 %v386, %v1087
        %1089 = vmatprep.mubr.bf16.mxu0 0
        %1090 = vmatmul.mubr.bf16.gmra.mrb[0].mxu0 %v745
        %v1091 = vpop.f32.mrb[0].mxu0
        %v1092 = vadd.f32 %v382, %v1091
        %v1093 = vpop.f32.mrb[0].mxu0
        %v1094 = vadd.f32 %v386, %v1093
        %v1095 = vpop.f32.mrb[0].mxu0
        %v1096 = vadd.f32 %v382, %v1095
        %v1097 = vpop.f32.mrb[0].mxu0
        %v1098 = vadd.f32 %v386, %v1097
        %1099 = vdwg.mxu0
        %1100 = vmatprep.subr.bf16.mxu0 0
        %1101 = vmatpush1.bf16.msra.mxu0 %v616
        %1102 = vmatprep.subr.bf16.mxu0 0
        %1103 = vmatpush1.bf16.msra.mxu0 %v619
        %1104 = vmatprep.subr.bf16.mxu0 0
        %1105 = vmatpush1.bf16.msra.mxu0 %v622
        %1106 = vmatprep.subr.bf16.mxu0 0
        %1107 = vmatpush1.bf16.msra.mxu0 %v625
        %1108 = vmatprep.subr.bf16.mxu0 0
        %1109 = vmatpush1.bf16.msra.mxu0 %v628
        %1110 = vmatprep.subr.bf16.mxu0 0
        %1111 = vmatpush1.bf16.msra.mxu0 %v631
        %1112 = vmatprep.subr.bf16.mxu0 0
        %1113 = vmatpush1.bf16.msra.mxu0 0
        %1114 = vmatprep.subr.bf16.mxu0 0
        %1115 = vmatpush1.bf16.msra.mxu0 0
        %1116 = vmatprep.subr.bf16.mxu0 0
        %1117 = vmatpush1.bf16.msra.mxu0 0
        %1118 = vmatprep.subr.bf16.mxu0 0
        %1119 = vmatpush1.bf16.msra.mxu0 0
        %1120 = vmatprep.subr.bf16.mxu0 0
        %1121 = vmatpush1.bf16.msra.mxu0 0
        %1122 = vmatprep.subr.bf16.mxu0 0
        %1123 = vmatpush1.bf16.msra.mxu0 0
        %1124 = vmatprep.subr.bf16.mxu0 0
        %1125 = vmatpush1.bf16.msra.mxu0 0
        %1126 = vmatprep.subr.bf16.mxu0 0
        %1127 = vmatpush1.bf16.msra.mxu0 0
        %1128 = vmatprep.subr.bf16.mxu0 0
        %1129 = vmatpush1.bf16.msra.mxu0 0
        %1130 = vmatprep.subr.bf16.mxu0 0
        %1131 = vmatpush1.bf16.msra.mxu0 0
        %1132 = vmatprep.mubr.bf16.mxu0 0
        %1133 = vmatmul.mubr.bf16.gmra.mrb[0].mxu0 %v652
        %v1134 = vpop.f32.mrb[0].mxu0
        %v1135 = vadd.f32 %v390, %v1134
        %v1136 = vpop.f32.mrb[0].mxu0
        %v1137 = vpop.f32.mrb[0].mxu0
        %v1138 = vadd.f32 %v390, %v1137
        %v1139 = vpop.f32.mrb[0].mxu0
        %1140 = vmatprep.mubr.bf16.mxu0 0
        %1141 = vmatmul.mubr.bf16.gmra.mrb[0].mxu0 %v655
        %v1142 = vpop.f32.mrb[0].mxu0
        %v1143 = vadd.f32 %v390, %v1142
        %v1144 = vpop.f32.mrb[0].mxu0
        %v1145 = vpop.f32.mrb[0].mxu0
        %v1146 = vadd.f32 %v390, %v1145
        %v1147 = vpop.f32.mrb[0].mxu0
        %1148 = vmatprep.mubr.bf16.mxu0 0
        %1149 = vmatmul.mubr.bf16.gmra.mrb[0].mxu0 %v658
        %v1150 = vpop.f32.mrb[0].mxu0
        %v1151 = vadd.f32 %v390, %v1150
        %v1152 = vpop.f32.mrb[0].mxu0
        %v1153 = vpop.f32.mrb[0].mxu0
        %v1154 = vadd.f32 %v390, %v1153
        %v1155 = vpop.f32.mrb[0].mxu0
        %1156 = vmatprep.mubr.bf16.mxu0 0
        %1157 = vmatmul.mubr.bf16.gmra.mrb[0].mxu0 %v661
        %v1158 = vpop.f32.mrb[0].mxu0
        %v1159 = vadd.f32 %v390, %v1158
        %v1160 = vpop.f32.mrb[0].mxu0
        %v1161 = vpop.f32.mrb[0].mxu0
        %v1162 = vadd.f32 %v390, %v1161
        %v1163 = vpop.f32.mrb[0].mxu0
        %1164 = vmatprep.mubr.bf16.mxu0 0
        %1165 = vmatmul.mubr.bf16.gmra.mrb[0].mxu0 %v664
        %v1166 = vpop.f32.mrb[0].mxu0
        %v1167 = vadd.f32 %v390, %v1166
        %v1168 = vpop.f32.mrb[0].mxu0
        %v1169 = vpop.f32.mrb[0].mxu0
        %v1170 = vadd.f32 %v390, %v1169
        %v1171 = vpop.f32.mrb[0].mxu0
        %1172 = vmatprep.mubr.bf16.mxu0 0
        %1173 = vmatmul.mubr.bf16.gmra.mrb[0].mxu0 %v667
        %v1174 = vpop.f32.mrb[0].mxu0
        %v1175 = vadd.f32 %v390, %v1174
        %v1176 = vpop.f32.mrb[0].mxu0
        %v1177 = vpop.f32.mrb[0].mxu0
        %v1178 = vadd.f32 %v390, %v1177
        %v1179 = vpop.f32.mrb[0].mxu0
        %1180 = vmatprep.mubr.bf16.mxu0 0
        %1181 = vmatmul.mubr.bf16.gmra.mrb[0].mxu0 %v670
        %v1182 = vpop.f32.mrb[0].mxu0
        %v1183 = vadd.f32 %v390, %v1182
        %v1184 = vpop.f32.mrb[0].mxu0
        %v1185 = vpop.f32.mrb[0].mxu0
        %v1186 = vadd.f32 %v390, %v1185
        %v1187 = vpop.f32.mrb[0].mxu0
        %1188 = vmatprep.mubr.bf16.mxu0 0
        %1189 = vmatmul.mubr.bf16.gmra.mrb[0].mxu0 %v673
        %v1190 = vpop.f32.mrb[0].mxu0
        %v1191 = vadd.f32 %v390, %v1190
        %v1192 = vpop.f32.mrb[0].mxu0
        %v1193 = vpop.f32.mrb[0].mxu0
        %v1194 = vadd.f32 %v390, %v1193
        %v1195 = vpop.f32.mrb[0].mxu0
        %1196 = vmatprep.mubr.bf16.mxu0 0
        %1197 = vmatmul.mubr.bf16.gmra.mrb[0].mxu0 %v676
        %v1198 = vpop.f32.mrb[0].mxu0
        %v1199 = vadd.f32 %v390, %v1198
        %v1200 = vpop.f32.mrb[0].mxu0
        %v1201 = vpop.f32.mrb[0].mxu0
        %v1202 = vadd.f32 %v390, %v1201
        %v1203 = vpop.f32.mrb[0].mxu0
        %1204 = vmatprep.mubr.bf16.mxu0 0
        %1205 = vmatmul.mubr.bf16.gmra.mrb[0].mxu0 %v679
        %v1206 = vpop.f32.mrb[0].mxu0
        %v1207 = vadd.f32 %v390, %v1206
        %v1208 = vpop.f32.mrb[0].mxu0
        %v1209 = vpop.f32.mrb[0].mxu0
        %v1210 = vadd.f32 %v390, %v1209
        %v1211 = vpop.f32.mrb[0].mxu0
        %1212 = vmatprep.mubr.bf16.mxu0 0
        %1213 = vmatmul.mubr.bf16.gmra.mrb[0].mxu0 %v682
        %v1214 = vpop.f32.mrb[0].mxu0
        %v1215 = vadd.f32 %v390, %v1214
        %v1216 = vpop.f32.mrb[0].mxu0
        %v1217 = vpop.f32.mrb[0].mxu0
        %v1218 = vadd.f32 %v390, %v1217
        %v1219 = vpop.f32.mrb[0].mxu0
        %1220 = vmatprep.mubr.bf16.mxu0 0
        %1221 = vmatmul.mubr.bf16.gmra.mrb[0].mxu0 %v685
        %v1222 = vpop.f32.mrb[0].mxu0
        %v1223 = vadd.f32 %v390, %v1222
        %v1224 = vpop.f32.mrb[0].mxu0
        %v1225 = vpop.f32.mrb[0].mxu0
        %v1226 = vadd.f32 %v390, %v1225
        %v1227 = vpop.f32.mrb[0].mxu0
        %1228 = vmatprep.mubr.bf16.mxu0 0
        %1229 = vmatmul.mubr.bf16.gmra.mrb[0].mxu0 %v688
        %v1230 = vpop.f32.mrb[0].mxu0
        %v1231 = vadd.f32 %v390, %v1230
        %v1232 = vpop.f32.mrb[0].mxu0
        %v1233 = vpop.f32.mrb[0].mxu0
        %v1234 = vadd.f32 %v390, %v1233
        %v1235 = vpop.f32.mrb[0].mxu0
        %1236 = vmatprep.mubr.bf16.mxu0 0
        %1237 = vmatmul.mubr.bf16.gmra.mrb[0].mxu0 %v691
        %v1238 = vpop.f32.mrb[0].mxu0
        %v1239 = vadd.f32 %v390, %v1238
        %v1240 = vpop.f32.mrb[0].mxu0
        %v1241 = vpop.f32.mrb[0].mxu0
        %v1242 = vadd.f32 %v390, %v1241
        %v1243 = vpop.f32.mrb[0].mxu0
        %1244 = vmatprep.mubr.bf16.mxu0 0
        %1245 = vmatmul.mubr.bf16.gmra.mrb[0].mxu0 %v694
        %v1246 = vpop.f32.mrb[0].mxu0
        %v1247 = vadd.f32 %v390, %v1246
        %v1248 = vpop.f32.mrb[0].mxu0
        %v1249 = vpop.f32.mrb[0].mxu0
        %v1250 = vadd.f32 %v390, %v1249
        %v1251 = vpop.f32.mrb[0].mxu0
        %1252 = vmatprep.mubr.bf16.mxu0 0
        %1253 = vmatmul.mubr.bf16.gmra.mrb[0].mxu0 %v697
        %v1254 = vpop.f32.mrb[0].mxu0
        %v1255 = vadd.f32 %v390, %v1254
        %v1256 = vpop.f32.mrb[0].mxu0
        %v1257 = vpop.f32.mrb[0].mxu0
        %v1258 = vadd.f32 %v390, %v1257
        %v1259 = vpop.f32.mrb[0].mxu0
        %1260 = vmatprep.mubr.bf16.mxu0 0
        %1261 = vmatmul.mubr.bf16.gmra.mrb[0].mxu0 %v700
        %v1262 = vpop.f32.mrb[0].mxu0
        %v1263 = vadd.f32 %v390, %v1262
        %v1264 = vpop.f32.mrb[0].mxu0
        %v1265 = vpop.f32.mrb[0].mxu0
        %v1266 = vadd.f32 %v390, %v1265
        %v1267 = vpop.f32.mrb[0].mxu0
        %1268 = vmatprep.mubr.bf16.mxu0 0
        %1269 = vmatmul.mubr.bf16.gmra.mrb[0].mxu0 %v703
        %v1270 = vpop.f32.mrb[0].mxu0
        %v1271 = vadd.f32 %v390, %v1270
        %v1272 = vpop.f32.mrb[0].mxu0
        %v1273 = vpop.f32.mrb[0].mxu0
        %v1274 = vadd.f32 %v390, %v1273
        %v1275 = vpop.f32.mrb[0].mxu0
        %1276 = vmatprep.mubr.bf16.mxu0 0
        %1277 = vmatmul.mubr.bf16.gmra.mrb[0].mxu0 %v706
        %v1278 = vpop.f32.mrb[0].mxu0
        %v1279 = vadd.f32 %v390, %v1278
        %v1280 = vpop.f32.mrb[0].mxu0
        %v1281 = vpop.f32.mrb[0].mxu0
        %v1282 = vadd.f32 %v390, %v1281
        %v1283 = vpop.f32.mrb[0].mxu0
        %1284 = vmatprep.mubr.bf16.mxu0 0
        %1285 = vmatmul.mubr.bf16.gmra.mrb[0].mxu0 %v709
        %v1286 = vpop.f32.mrb[0].mxu0
        %v1287 = vadd.f32 %v390, %v1286
        %v1288 = vpop.f32.mrb[0].mxu0
        %v1289 = vpop.f32.mrb[0].mxu0
        %v1290 = vadd.f32 %v390, %v1289
        %v1291 = vpop.f32.mrb[0].mxu0
        %1292 = vmatprep.mubr.bf16.mxu0 0
        %1293 = vmatmul.mubr.bf16.gmra.mrb[0].mxu0 %v712
        %v1294 = vpop.f32.mrb[0].mxu0
        %v1295 = vadd.f32 %v390, %v1294
        %v1296 = vpop.f32.mrb[0].mxu0
        %v1297 = vpop.f32.mrb[0].mxu0
        %v1298 = vadd.f32 %v390, %v1297
        %v1299 = vpop.f32.mrb[0].mxu0
        %1300 = vmatprep.mubr.bf16.mxu0 0
        %1301 = vmatmul.mubr.bf16.gmra.mrb[0].mxu0 %v715
        %v1302 = vpop.f32.mrb[0].mxu0
        %v1303 = vadd.f32 %v390, %v1302
        %v1304 = vpop.f32.mrb[0].mxu0
        %v1305 = vpop.f32.mrb[0].mxu0
        %v1306 = vadd.f32 %v390, %v1305
        %v1307 = vpop.f32.mrb[0].mxu0
        %1308 = vmatprep.mubr.bf16.mxu0 0
        %1309 = vmatmul.mubr.bf16.gmra.mrb[0].mxu0 %v718
        %v1310 = vpop.f32.mrb[0].mxu0
        %v1311 = vadd.f32 %v390, %v1310
        %v1312 = vpop.f32.mrb[0].mxu0
        %v1313 = vpop.f32.mrb[0].mxu0
        %v1314 = vadd.f32 %v390, %v1313
        %v1315 = vpop.f32.mrb[0].mxu0
        %1316 = vmatprep.mubr.bf16.mxu0 0
        %1317 = vmatmul.mubr.bf16.gmra.mrb[0].mxu0 %v721
        %v1318 = vpop.f32.mrb[0].mxu0
        %v1319 = vadd.f32 %v390, %v1318
        %v1320 = vpop.f32.mrb[0].mxu0
        %v1321 = vpop.f32.mrb[0].mxu0
        %v1322 = vadd.f32 %v390, %v1321
        %v1323 = vpop.f32.mrb[0].mxu0
        %1324 = vmatprep.mubr.bf16.mxu0 0
        %1325 = vmatmul.mubr.bf16.gmra.mrb[0].mxu0 %v724
        %v1326 = vpop.f32.mrb[0].mxu0
        %v1327 = vadd.f32 %v390, %v1326
        %v1328 = vpop.f32.mrb[0].mxu0
        %v1329 = vpop.f32.mrb[0].mxu0
        %v1330 = vadd.f32 %v390, %v1329
        %v1331 = vpop.f32.mrb[0].mxu0
        %1332 = vmatprep.mubr.bf16.mxu0 0
        %1333 = vmatmul.mubr.bf16.gmra.mrb[0].mxu0 %v727
        %v1334 = vpop.f32.mrb[0].mxu0
        %v1335 = vadd.f32 %v390, %v1334
        %v1336 = vpop.f32.mrb[0].mxu0
        %v1337 = vpop.f32.mrb[0].mxu0
        %v1338 = vadd.f32 %v390, %v1337
        %v1339 = vpop.f32.mrb[0].mxu0
        %1340 = vmatprep.mubr.bf16.mxu0 0
        %1341 = vmatmul.mubr.bf16.gmra.mrb[0].mxu0 %v730
        %v1342 = vpop.f32.mrb[0].mxu0
        %v1343 = vadd.f32 %v390, %v1342
        %v1344 = vpop.f32.mrb[0].mxu0
        %v1345 = vpop.f32.mrb[0].mxu0
        %v1346 = vadd.f32 %v390, %v1345
        %v1347 = vpop.f32.mrb[0].mxu0
        %1348 = vmatprep.mubr.bf16.mxu0 0
        %1349 = vmatmul.mubr.bf16.gmra.mrb[0].mxu0 %v733
        %v1350 = vpop.f32.mrb[0].mxu0
        %v1351 = vadd.f32 %v390, %v1350
        %v1352 = vpop.f32.mrb[0].mxu0
        %v1353 = vpop.f32.mrb[0].mxu0
        %v1354 = vadd.f32 %v390, %v1353
        %v1355 = vpop.f32.mrb[0].mxu0
        %1356 = vmatprep.mubr.bf16.mxu0 0
        %1357 = vmatmul.mubr.bf16.gmra.mrb[0].mxu0 %v736
        %v1358 = vpop.f32.mrb[0].mxu0
        %v1359 = vadd.f32 %v390, %v1358
        %v1360 = vpop.f32.mrb[0].mxu0
        %v1361 = vpop.f32.mrb[0].mxu0
        %v1362 = vadd.f32 %v390, %v1361
        %v1363 = vpop.f32.mrb[0].mxu0
        %1364 = vmatprep.mubr.bf16.mxu0 0
        %1365 = vmatmul.mubr.bf16.gmra.mrb[0].mxu0 %v739
        %v1366 = vpop.f32.mrb[0].mxu0
        %v1367 = vadd.f32 %v390, %v1366
        %v1368 = vpop.f32.mrb[0].mxu0
        %v1369 = vpop.f32.mrb[0].mxu0
        %v1370 = vadd.f32 %v390, %v1369
        %v1371 = vpop.f32.mrb[0].mxu0
        %1372 = vmatprep.mubr.bf16.mxu0 0
        %1373 = vmatmul.mubr.bf16.gmra.mrb[0].mxu0 %v742
        %v1374 = vpop.f32.mrb[0].mxu0
        %v1375 = vadd.f32 %v390, %v1374
        %v1376 = vpop.f32.mrb[0].mxu0
        %v1377 = vpop.f32.mrb[0].mxu0
        %v1378 = vadd.f32 %v390, %v1377
        %v1379 = vpop.f32.mrb[0].mxu0
        %1380 = vmatprep.mubr.bf16.mxu0 0
        %1381 = vmatmul.mubr.bf16.gmra.mrb[0].mxu0 %v745
        %v1382 = vpop.f32.mrb[0].mxu0
        %v1383 = vadd.f32 %v390, %v1382
        %v1384 = vpop.f32.mrb[0].mxu0
        %v1385 = vpop.f32.mrb[0].mxu0
        %v1386 = vadd.f32 %v390, %v1385
        %v1387 = vpop.f32.mrb[0].mxu0
        %1388 = vdwg.mxu0
        %s1389 = scalar_lea.vmem %s3, 1
        %v1390 = vld [vmem:[%s1389] ss:$4 sm:$0x3]
        %s1391 = scalar_lea.vmem %s3, 2
        %v1392 = vld [vmem:[%s1391] ss:$4 sm:$0x3]
        %v1394 = vlaneseq
        %v1395 = vshrl.u32 %v1394, 7
        %v1396 = vsub.s32 0, %v1395
        %v1397 = vrot.slane %v1390, %v1396
        %v1398 = vlaneseq
        %v1399 = vshrl.u32 %v1398, 7
        %v1400 = vsub.s32 1, %v1399
        %v1401 = vrot.slane %v1390, %v1400
        %v1404 = vmul.f32 %v782, %v1397
        %v1405 = vmul.f32 %v784, %v1401
        %v1406 = vmul.f32 %v786, %v1397
        %v1407 = vmul.f32 %v788, %v1401
        %v1408 = vmul.f32 %v792, %v1397
        %v1409 = vmul.f32 %v794, %v1401
        %v1410 = vmul.f32 %v796, %v1397
        %v1411 = vmul.f32 %v798, %v1401
        %v1412 = vmul.f32 %v802, %v1397
        %v1413 = vmul.f32 %v804, %v1401
        %v1414 = vmul.f32 %v806, %v1397
        %v1415 = vmul.f32 %v808, %v1401
        %v1416 = vmul.f32 %v812, %v1397
        %v1417 = vmul.f32 %v814, %v1401
        %v1418 = vmul.f32 %v816, %v1397
        %v1419 = vmul.f32 %v818, %v1401
        %v1420 = vmul.f32 %v822, %v1397
        %v1421 = vmul.f32 %v824, %v1401
        %v1422 = vmul.f32 %v826, %v1397
        %v1423 = vmul.f32 %v828, %v1401
        %v1424 = vmul.f32 %v832, %v1397
        %v1425 = vmul.f32 %v834, %v1401
        %v1426 = vmul.f32 %v836, %v1397
        %v1427 = vmul.f32 %v838, %v1401
        %v1428 = vmul.f32 %v842, %v1397
        %v1429 = vmul.f32 %v844, %v1401
        %v1430 = vmul.f32 %v846, %v1397
        %v1431 = vmul.f32 %v848, %v1401
        %v1432 = vmul.f32 %v852, %v1397
        %v1433 = vmul.f32 %v854, %v1401
        %v1434 = vmul.f32 %v856, %v1397
        %v1435 = vmul.f32 %v858, %v1401
        %v1436 = vmul.f32 %v862, %v1397
        %v1437 = vmul.f32 %v864, %v1401
        %v1438 = vmul.f32 %v866, %v1397
        %v1439 = vmul.f32 %v868, %v1401
        %v1440 = vmul.f32 %v872, %v1397
        %v1441 = vmul.f32 %v874, %v1401
        %v1442 = vmul.f32 %v876, %v1397
        %v1443 = vmul.f32 %v878, %v1401
        %v1444 = vmul.f32 %v882, %v1397
        %v1445 = vmul.f32 %v884, %v1401
        %v1446 = vmul.f32 %v886, %v1397
        %v1447 = vmul.f32 %v888, %v1401
        %v1448 = vmul.f32 %v892, %v1397
        %v1449 = vmul.f32 %v894, %v1401
        %v1450 = vmul.f32 %v896, %v1397
        %v1451 = vmul.f32 %v898, %v1401
        %v1452 = vmul.f32 %v902, %v1397
        %v1453 = vmul.f32 %v904, %v1401
        %v1454 = vmul.f32 %v906, %v1397
        %v1455 = vmul.f32 %v908, %v1401
        %v1456 = vmul.f32 %v912, %v1397
        %v1457 = vmul.f32 %v914, %v1401
        %v1458 = vmul.f32 %v916, %v1397
        %v1459 = vmul.f32 %v918, %v1401
        %v1460 = vmul.f32 %v922, %v1397
        %v1461 = vmul.f32 %v924, %v1401
        %v1462 = vmul.f32 %v926, %v1397
        %v1463 = vmul.f32 %v928, %v1401
        %v1464 = vmul.f32 %v932, %v1397
        %v1465 = vmul.f32 %v934, %v1401
        %v1466 = vmul.f32 %v936, %v1397
        %v1467 = vmul.f32 %v938, %v1401
        %v1468 = vmul.f32 %v942, %v1397
        %v1469 = vmul.f32 %v944, %v1401
        %v1470 = vmul.f32 %v946, %v1397
        %v1471 = vmul.f32 %v948, %v1401
        %v1472 = vmul.f32 %v952, %v1397
        %v1473 = vmul.f32 %v954, %v1401
        %v1474 = vmul.f32 %v956, %v1397
        %v1475 = vmul.f32 %v958, %v1401
        %v1476 = vmul.f32 %v962, %v1397
        %v1477 = vmul.f32 %v964, %v1401
        %v1478 = vmul.f32 %v966, %v1397
        %v1479 = vmul.f32 %v968, %v1401
        %v1480 = vmul.f32 %v972, %v1397
        %v1481 = vmul.f32 %v974, %v1401
        %v1482 = vmul.f32 %v976, %v1397
        %v1483 = vmul.f32 %v978, %v1401
        %v1484 = vmul.f32 %v982, %v1397
        %v1485 = vmul.f32 %v984, %v1401
        %v1486 = vmul.f32 %v986, %v1397
        %v1487 = vmul.f32 %v988, %v1401
        %v1488 = vmul.f32 %v992, %v1397
        %v1489 = vmul.f32 %v994, %v1401
        %v1490 = vmul.f32 %v996, %v1397
        %v1491 = vmul.f32 %v998, %v1401
        %v1492 = vmul.f32 %v1002, %v1397
        %v1493 = vmul.f32 %v1004, %v1401
        %v1494 = vmul.f32 %v1006, %v1397
        %v1495 = vmul.f32 %v1008, %v1401
        %v1496 = vmul.f32 %v1012, %v1397
        %v1497 = vmul.f32 %v1014, %v1401
        %v1498 = vmul.f32 %v1016, %v1397
        %v1499 = vmul.f32 %v1018, %v1401
        %v1500 = vmul.f32 %v1022, %v1397
        %v1501 = vmul.f32 %v1024, %v1401
        %v1502 = vmul.f32 %v1026, %v1397
        %v1503 = vmul.f32 %v1028, %v1401
        %v1504 = vmul.f32 %v1032, %v1397
        %v1505 = vmul.f32 %v1034, %v1401
        %v1506 = vmul.f32 %v1036, %v1397
        %v1507 = vmul.f32 %v1038, %v1401
        %v1508 = vmul.f32 %v1042, %v1397
        %v1509 = vmul.f32 %v1044, %v1401
        %v1510 = vmul.f32 %v1046, %v1397
        %v1511 = vmul.f32 %v1048, %v1401
        %v1512 = vmul.f32 %v1052, %v1397
        %v1513 = vmul.f32 %v1054, %v1401
        %v1514 = vmul.f32 %v1056, %v1397
        %v1515 = vmul.f32 %v1058, %v1401
        %v1516 = vmul.f32 %v1062, %v1397
        %v1517 = vmul.f32 %v1064, %v1401
        %v1518 = vmul.f32 %v1066, %v1397
        %v1519 = vmul.f32 %v1068, %v1401
        %v1520 = vmul.f32 %v1072, %v1397
        %v1521 = vmul.f32 %v1074, %v1401
        %v1522 = vmul.f32 %v1076, %v1397
        %v1523 = vmul.f32 %v1078, %v1401
        %v1524 = vmul.f32 %v1082, %v1397
        %v1525 = vmul.f32 %v1084, %v1401
        %v1526 = vmul.f32 %v1086, %v1397
        %v1527 = vmul.f32 %v1088, %v1401
        %v1528 = vmul.f32 %v1092, %v1397
        %v1529 = vmul.f32 %v1094, %v1401
        %v1530 = vmul.f32 %v1096, %v1397
        %v1531 = vmul.f32 %v1098, %v1401
        %v1533 = vlaneseq
        %v1534 = vshrl.u32 %v1533, 7
        %v1535 = vsub.s32 0, %v1534
        %v1536 = vrot.slane %v1392, %v1535
        %v1537 = vlaneseq
        %v1538 = vshrl.u32 %v1537, 7
        %v1539 = vsub.s32 1, %v1538
        %v1540 = vrot.slane %v1392, %v1539
        %v1543 = vadd.f32 %v1404, %v1536
        %v1544 = vadd.f32 %v1405, %v1540
        %v1545 = vadd.f32 %v1406, %v1536
        %v1546 = vadd.f32 %v1407, %v1540
        %v1547 = vadd.f32 %v1408, %v1536
        %v1548 = vadd.f32 %v1409, %v1540
        %v1549 = vadd.f32 %v1410, %v1536
        %v1550 = vadd.f32 %v1411, %v1540
        %v1551 = vadd.f32 %v1412, %v1536
        %v1552 = vadd.f32 %v1413, %v1540
        %v1553 = vadd.f32 %v1414, %v1536
        %v1554 = vadd.f32 %v1415, %v1540
        %v1555 = vadd.f32 %v1416, %v1536
        %v1556 = vadd.f32 %v1417, %v1540
        %v1557 = vadd.f32 %v1418, %v1536
        %v1558 = vadd.f32 %v1419, %v1540
        %v1559 = vadd.f32 %v1420, %v1536
        %v1560 = vadd.f32 %v1421, %v1540
        %v1561 = vadd.f32 %v1422, %v1536
        %v1562 = vadd.f32 %v1423, %v1540
        %v1563 = vadd.f32 %v1424, %v1536
        %v1564 = vadd.f32 %v1425, %v1540
        %v1565 = vadd.f32 %v1426, %v1536
        %v1566 = vadd.f32 %v1427, %v1540
        %v1567 = vadd.f32 %v1428, %v1536
        %v1568 = vadd.f32 %v1429, %v1540
        %v1569 = vadd.f32 %v1430, %v1536
        %v1570 = vadd.f32 %v1431, %v1540
        %v1571 = vadd.f32 %v1432, %v1536
        %v1572 = vadd.f32 %v1433, %v1540
        %v1573 = vadd.f32 %v1434, %v1536
        %v1574 = vadd.f32 %v1435, %v1540
        %v1575 = vadd.f32 %v1436, %v1536
        %v1576 = vadd.f32 %v1437, %v1540
        %v1577 = vadd.f32 %v1438, %v1536
        %v1578 = vadd.f32 %v1439, %v1540
        %v1579 = vadd.f32 %v1440, %v1536
        %v1580 = vadd.f32 %v1441, %v1540
        %v1581 = vadd.f32 %v1442, %v1536
        %v1582 = vadd.f32 %v1443, %v1540
        %v1583 = vadd.f32 %v1444, %v1536
        %v1584 = vadd.f32 %v1445, %v1540
        %v1585 = vadd.f32 %v1446, %v1536
        %v1586 = vadd.f32 %v1447, %v1540
        %v1587 = vadd.f32 %v1448, %v1536
        %v1588 = vadd.f32 %v1449, %v1540
        %v1589 = vadd.f32 %v1450, %v1536
        %v1590 = vadd.f32 %v1451, %v1540
        %v1591 = vadd.f32 %v1452, %v1536
        %v1592 = vadd.f32 %v1453, %v1540
        %v1593 = vadd.f32 %v1454, %v1536
        %v1594 = vadd.f32 %v1455, %v1540
        %v1595 = vadd.f32 %v1456, %v1536
        %v1596 = vadd.f32 %v1457, %v1540
        %v1597 = vadd.f32 %v1458, %v1536
        %v1598 = vadd.f32 %v1459, %v1540
        %v1599 = vadd.f32 %v1460, %v1536
        %v1600 = vadd.f32 %v1461, %v1540
        %v1601 = vadd.f32 %v1462, %v1536
        %v1602 = vadd.f32 %v1463, %v1540
        %v1603 = vadd.f32 %v1464, %v1536
        %v1604 = vadd.f32 %v1465, %v1540
        %v1605 = vadd.f32 %v1466, %v1536
        %v1606 = vadd.f32 %v1467, %v1540
        %v1607 = vadd.f32 %v1468, %v1536
        %v1608 = vadd.f32 %v1469, %v1540
        %v1609 = vadd.f32 %v1470, %v1536
        %v1610 = vadd.f32 %v1471, %v1540
        %v1611 = vadd.f32 %v1472, %v1536
        %v1612 = vadd.f32 %v1473, %v1540
        %v1613 = vadd.f32 %v1474, %v1536
        %v1614 = vadd.f32 %v1475, %v1540
        %v1615 = vadd.f32 %v1476, %v1536
        %v1616 = vadd.f32 %v1477, %v1540
        %v1617 = vadd.f32 %v1478, %v1536
        %v1618 = vadd.f32 %v1479, %v1540
        %v1619 = vadd.f32 %v1480, %v1536
        %v1620 = vadd.f32 %v1481, %v1540
        %v1621 = vadd.f32 %v1482, %v1536
        %v1622 = vadd.f32 %v1483, %v1540
        %v1623 = vadd.f32 %v1484, %v1536
        %v1624 = vadd.f32 %v1485, %v1540
        %v1625 = vadd.f32 %v1486, %v1536
        %v1626 = vadd.f32 %v1487, %v1540
        %v1627 = vadd.f32 %v1488, %v1536
        %v1628 = vadd.f32 %v1489, %v1540
        %v1629 = vadd.f32 %v1490, %v1536
        %v1630 = vadd.f32 %v1491, %v1540
        %v1631 = vadd.f32 %v1492, %v1536
        %v1632 = vadd.f32 %v1493, %v1540
        %v1633 = vadd.f32 %v1494, %v1536
        %v1634 = vadd.f32 %v1495, %v1540
        %v1635 = vadd.f32 %v1496, %v1536
        %v1636 = vadd.f32 %v1497, %v1540
        %v1637 = vadd.f32 %v1498, %v1536
        %v1638 = vadd.f32 %v1499, %v1540
        %v1639 = vadd.f32 %v1500, %v1536
        %v1640 = vadd.f32 %v1501, %v1540
        %v1641 = vadd.f32 %v1502, %v1536
        %v1642 = vadd.f32 %v1503, %v1540
        %v1643 = vadd.f32 %v1504, %v1536
        %v1644 = vadd.f32 %v1505, %v1540
        %v1645 = vadd.f32 %v1506, %v1536
        %v1646 = vadd.f32 %v1507, %v1540
        %v1647 = vadd.f32 %v1508, %v1536
        %v1648 = vadd.f32 %v1509, %v1540
        %v1649 = vadd.f32 %v1510, %v1536
        %v1650 = vadd.f32 %v1511, %v1540
        %v1651 = vadd.f32 %v1512, %v1536
        %v1652 = vadd.f32 %v1513, %v1540
        %v1653 = vadd.f32 %v1514, %v1536
        %v1654 = vadd.f32 %v1515, %v1540
        %v1655 = vadd.f32 %v1516, %v1536
        %v1656 = vadd.f32 %v1517, %v1540
        %v1657 = vadd.f32 %v1518, %v1536
        %v1658 = vadd.f32 %v1519, %v1540
        %v1659 = vadd.f32 %v1520, %v1536
        %v1660 = vadd.f32 %v1521, %v1540
        %v1661 = vadd.f32 %v1522, %v1536
        %v1662 = vadd.f32 %v1523, %v1540
        %v1663 = vadd.f32 %v1524, %v1536
        %v1664 = vadd.f32 %v1525, %v1540
        %v1665 = vadd.f32 %v1526, %v1536
        %v1666 = vadd.f32 %v1527, %v1540
        %v1667 = vadd.f32 %v1528, %v1536
        %v1668 = vadd.f32 %v1529, %v1540
        %v1669 = vadd.f32 %v1530, %v1536
        %v1670 = vadd.f32 %v1531, %v1540
        %v1671 = vmax.f32 %v1543, 0.0
        %v1672 = vmax.f32 %v1544, 0.0
        %v1673 = vmax.f32 %v1545, 0.0
        %v1674 = vmax.f32 %v1546, 0.0
        %v1675 = vmax.f32 %v1547, 0.0
        %v1676 = vmax.f32 %v1548, 0.0
        %v1677 = vmax.f32 %v1549, 0.0
        %v1678 = vmax.f32 %v1550, 0.0
        %v1679 = vmax.f32 %v1551, 0.0
        %v1680 = vmax.f32 %v1552, 0.0
        %v1681 = vmax.f32 %v1553, 0.0
        %v1682 = vmax.f32 %v1554, 0.0
        %v1683 = vmax.f32 %v1555, 0.0
        %v1684 = vmax.f32 %v1556, 0.0
        %v1685 = vmax.f32 %v1557, 0.0
        %v1686 = vmax.f32 %v1558, 0.0
        %v1687 = vmax.f32 %v1559, 0.0
        %v1688 = vmax.f32 %v1560, 0.0
        %v1689 = vmax.f32 %v1561, 0.0
        %v1690 = vmax.f32 %v1562, 0.0
        %v1691 = vmax.f32 %v1563, 0.0
        %v1692 = vmax.f32 %v1564, 0.0
        %v1693 = vmax.f32 %v1565, 0.0
        %v1694 = vmax.f32 %v1566, 0.0
        %v1695 = vmax.f32 %v1567, 0.0
        %v1696 = vmax.f32 %v1568, 0.0
        %v1697 = vmax.f32 %v1569, 0.0
        %v1698 = vmax.f32 %v1570, 0.0
        %v1699 = vmax.f32 %v1571, 0.0
        %v1700 = vmax.f32 %v1572, 0.0
        %v1701 = vmax.f32 %v1573, 0.0
        %v1702 = vmax.f32 %v1574, 0.0
        %v1703 = vmax.f32 %v1575, 0.0
        %v1704 = vmax.f32 %v1576, 0.0
        %v1705 = vmax.f32 %v1577, 0.0
        %v1706 = vmax.f32 %v1578, 0.0
        %v1707 = vmax.f32 %v1579, 0.0
        %v1708 = vmax.f32 %v1580, 0.0
        %v1709 = vmax.f32 %v1581, 0.0
        %v1710 = vmax.f32 %v1582, 0.0
        %v1711 = vmax.f32 %v1583, 0.0
        %v1712 = vmax.f32 %v1584, 0.0
        %v1713 = vmax.f32 %v1585, 0.0
        %v1714 = vmax.f32 %v1586, 0.0
        %v1715 = vmax.f32 %v1587, 0.0
        %v1716 = vmax.f32 %v1588, 0.0
        %v1717 = vmax.f32 %v1589, 0.0
        %v1718 = vmax.f32 %v1590, 0.0
        %v1719 = vmax.f32 %v1591, 0.0
        %v1720 = vmax.f32 %v1592, 0.0
        %v1721 = vmax.f32 %v1593, 0.0
        %v1722 = vmax.f32 %v1594, 0.0
        %v1723 = vmax.f32 %v1595, 0.0
        %v1724 = vmax.f32 %v1596, 0.0
        %v1725 = vmax.f32 %v1597, 0.0
        %v1726 = vmax.f32 %v1598, 0.0
        %v1727 = vmax.f32 %v1599, 0.0
        %v1728 = vmax.f32 %v1600, 0.0
        %v1729 = vmax.f32 %v1601, 0.0
        %v1730 = vmax.f32 %v1602, 0.0
        %v1731 = vmax.f32 %v1603, 0.0
        %v1732 = vmax.f32 %v1604, 0.0
        %v1733 = vmax.f32 %v1605, 0.0
        %v1734 = vmax.f32 %v1606, 0.0
        %v1735 = vmax.f32 %v1607, 0.0
        %v1736 = vmax.f32 %v1608, 0.0
        %v1737 = vmax.f32 %v1609, 0.0
        %v1738 = vmax.f32 %v1610, 0.0
        %v1739 = vmax.f32 %v1611, 0.0
        %v1740 = vmax.f32 %v1612, 0.0
        %v1741 = vmax.f32 %v1613, 0.0
        %v1742 = vmax.f32 %v1614, 0.0
        %v1743 = vmax.f32 %v1615, 0.0
        %v1744 = vmax.f32 %v1616, 0.0
        %v1745 = vmax.f32 %v1617, 0.0
        %v1746 = vmax.f32 %v1618, 0.0
        %v1747 = vmax.f32 %v1619, 0.0
        %v1748 = vmax.f32 %v1620, 0.0
        %v1749 = vmax.f32 %v1621, 0.0
        %v1750 = vmax.f32 %v1622, 0.0
        %v1751 = vmax.f32 %v1623, 0.0
        %v1752 = vmax.f32 %v1624, 0.0
        %v1753 = vmax.f32 %v1625, 0.0
        %v1754 = vmax.f32 %v1626, 0.0
        %v1755 = vmax.f32 %v1627, 0.0
        %v1756 = vmax.f32 %v1628, 0.0
        %v1757 = vmax.f32 %v1629, 0.0
        %v1758 = vmax.f32 %v1630, 0.0
        %v1759 = vmax.f32 %v1631, 0.0
        %v1760 = vmax.f32 %v1632, 0.0
        %v1761 = vmax.f32 %v1633, 0.0
        %v1762 = vmax.f32 %v1634, 0.0
        %v1763 = vmax.f32 %v1635, 0.0
        %v1764 = vmax.f32 %v1636, 0.0
        %v1765 = vmax.f32 %v1637, 0.0
        %v1766 = vmax.f32 %v1638, 0.0
        %v1767 = vmax.f32 %v1639, 0.0
        %v1768 = vmax.f32 %v1640, 0.0
        %v1769 = vmax.f32 %v1641, 0.0
        %v1770 = vmax.f32 %v1642, 0.0
        %v1771 = vmax.f32 %v1643, 0.0
        %v1772 = vmax.f32 %v1644, 0.0
        %v1773 = vmax.f32 %v1645, 0.0
        %v1774 = vmax.f32 %v1646, 0.0
        %v1775 = vmax.f32 %v1647, 0.0
        %v1776 = vmax.f32 %v1648, 0.0
        %v1777 = vmax.f32 %v1649, 0.0
        %v1778 = vmax.f32 %v1650, 0.0
        %v1779 = vmax.f32 %v1651, 0.0
        %v1780 = vmax.f32 %v1652, 0.0
        %v1781 = vmax.f32 %v1653, 0.0
        %v1782 = vmax.f32 %v1654, 0.0
        %v1783 = vmax.f32 %v1655, 0.0
        %v1784 = vmax.f32 %v1656, 0.0
        %v1785 = vmax.f32 %v1657, 0.0
        %v1786 = vmax.f32 %v1658, 0.0
        %v1787 = vmax.f32 %v1659, 0.0
        %v1788 = vmax.f32 %v1660, 0.0
        %v1789 = vmax.f32 %v1661, 0.0
        %v1790 = vmax.f32 %v1662, 0.0
        %v1791 = vmax.f32 %v1663, 0.0
        %v1792 = vmax.f32 %v1664, 0.0
        %v1793 = vmax.f32 %v1665, 0.0
        %v1794 = vmax.f32 %v1666, 0.0
        %v1795 = vmax.f32 %v1667, 0.0
        %v1796 = vmax.f32 %v1668, 0.0
        %v1797 = vmax.f32 %v1669, 0.0
        %v1798 = vmax.f32 %v1670, 0.0
        %v1799 = vld [vmem:[%s3 + $0x3] sm:$0x1]
        %v1800 = vpack.c.bf16 %v1673, %v1671
        %v1801 = vpack.c.bf16 %v1674, %v1672
        %v1802 = vpack.c.bf16 %v1677, %v1675
        %v1803 = vpack.c.bf16 %v1678, %v1676
        %v1804 = vpack.c.bf16 %v1681, %v1679
        %v1805 = vpack.c.bf16 %v1682, %v1680
        %v1806 = vpack.c.bf16 %v1685, %v1683
        %v1807 = vpack.c.bf16 %v1686, %v1684
        %v1808 = vpack.c.bf16 %v1689, %v1687
        %v1809 = vpack.c.bf16 %v1690, %v1688
        %v1810 = vpack.c.bf16 %v1693, %v1691
        %v1811 = vpack.c.bf16 %v1694, %v1692
        %v1812 = vpack.c.bf16 %v1697, %v1695
        %v1813 = vpack.c.bf16 %v1698, %v1696
        %v1814 = vpack.c.bf16 %v1701, %v1699
        %v1815 = vpack.c.bf16 %v1702, %v1700
        %v1816 = vpack.c.bf16 %v1705, %v1703
        %v1817 = vpack.c.bf16 %v1706, %v1704
        %v1818 = vpack.c.bf16 %v1709, %v1707
        %v1819 = vpack.c.bf16 %v1710, %v1708
        %v1820 = vpack.c.bf16 %v1713, %v1711
        %v1821 = vpack.c.bf16 %v1714, %v1712
        %v1822 = vpack.c.bf16 %v1717, %v1715
        %v1823 = vpack.c.bf16 %v1718, %v1716
        %v1824 = vpack.c.bf16 %v1721, %v1719
        %v1825 = vpack.c.bf16 %v1722, %v1720
        %v1826 = vpack.c.bf16 %v1725, %v1723
        %v1827 = vpack.c.bf16 %v1726, %v1724
        %v1828 = vpack.c.bf16 %v1729, %v1727
        %v1829 = vpack.c.bf16 %v1730, %v1728
        %v1830 = vpack.c.bf16 %v1733, %v1731
        %v1831 = vpack.c.bf16 %v1734, %v1732
        %v1832 = vpack.c.bf16 %v1737, %v1735
        %v1833 = vpack.c.bf16 %v1738, %v1736
        %v1834 = vpack.c.bf16 %v1741, %v1739
        %v1835 = vpack.c.bf16 %v1742, %v1740
        %v1836 = vpack.c.bf16 %v1745, %v1743
        %v1837 = vpack.c.bf16 %v1746, %v1744
        %v1838 = vpack.c.bf16 %v1749, %v1747
        %v1839 = vpack.c.bf16 %v1750, %v1748
        %v1840 = vpack.c.bf16 %v1753, %v1751
        %v1841 = vpack.c.bf16 %v1754, %v1752
        %v1842 = vpack.c.bf16 %v1757, %v1755
        %v1843 = vpack.c.bf16 %v1758, %v1756
        %v1844 = vpack.c.bf16 %v1761, %v1759
        %v1845 = vpack.c.bf16 %v1762, %v1760
        %v1846 = vpack.c.bf16 %v1765, %v1763
        %v1847 = vpack.c.bf16 %v1766, %v1764
        %v1848 = vpack.c.bf16 %v1769, %v1767
        %v1849 = vpack.c.bf16 %v1770, %v1768
        %v1850 = vpack.c.bf16 %v1773, %v1771
        %v1851 = vpack.c.bf16 %v1774, %v1772
        %v1852 = vpack.c.bf16 %v1777, %v1775
        %v1853 = vpack.c.bf16 %v1778, %v1776
        %v1854 = vpack.c.bf16 %v1781, %v1779
        %v1855 = vpack.c.bf16 %v1782, %v1780
        %v1856 = vpack.c.bf16 %v1785, %v1783
        %v1857 = vpack.c.bf16 %v1786, %v1784
        %v1858 = vpack.c.bf16 %v1789, %v1787
        %v1859 = vpack.c.bf16 %v1790, %v1788
        %v1860 = vpack.c.bf16 %v1793, %v1791
        %v1861 = vpack.c.bf16 %v1794, %v1792
        %v1862 = vpack.c.bf16 %v1797, %v1795
        %v1863 = vpack.c.bf16 %v1798, %v1796
        %v1864 = vld [vmem:[%s2] sm:$0xf]
        %v1865 = vld [vmem:[%s2 + $0x4] sm:$0xf]
        %v1866 = vld [vmem:[%s2 + $0x8] sm:$0xf]
        %v1867 = vld [vmem:[%s2 + $0xc] sm:$0xf]
        %v1868 = vld [vmem:[%s2 + $0x10] sm:$0xf]
        %v1869 = vld [vmem:[%s2 + $0x14] sm:$0xf]
        %v1870 = vld [vmem:[%s2 + $0x18] sm:$0xf]
        %v1871 = vld [vmem:[%s2 + $0x1c] sm:$0xf]
        %v1872 = vld [vmem:[%s2 + $0x20] sm:$0xf]
        %v1873 = vld [vmem:[%s2 + $0x24] sm:$0xf]
        %v1874 = vld [vmem:[%s2 + $0x28] sm:$0xf]
        %v1875 = vld [vmem:[%s2 + $0x2c] sm:$0xf]
        %v1876 = vld [vmem:[%s2 + $0x30] sm:$0xf]
        %v1877 = vld [vmem:[%s2 + $0x34] sm:$0xf]
        %v1878 = vld [vmem:[%s2 + $0x38] sm:$0xf]
        %v1879 = vld [vmem:[%s2 + $0x3c] sm:$0xf]
        %v1880 = vld [vmem:[%s2 + $0x40] sm:$0xf]
        %v1881 = vld [vmem:[%s2 + $0x44] sm:$0xf]
        %v1882 = vld [vmem:[%s2 + $0x48] sm:$0xf]
        %v1883 = vld [vmem:[%s2 + $0x4c] sm:$0xf]
        %v1884 = vld [vmem:[%s2 + $0x50] sm:$0xf]
        %v1885 = vld [vmem:[%s2 + $0x54] sm:$0xf]
        %v1886 = vld [vmem:[%s2 + $0x58] sm:$0xf]
        %v1887 = vld [vmem:[%s2 + $0x5c] sm:$0xf]
        %v1888 = vld [vmem:[%s2 + $0x60] sm:$0xf]
        %v1889 = vld [vmem:[%s2 + $0x64] sm:$0xf]
        %v1890 = vld [vmem:[%s2 + $0x68] sm:$0xf]
        %v1891 = vld [vmem:[%s2 + $0x6c] sm:$0xf]
        %v1892 = vld [vmem:[%s2 + $0x70] sm:$0xf]
        %v1893 = vld [vmem:[%s2 + $0x74] sm:$0xf]
        %v1894 = vld [vmem:[%s2 + $0x78] sm:$0xf]
        %v1895 = vld [vmem:[%s2 + $0x7c] sm:$0xf]
        %v1896 = vlaneseq
        %v1897 = vshrl.u32 %v1896, 7
        %v1898 = vsub.s32 0, %v1897
        %v1899 = vrot.slane %v1799, %v1898
        %v1932 = vunpack.c.l.b16 %v1864
        %v1933 = vunpack.c.l.b16 %v1865
        %v1934 = vunpack.c.l.b16 %v1866
        %v1935 = vunpack.c.l.b16 %v1867
        %v1936 = vunpack.c.l.b16 %v1868
        %v1937 = vunpack.c.l.b16 %v1869
        %v1938 = vunpack.c.l.b16 %v1870
        %v1939 = vunpack.c.l.b16 %v1871
        %v1940 = vunpack.c.l.b16 %v1872
        %v1941 = vunpack.c.l.b16 %v1873
        %v1942 = vunpack.c.l.b16 %v1874
        %v1943 = vunpack.c.l.b16 %v1875
        %v1944 = vunpack.c.l.b16 %v1876
        %v1945 = vunpack.c.l.b16 %v1877
        %v1946 = vunpack.c.l.b16 %v1878
        %v1947 = vunpack.c.l.b16 %v1879
        %v1948 = vunpack.c.l.b16 %v1880
        %v1949 = vunpack.c.l.b16 %v1881
        %v1950 = vunpack.c.l.b16 %v1882
        %v1951 = vunpack.c.l.b16 %v1883
        %v1952 = vunpack.c.l.b16 %v1884
        %v1953 = vunpack.c.l.b16 %v1885
        %v1954 = vunpack.c.l.b16 %v1886
        %v1955 = vunpack.c.l.b16 %v1887
        %v1956 = vunpack.c.l.b16 %v1888
        %v1957 = vunpack.c.l.b16 %v1889
        %v1958 = vunpack.c.l.b16 %v1890
        %v1959 = vunpack.c.l.b16 %v1891
        %v1960 = vunpack.c.l.b16 %v1892
        %v1961 = vunpack.c.l.b16 %v1893
        %v1962 = vunpack.c.l.b16 %v1894
        %v1963 = vunpack.c.l.b16 %v1895
        %v1964 = vpack.c.b16 %v1933, %v1932
        %v1965 = vpack.c.b16 %v1935, %v1934
        %v1966 = vpack.c.b16 %v1937, %v1936
        %v1967 = vpack.c.b16 %v1939, %v1938
        %v1968 = vpack.c.b16 %v1941, %v1940
        %v1969 = vpack.c.b16 %v1943, %v1942
        %v1970 = vpack.c.b16 %v1945, %v1944
        %v1971 = vpack.c.b16 %v1947, %v1946
        %v1972 = vpack.c.b16 %v1949, %v1948
        %v1973 = vpack.c.b16 %v1951, %v1950
        %v1974 = vpack.c.b16 %v1953, %v1952
        %v1975 = vpack.c.b16 %v1955, %v1954
        %v1976 = vpack.c.b16 %v1957, %v1956
        %v1977 = vpack.c.b16 %v1959, %v1958
        %v1978 = vpack.c.b16 %v1961, %v1960
        %v1979 = vpack.c.b16 %v1963, %v1962
        %1996 = vmatprep.subr.bf16.mxu0 0
        %1997 = vmatpush1.bf16.msra.mxu0 %v1964
        %1998 = vmatprep.subr.bf16.mxu0 0
        %1999 = vmatpush1.bf16.msra.mxu0 %v1965
        %2000 = vmatprep.subr.bf16.mxu0 0
        %2001 = vmatpush1.bf16.msra.mxu0 %v1966
        %2002 = vmatprep.subr.bf16.mxu0 0
        %2003 = vmatpush1.bf16.msra.mxu0 %v1967
        %2004 = vmatprep.subr.bf16.mxu0 0
        %2005 = vmatpush1.bf16.msra.mxu0 %v1968
        %2006 = vmatprep.subr.bf16.mxu0 0
        %2007 = vmatpush1.bf16.msra.mxu0 %v1969
        %2008 = vmatprep.subr.bf16.mxu0 0
        %2009 = vmatpush1.bf16.msra.mxu0 %v1970
        %2010 = vmatprep.subr.bf16.mxu0 0
        %2011 = vmatpush1.bf16.msra.mxu0 %v1971
        %2012 = vmatprep.subr.bf16.mxu0 0
        %2013 = vmatpush1.bf16.msra.mxu0 %v1972
        %2014 = vmatprep.subr.bf16.mxu0 0
        %2015 = vmatpush1.bf16.msra.mxu0 %v1973
        %2016 = vmatprep.subr.bf16.mxu0 0
        %2017 = vmatpush1.bf16.msra.mxu0 %v1974
        %2018 = vmatprep.subr.bf16.mxu0 0
        %2019 = vmatpush1.bf16.msra.mxu0 %v1975
        %2020 = vmatprep.subr.bf16.mxu0 0
        %2021 = vmatpush1.bf16.msra.mxu0 %v1976
        %2022 = vmatprep.subr.bf16.mxu0 0
        %2023 = vmatpush1.bf16.msra.mxu0 %v1977
        %2024 = vmatprep.subr.bf16.mxu0 0
        %2025 = vmatpush1.bf16.msra.mxu0 %v1978
        %2026 = vmatprep.subr.bf16.mxu0 0
        %2027 = vmatpush1.bf16.msra.mxu0 %v1979
        %2028 = vmatprep.mubr.bf16.mxu0 %v1801
        %2029 = vmatmul.mubr.bf16.gmra.mrb[0].mxu0 %v1800
        %v2030 = vpop.f32.mrb[0].mxu0
        %v2031 = vadd.f32 %v1899, %v2030
        %v2032 = vpop.f32.mrb[0].mxu0
        %v2033 = vpop.f32.mrb[0].mxu0
        %v2034 = vadd.f32 %v1899, %v2033
        %v2035 = vpop.f32.mrb[0].mxu0
        %2036 = vmatprep.mubr.bf16.mxu0 %v1803
        %2037 = vmatmul.mubr.bf16.gmra.mrb[0].mxu0 %v1802
        %v2038 = vpop.f32.mrb[0].mxu0
        %v2039 = vadd.f32 %v1899, %v2038
        %v2040 = vpop.f32.mrb[0].mxu0
        %v2041 = vpop.f32.mrb[0].mxu0
        %v2042 = vadd.f32 %v1899, %v2041
        %v2043 = vpop.f32.mrb[0].mxu0
        %2044 = vmatprep.mubr.bf16.mxu0 %v1805
        %2045 = vmatmul.mubr.bf16.gmra.mrb[0].mxu0 %v1804
        %v2046 = vpop.f32.mrb[0].mxu0
        %v2047 = vadd.f32 %v1899, %v2046
        %v2048 = vpop.f32.mrb[0].mxu0
        %v2049 = vpop.f32.mrb[0].mxu0
        %v2050 = vadd.f32 %v1899, %v2049
        %v2051 = vpop.f32.mrb[0].mxu0
        %2052 = vmatprep.mubr.bf16.mxu0 %v1807
        %2053 = vmatmul.mubr.bf16.gmra.mrb[0].mxu0 %v1806
        %v2054 = vpop.f32.mrb[0].mxu0
        %v2055 = vadd.f32 %v1899, %v2054
        %v2056 = vpop.f32.mrb[0].mxu0
        %v2057 = vpop.f32.mrb[0].mxu0
        %v2058 = vadd.f32 %v1899, %v2057
        %v2059 = vpop.f32.mrb[0].mxu0
        %2060 = vmatprep.mubr.bf16.mxu0 %v1809
        %2061 = vmatmul.mubr.bf16.gmra.mrb[0].mxu0 %v1808
        %v2062 = vpop.f32.mrb[0].mxu0
        %v2063 = vadd.f32 %v1899, %v2062
        %v2064 = vpop.f32.mrb[0].mxu0
        %v2065 = vpop.f32.mrb[0].mxu0
        %v2066 = vadd.f32 %v1899, %v2065
        %v2067 = vpop.f32.mrb[0].mxu0
        %2068 = vmatprep.mubr.bf16.mxu0 %v1811
        %2069 = vmatmul.mubr.bf16.gmra.mrb[0].mxu0 %v1810
        %v2070 = vpop.f32.mrb[0].mxu0
        %v2071 = vadd.f32 %v1899, %v2070
        %v2072 = vpop.f32.mrb[0].mxu0
        %v2073 = vpop.f32.mrb[0].mxu0
        %v2074 = vadd.f32 %v1899, %v2073
        %v2075 = vpop.f32.mrb[0].mxu0
        %2076 = vmatprep.mubr.bf16.mxu0 %v1813
        %2077 = vmatmul.mubr.bf16.gmra.mrb[0].mxu0 %v1812
        %v2078 = vpop.f32.mrb[0].mxu0
        %v2079 = vadd.f32 %v1899, %v2078
        %v2080 = vpop.f32.mrb[0].mxu0
        %v2081 = vpop.f32.mrb[0].mxu0
        %v2082 = vadd.f32 %v1899, %v2081
        %v2083 = vpop.f32.mrb[0].mxu0
        %2084 = vmatprep.mubr.bf16.mxu0 %v1815
        %2085 = vmatmul.mubr.bf16.gmra.mrb[0].mxu0 %v1814
        %v2086 = vpop.f32.mrb[0].mxu0
        %v2087 = vadd.f32 %v1899, %v2086
        %v2088 = vpop.f32.mrb[0].mxu0
        %v2089 = vpop.f32.mrb[0].mxu0
        %v2090 = vadd.f32 %v1899, %v2089
        %v2091 = vpop.f32.mrb[0].mxu0
        %2092 = vmatprep.mubr.bf16.mxu0 %v1817
        %2093 = vmatmul.mubr.bf16.gmra.mrb[0].mxu0 %v1816
        %v2094 = vpop.f32.mrb[0].mxu0
        %v2095 = vadd.f32 %v1899, %v2094
        %v2096 = vpop.f32.mrb[0].mxu0
        %v2097 = vpop.f32.mrb[0].mxu0
        %v2098 = vadd.f32 %v1899, %v2097
        %v2099 = vpop.f32.mrb[0].mxu0
        %2100 = vmatprep.mubr.bf16.mxu0 %v1819
        %2101 = vmatmul.mubr.bf16.gmra.mrb[0].mxu0 %v1818
        %v2102 = vpop.f32.mrb[0].mxu0
        %v2103 = vadd.f32 %v1899, %v2102
        %v2104 = vpop.f32.mrb[0].mxu0
        %v2105 = vpop.f32.mrb[0].mxu0
        %v2106 = vadd.f32 %v1899, %v2105
        %v2107 = vpop.f32.mrb[0].mxu0
        %2108 = vmatprep.mubr.bf16.mxu0 %v1821
        %2109 = vmatmul.mubr.bf16.gmra.mrb[0].mxu0 %v1820
        %v2110 = vpop.f32.mrb[0].mxu0
        %v2111 = vadd.f32 %v1899, %v2110
        %v2112 = vpop.f32.mrb[0].mxu0
        %v2113 = vpop.f32.mrb[0].mxu0
        %v2114 = vadd.f32 %v1899, %v2113
        %v2115 = vpop.f32.mrb[0].mxu0
        %2116 = vmatprep.mubr.bf16.mxu0 %v1823
        %2117 = vmatmul.mubr.bf16.gmra.mrb[0].mxu0 %v1822
        %v2118 = vpop.f32.mrb[0].mxu0
        %v2119 = vadd.f32 %v1899, %v2118
        %v2120 = vpop.f32.mrb[0].mxu0
        %v2121 = vpop.f32.mrb[0].mxu0
        %v2122 = vadd.f32 %v1899, %v2121
        %v2123 = vpop.f32.mrb[0].mxu0
        %2124 = vmatprep.mubr.bf16.mxu0 %v1825
        %2125 = vmatmul.mubr.bf16.gmra.mrb[0].mxu0 %v1824
        %v2126 = vpop.f32.mrb[0].mxu0
        %v2127 = vadd.f32 %v1899, %v2126
        %v2128 = vpop.f32.mrb[0].mxu0
        %v2129 = vpop.f32.mrb[0].mxu0
        %v2130 = vadd.f32 %v1899, %v2129
        %v2131 = vpop.f32.mrb[0].mxu0
        %2132 = vmatprep.mubr.bf16.mxu0 %v1827
        %2133 = vmatmul.mubr.bf16.gmra.mrb[0].mxu0 %v1826
        %v2134 = vpop.f32.mrb[0].mxu0
        %v2135 = vadd.f32 %v1899, %v2134
        %v2136 = vpop.f32.mrb[0].mxu0
        %v2137 = vpop.f32.mrb[0].mxu0
        %v2138 = vadd.f32 %v1899, %v2137
        %v2139 = vpop.f32.mrb[0].mxu0
        %2140 = vmatprep.mubr.bf16.mxu0 %v1829
        %2141 = vmatmul.mubr.bf16.gmra.mrb[0].mxu0 %v1828
        %v2142 = vpop.f32.mrb[0].mxu0
        %v2143 = vadd.f32 %v1899, %v2142
        %v2144 = vpop.f32.mrb[0].mxu0
        %v2145 = vpop.f32.mrb[0].mxu0
        %v2146 = vadd.f32 %v1899, %v2145
        %v2147 = vpop.f32.mrb[0].mxu0
        %2148 = vmatprep.mubr.bf16.mxu0 %v1831
        %2149 = vmatmul.mubr.bf16.gmra.mrb[0].mxu0 %v1830
        %v2150 = vpop.f32.mrb[0].mxu0
        %v2151 = vadd.f32 %v1899, %v2150
        %v2152 = vpop.f32.mrb[0].mxu0
        %v2153 = vpop.f32.mrb[0].mxu0
        %v2154 = vadd.f32 %v1899, %v2153
        %v2155 = vpop.f32.mrb[0].mxu0
        %2156 = vmatprep.mubr.bf16.mxu0 %v1833
        %2157 = vmatmul.mubr.bf16.gmra.mrb[0].mxu0 %v1832
        %v2158 = vpop.f32.mrb[0].mxu0
        %v2159 = vadd.f32 %v1899, %v2158
        %v2160 = vpop.f32.mrb[0].mxu0
        %v2161 = vpop.f32.mrb[0].mxu0
        %v2162 = vadd.f32 %v1899, %v2161
        %v2163 = vpop.f32.mrb[0].mxu0
        %2164 = vmatprep.mubr.bf16.mxu0 %v1835
        %2165 = vmatmul.mubr.bf16.gmra.mrb[0].mxu0 %v1834
        %v2166 = vpop.f32.mrb[0].mxu0
        %v2167 = vadd.f32 %v1899, %v2166
        %v2168 = vpop.f32.mrb[0].mxu0
        %v2169 = vpop.f32.mrb[0].mxu0
        %v2170 = vadd.f32 %v1899, %v2169
        %v2171 = vpop.f32.mrb[0].mxu0
        %2172 = vmatprep.mubr.bf16.mxu0 %v1837
        %2173 = vmatmul.mubr.bf16.gmra.mrb[0].mxu0 %v1836
        %v2174 = vpop.f32.mrb[0].mxu0
        %v2175 = vadd.f32 %v1899, %v2174
        %v2176 = vpop.f32.mrb[0].mxu0
        %v2177 = vpop.f32.mrb[0].mxu0
        %v2178 = vadd.f32 %v1899, %v2177
        %v2179 = vpop.f32.mrb[0].mxu0
        %2180 = vmatprep.mubr.bf16.mxu0 %v1839
        %2181 = vmatmul.mubr.bf16.gmra.mrb[0].mxu0 %v1838
        %v2182 = vpop.f32.mrb[0].mxu0
        %v2183 = vadd.f32 %v1899, %v2182
        %v2184 = vpop.f32.mrb[0].mxu0
        %v2185 = vpop.f32.mrb[0].mxu0
        %v2186 = vadd.f32 %v1899, %v2185
        %v2187 = vpop.f32.mrb[0].mxu0
        %2188 = vmatprep.mubr.bf16.mxu0 %v1841
        %2189 = vmatmul.mubr.bf16.gmra.mrb[0].mxu0 %v1840
        %v2190 = vpop.f32.mrb[0].mxu0
        %v2191 = vadd.f32 %v1899, %v2190
        %v2192 = vpop.f32.mrb[0].mxu0
        %v2193 = vpop.f32.mrb[0].mxu0
        %v2194 = vadd.f32 %v1899, %v2193
        %v2195 = vpop.f32.mrb[0].mxu0
        %2196 = vmatprep.mubr.bf16.mxu0 %v1843
        %2197 = vmatmul.mubr.bf16.gmra.mrb[0].mxu0 %v1842
        %v2198 = vpop.f32.mrb[0].mxu0
        %v2199 = vadd.f32 %v1899, %v2198
        %v2200 = vpop.f32.mrb[0].mxu0
        %v2201 = vpop.f32.mrb[0].mxu0
        %v2202 = vadd.f32 %v1899, %v2201
        %v2203 = vpop.f32.mrb[0].mxu0
        %2204 = vmatprep.mubr.bf16.mxu0 %v1845
        %2205 = vmatmul.mubr.bf16.gmra.mrb[0].mxu0 %v1844
        %v2206 = vpop.f32.mrb[0].mxu0
        %v2207 = vadd.f32 %v1899, %v2206
        %v2208 = vpop.f32.mrb[0].mxu0
        %v2209 = vpop.f32.mrb[0].mxu0
        %v2210 = vadd.f32 %v1899, %v2209
        %v2211 = vpop.f32.mrb[0].mxu0
        %2212 = vmatprep.mubr.bf16.mxu0 %v1847
        %2213 = vmatmul.mubr.bf16.gmra.mrb[0].mxu0 %v1846
        %v2214 = vpop.f32.mrb[0].mxu0
        %v2215 = vadd.f32 %v1899, %v2214
        %v2216 = vpop.f32.mrb[0].mxu0
        %v2217 = vpop.f32.mrb[0].mxu0
        %v2218 = vadd.f32 %v1899, %v2217
        %v2219 = vpop.f32.mrb[0].mxu0
        %2220 = vmatprep.mubr.bf16.mxu0 %v1849
        %2221 = vmatmul.mubr.bf16.gmra.mrb[0].mxu0 %v1848
        %v2222 = vpop.f32.mrb[0].mxu0
        %v2223 = vadd.f32 %v1899, %v2222
        %v2224 = vpop.f32.mrb[0].mxu0
        %v2225 = vpop.f32.mrb[0].mxu0
        %v2226 = vadd.f32 %v1899, %v2225
        %v2227 = vpop.f32.mrb[0].mxu0
        %2228 = vmatprep.mubr.bf16.mxu0 %v1851
        %2229 = vmatmul.mubr.bf16.gmra.mrb[0].mxu0 %v1850
        %v2230 = vpop.f32.mrb[0].mxu0
        %v2231 = vadd.f32 %v1899, %v2230
        %v2232 = vpop.f32.mrb[0].mxu0
        %v2233 = vpop.f32.mrb[0].mxu0
        %v2234 = vadd.f32 %v1899, %v2233
        %v2235 = vpop.f32.mrb[0].mxu0
        %2236 = vmatprep.mubr.bf16.mxu0 %v1853
        %2237 = vmatmul.mubr.bf16.gmra.mrb[0].mxu0 %v1852
        %v2238 = vpop.f32.mrb[0].mxu0
        %v2239 = vadd.f32 %v1899, %v2238
        %v2240 = vpop.f32.mrb[0].mxu0
        %v2241 = vpop.f32.mrb[0].mxu0
        %v2242 = vadd.f32 %v1899, %v2241
        %v2243 = vpop.f32.mrb[0].mxu0
        %2244 = vmatprep.mubr.bf16.mxu0 %v1855
        %2245 = vmatmul.mubr.bf16.gmra.mrb[0].mxu0 %v1854
        %v2246 = vpop.f32.mrb[0].mxu0
        %v2247 = vadd.f32 %v1899, %v2246
        %v2248 = vpop.f32.mrb[0].mxu0
        %v2249 = vpop.f32.mrb[0].mxu0
        %v2250 = vadd.f32 %v1899, %v2249
        %v2251 = vpop.f32.mrb[0].mxu0
        %2252 = vmatprep.mubr.bf16.mxu0 %v1857
        %2253 = vmatmul.mubr.bf16.gmra.mrb[0].mxu0 %v1856
        %v2254 = vpop.f32.mrb[0].mxu0
        %v2255 = vadd.f32 %v1899, %v2254
        %v2256 = vpop.f32.mrb[0].mxu0
        %v2257 = vpop.f32.mrb[0].mxu0
        %v2258 = vadd.f32 %v1899, %v2257
        %v2259 = vpop.f32.mrb[0].mxu0
        %2260 = vmatprep.mubr.bf16.mxu0 %v1859
        %2261 = vmatmul.mubr.bf16.gmra.mrb[0].mxu0 %v1858
        %v2262 = vpop.f32.mrb[0].mxu0
        %v2263 = vadd.f32 %v1899, %v2262
        %v2264 = vpop.f32.mrb[0].mxu0
        %v2265 = vpop.f32.mrb[0].mxu0
        %v2266 = vadd.f32 %v1899, %v2265
        %v2267 = vpop.f32.mrb[0].mxu0
        %2268 = vmatprep.mubr.bf16.mxu0 %v1861
        %2269 = vmatmul.mubr.bf16.gmra.mrb[0].mxu0 %v1860
        %v2270 = vpop.f32.mrb[0].mxu0
        %v2271 = vadd.f32 %v1899, %v2270
        %v2272 = vpop.f32.mrb[0].mxu0
        %v2273 = vpop.f32.mrb[0].mxu0
        %v2274 = vadd.f32 %v1899, %v2273
        %v2275 = vpop.f32.mrb[0].mxu0
        %2276 = vmatprep.mubr.bf16.mxu0 %v1863
        %2277 = vmatmul.mubr.bf16.gmra.mrb[0].mxu0 %v1862
        %v2278 = vpop.f32.mrb[0].mxu0
        %v2279 = vadd.f32 %v1899, %v2278
        %v2280 = vpop.f32.mrb[0].mxu0
        %v2281 = vpop.f32.mrb[0].mxu0
        %v2282 = vadd.f32 %v1899, %v2281
        %v2283 = vpop.f32.mrb[0].mxu0
        %2284 = vdwg.mxu0
        %v2285 = vpack.c.bf16 %v1138, %v1135
        %v2286 = vpack.c.bf16 %v1146, %v1143
        %v2287 = vpack.c.bf16 %v1154, %v1151
        %v2288 = vpack.c.bf16 %v1162, %v1159
        %v2289 = vpack.c.bf16 %v1170, %v1167
        %v2290 = vpack.c.bf16 %v1178, %v1175
        %v2291 = vpack.c.bf16 %v1186, %v1183
        %v2292 = vpack.c.bf16 %v1194, %v1191
        %v2293 = vpack.c.bf16 %v1202, %v1199
        %v2294 = vpack.c.bf16 %v1210, %v1207
        %v2295 = vpack.c.bf16 %v1218, %v1215
        %v2296 = vpack.c.bf16 %v1226, %v1223
        %v2297 = vpack.c.bf16 %v1234, %v1231
        %v2298 = vpack.c.bf16 %v1242, %v1239
        %v2299 = vpack.c.bf16 %v1250, %v1247
        %v2300 = vpack.c.bf16 %v1258, %v1255
        %v2301 = vpack.c.bf16 %v1266, %v1263
        %v2302 = vpack.c.bf16 %v1274, %v1271
        %v2303 = vpack.c.bf16 %v1282, %v1279
        %v2304 = vpack.c.bf16 %v1290, %v1287
        %v2305 = vpack.c.bf16 %v1298, %v1295
        %v2306 = vpack.c.bf16 %v1306, %v1303
        %v2307 = vpack.c.bf16 %v1314, %v1311
        %v2308 = vpack.c.bf16 %v1322, %v1319
        %v2309 = vpack.c.bf16 %v1330, %v1327
        %v2310 = vpack.c.bf16 %v1338, %v1335
        %v2311 = vpack.c.bf16 %v1346, %v1343
        %v2312 = vpack.c.bf16 %v1354, %v1351
        %v2313 = vpack.c.bf16 %v1362, %v1359
        %v2314 = vpack.c.bf16 %v1370, %v1367
        %v2315 = vpack.c.bf16 %v1378, %v1375
        %v2316 = vpack.c.bf16 %v1386, %v1383
        %v2317 = vpack.c.bf16 %v2034, %v2031
        %v2318 = vpack.c.bf16 %v2042, %v2039
        %v2319 = vpack.c.bf16 %v2050, %v2047
        %v2320 = vpack.c.bf16 %v2058, %v2055
        %v2321 = vpack.c.bf16 %v2066, %v2063
        %v2322 = vpack.c.bf16 %v2074, %v2071
        %v2323 = vpack.c.bf16 %v2082, %v2079
        %v2324 = vpack.c.bf16 %v2090, %v2087
        %v2325 = vpack.c.bf16 %v2098, %v2095
        %v2326 = vpack.c.bf16 %v2106, %v2103
        %v2327 = vpack.c.bf16 %v2114, %v2111
        %v2328 = vpack.c.bf16 %v2122, %v2119
        %v2329 = vpack.c.bf16 %v2130, %v2127
        %v2330 = vpack.c.bf16 %v2138, %v2135
        %v2331 = vpack.c.bf16 %v2146, %v2143
        %v2332 = vpack.c.bf16 %v2154, %v2151
        %v2333 = vpack.c.bf16 %v2162, %v2159
        %v2334 = vpack.c.bf16 %v2170, %v2167
        %v2335 = vpack.c.bf16 %v2178, %v2175
        %v2336 = vpack.c.bf16 %v2186, %v2183
        %v2337 = vpack.c.bf16 %v2194, %v2191
        %v2338 = vpack.c.bf16 %v2202, %v2199
        %v2339 = vpack.c.bf16 %v2210, %v2207
        %v2340 = vpack.c.bf16 %v2218, %v2215
        %v2341 = vpack.c.bf16 %v2226, %v2223
        %v2342 = vpack.c.bf16 %v2234, %v2231
        %v2343 = vpack.c.bf16 %v2242, %v2239
        %v2344 = vpack.c.bf16 %v2250, %v2247
        %v2345 = vpack.c.bf16 %v2258, %v2255
        %v2346 = vpack.c.bf16 %v2266, %v2263
        %v2347 = vpack.c.bf16 %v2274, %v2271
        %v2348 = vpack.c.bf16 %v2282, %v2279
        %v2349 = vunpack.c.l.bf16 %v2285
        %v2350 = vunpack.c.h.bf16 %v2285
        %v2351 = vunpack.c.l.bf16 %v2286
        %v2352 = vunpack.c.h.bf16 %v2286
        %v2353 = vunpack.c.l.bf16 %v2287
        %v2354 = vunpack.c.h.bf16 %v2287
        %v2355 = vunpack.c.l.bf16 %v2288
        %v2356 = vunpack.c.h.bf16 %v2288
        %v2357 = vunpack.c.l.bf16 %v2289
        %v2358 = vunpack.c.h.bf16 %v2289
        %v2359 = vunpack.c.l.bf16 %v2290
        %v2360 = vunpack.c.h.bf16 %v2290
        %v2361 = vunpack.c.l.bf16 %v2291
        %v2362 = vunpack.c.h.bf16 %v2291
        %v2363 = vunpack.c.l.bf16 %v2292
        %v2364 = vunpack.c.h.bf16 %v2292
        %v2365 = vunpack.c.l.bf16 %v2293
        %v2366 = vunpack.c.h.bf16 %v2293
        %v2367 = vunpack.c.l.bf16 %v2294
        %v2368 = vunpack.c.h.bf16 %v2294
        %v2369 = vunpack.c.l.bf16 %v2295
        %v2370 = vunpack.c.h.bf16 %v2295
        %v2371 = vunpack.c.l.bf16 %v2296
        %v2372 = vunpack.c.h.bf16 %v2296
        %v2373 = vunpack.c.l.bf16 %v2297
        %v2374 = vunpack.c.h.bf16 %v2297
        %v2375 = vunpack.c.l.bf16 %v2298
        %v2376 = vunpack.c.h.bf16 %v2298
        %v2377 = vunpack.c.l.bf16 %v2299
        %v2378 = vunpack.c.h.bf16 %v2299
        %v2379 = vunpack.c.l.bf16 %v2300
        %v2380 = vunpack.c.h.bf16 %v2300
        %v2381 = vunpack.c.l.bf16 %v2301
        %v2382 = vunpack.c.h.bf16 %v2301
        %v2383 = vunpack.c.l.bf16 %v2302
        %v2384 = vunpack.c.h.bf16 %v2302
        %v2385 = vunpack.c.l.bf16 %v2303
        %v2386 = vunpack.c.h.bf16 %v2303
        %v2387 = vunpack.c.l.bf16 %v2304
        %v2388 = vunpack.c.h.bf16 %v2304
        %v2389 = vunpack.c.l.bf16 %v2305
        %v2390 = vunpack.c.h.bf16 %v2305
        %v2391 = vunpack.c.l.bf16 %v2306
        %v2392 = vunpack.c.h.bf16 %v2306
        %v2393 = vunpack.c.l.bf16 %v2307
        %v2394 = vunpack.c.h.bf16 %v2307
        %v2395 = vunpack.c.l.bf16 %v2308
        %v2396 = vunpack.c.h.bf16 %v2308
        %v2397 = vunpack.c.l.bf16 %v2309
        %v2398 = vunpack.c.h.bf16 %v2309
        %v2399 = vunpack.c.l.bf16 %v2310
        %v2400 = vunpack.c.h.bf16 %v2310
        %v2401 = vunpack.c.l.bf16 %v2311
        %v2402 = vunpack.c.h.bf16 %v2311
        %v2403 = vunpack.c.l.bf16 %v2312
        %v2404 = vunpack.c.h.bf16 %v2312
        %v2405 = vunpack.c.l.bf16 %v2313
        %v2406 = vunpack.c.h.bf16 %v2313
        %v2407 = vunpack.c.l.bf16 %v2314
        %v2408 = vunpack.c.h.bf16 %v2314
        %v2409 = vunpack.c.l.bf16 %v2315
        %v2410 = vunpack.c.h.bf16 %v2315
        %v2411 = vunpack.c.l.bf16 %v2316
        %v2412 = vunpack.c.h.bf16 %v2316
        %vm2413 = vcmp.gt.f32.partialorder %v2349, 0.0
        %vm2414 = vcmp.gt.f32.partialorder %v2350, 0.0
        %vm2415 = vcmp.gt.f32.partialorder %v2351, 0.0
        %vm2416 = vcmp.gt.f32.partialorder %v2352, 0.0
        %vm2417 = vcmp.gt.f32.partialorder %v2353, 0.0
        %vm2418 = vcmp.gt.f32.partialorder %v2354, 0.0
        %vm2419 = vcmp.gt.f32.partialorder %v2355, 0.0
        %vm2420 = vcmp.gt.f32.partialorder %v2356, 0.0
        %vm2421 = vcmp.gt.f32.partialorder %v2357, 0.0
        %vm2422 = vcmp.gt.f32.partialorder %v2358, 0.0
        %vm2423 = vcmp.gt.f32.partialorder %v2359, 0.0
        %vm2424 = vcmp.gt.f32.partialorder %v2360, 0.0
        %vm2425 = vcmp.gt.f32.partialorder %v2361, 0.0
        %vm2426 = vcmp.gt.f32.partialorder %v2362, 0.0
        %vm2427 = vcmp.gt.f32.partialorder %v2363, 0.0
        %vm2428 = vcmp.gt.f32.partialorder %v2364, 0.0
        %vm2429 = vcmp.gt.f32.partialorder %v2365, 0.0
        %vm2430 = vcmp.gt.f32.partialorder %v2366, 0.0
        %vm2431 = vcmp.gt.f32.partialorder %v2367, 0.0
        %vm2432 = vcmp.gt.f32.partialorder %v2368, 0.0
        %vm2433 = vcmp.gt.f32.partialorder %v2369, 0.0
        %vm2434 = vcmp.gt.f32.partialorder %v2370, 0.0
        %vm2435 = vcmp.gt.f32.partialorder %v2371, 0.0
        %vm2436 = vcmp.gt.f32.partialorder %v2372, 0.0
        %vm2437 = vcmp.gt.f32.partialorder %v2373, 0.0
        %vm2438 = vcmp.gt.f32.partialorder %v2374, 0.0
        %vm2439 = vcmp.gt.f32.partialorder %v2375, 0.0
        %vm2440 = vcmp.gt.f32.partialorder %v2376, 0.0
        %vm2441 = vcmp.gt.f32.partialorder %v2377, 0.0
        %vm2442 = vcmp.gt.f32.partialorder %v2378, 0.0
        %vm2443 = vcmp.gt.f32.partialorder %v2379, 0.0
        %vm2444 = vcmp.gt.f32.partialorder %v2380, 0.0
        %vm2445 = vcmp.gt.f32.partialorder %v2381, 0.0
        %vm2446 = vcmp.gt.f32.partialorder %v2382, 0.0
        %vm2447 = vcmp.gt.f32.partialorder %v2383, 0.0
        %vm2448 = vcmp.gt.f32.partialorder %v2384, 0.0
        %vm2449 = vcmp.gt.f32.partialorder %v2385, 0.0
        %vm2450 = vcmp.gt.f32.partialorder %v2386, 0.0
        %vm2451 = vcmp.gt.f32.partialorder %v2387, 0.0
        %vm2452 = vcmp.gt.f32.partialorder %v2388, 0.0
        %vm2453 = vcmp.gt.f32.partialorder %v2389, 0.0
        %vm2454 = vcmp.gt.f32.partialorder %v2390, 0.0
        %vm2455 = vcmp.gt.f32.partialorder %v2391, 0.0
        %vm2456 = vcmp.gt.f32.partialorder %v2392, 0.0
        %vm2457 = vcmp.gt.f32.partialorder %v2393, 0.0
        %vm2458 = vcmp.gt.f32.partialorder %v2394, 0.0
        %vm2459 = vcmp.gt.f32.partialorder %v2395, 0.0
        %vm2460 = vcmp.gt.f32.partialorder %v2396, 0.0
        %vm2461 = vcmp.gt.f32.partialorder %v2397, 0.0
        %vm2462 = vcmp.gt.f32.partialorder %v2398, 0.0
        %vm2463 = vcmp.gt.f32.partialorder %v2399, 0.0
        %vm2464 = vcmp.gt.f32.partialorder %v2400, 0.0
        %vm2465 = vcmp.gt.f32.partialorder %v2401, 0.0
        %vm2466 = vcmp.gt.f32.partialorder %v2402, 0.0
        %vm2467 = vcmp.gt.f32.partialorder %v2403, 0.0
        %vm2468 = vcmp.gt.f32.partialorder %v2404, 0.0
        %vm2469 = vcmp.gt.f32.partialorder %v2405, 0.0
        %vm2470 = vcmp.gt.f32.partialorder %v2406, 0.0
        %vm2471 = vcmp.gt.f32.partialorder %v2407, 0.0
        %vm2472 = vcmp.gt.f32.partialorder %v2408, 0.0
        %vm2473 = vcmp.gt.f32.partialorder %v2409, 0.0
        %vm2474 = vcmp.gt.f32.partialorder %v2410, 0.0
        %vm2475 = vcmp.gt.f32.partialorder %v2411, 0.0
        %vm2476 = vcmp.gt.f32.partialorder %v2412, 0.0
        %v2477 = vld [vmem:[%s277] sm:$0xff]
        %v2478 = vld [vmem:[%s277 + $0x8] sm:$0xff]
        %v2479 = vld [vmem:[%s277 + $0x10] sm:$0xff]
        %v2480 = vld [vmem:[%s277 + $0x18] sm:$0xff]
        %v2481 = vld [vmem:[%s277 + $0x20] sm:$0xff]
        %v2482 = vld [vmem:[%s277 + $0x28] sm:$0xff]
        %v2483 = vld [vmem:[%s277 + $0x30] sm:$0xff]
        %v2484 = vld [vmem:[%s277 + $0x38] sm:$0xff]
        %v2485 = vld [vmem:[%s277 + $0x40] sm:$0xff]
        %v2486 = vld [vmem:[%s277 + $0x48] sm:$0xff]
        %v2487 = vld [vmem:[%s277 + $0x50] sm:$0xff]
        %v2488 = vld [vmem:[%s277 + $0x58] sm:$0xff]
        %v2489 = vld [vmem:[%s277 + $0x60] sm:$0xff]
        %v2490 = vld [vmem:[%s277 + $0x68] sm:$0xff]
        %v2491 = vld [vmem:[%s277 + $0x70] sm:$0xff]
        %v2492 = vld [vmem:[%s277 + $0x78] sm:$0xff]
        %v2493 = vld [vmem:[%s277 + $0x80] sm:$0xff]
        %v2494 = vld [vmem:[%s277 + $0x88] sm:$0xff]
        %v2495 = vld [vmem:[%s277 + $0x90] sm:$0xff]
        %v2496 = vld [vmem:[%s277 + $0x98] sm:$0xff]
        %v2497 = vld [vmem:[%s277 + $0xa0] sm:$0xff]
        %v2498 = vld [vmem:[%s277 + $0xa8] sm:$0xff]
        %v2499 = vld [vmem:[%s277 + $0xb0] sm:$0xff]
        %v2500 = vld [vmem:[%s277 + $0xb8] sm:$0xff]
        %v2501 = vld [vmem:[%s277 + $0xc0] sm:$0xff]
        %v2502 = vld [vmem:[%s277 + $0xc8] sm:$0xff]
        %v2503 = vld [vmem:[%s277 + $0xd0] sm:$0xff]
        %v2504 = vld [vmem:[%s277 + $0xd8] sm:$0xff]
        %v2505 = vld [vmem:[%s277 + $0xe0] sm:$0xff]
        %v2506 = vld [vmem:[%s277 + $0xe8] sm:$0xff]
        %v2507 = vld [vmem:[%s277 + $0xf0] sm:$0xff]
        %v2508 = vld [vmem:[%s277 + $0xf8] sm:$0xff]
        %v2509 = vld [vmem:[%s277 + $0x100] sm:$0xff]
        %v2510 = vld [vmem:[%s277 + $0x108] sm:$0xff]
        %v2511 = vld [vmem:[%s277 + $0x110] sm:$0xff]
        %v2512 = vld [vmem:[%s277 + $0x118] sm:$0xff]
        %v2513 = vld [vmem:[%s277 + $0x120] sm:$0xff]
        %v2514 = vld [vmem:[%s277 + $0x128] sm:$0xff]
        %v2515 = vld [vmem:[%s277 + $0x130] sm:$0xff]
        %v2516 = vld [vmem:[%s277 + $0x138] sm:$0xff]
        %v2517 = vld [vmem:[%s277 + $0x140] sm:$0xff]
        %v2518 = vld [vmem:[%s277 + $0x148] sm:$0xff]
        %v2519 = vld [vmem:[%s277 + $0x150] sm:$0xff]
        %v2520 = vld [vmem:[%s277 + $0x158] sm:$0xff]
        %v2521 = vld [vmem:[%s277 + $0x160] sm:$0xff]
        %v2522 = vld [vmem:[%s277 + $0x168] sm:$0xff]
        %v2523 = vld [vmem:[%s277 + $0x170] sm:$0xff]
        %v2524 = vld [vmem:[%s277 + $0x178] sm:$0xff]
        %v2525 = vld [vmem:[%s277 + $0x180] sm:$0xff]
        %v2526 = vld [vmem:[%s277 + $0x188] sm:$0xff]
        %v2527 = vld [vmem:[%s277 + $0x190] sm:$0xff]
        %v2528 = vld [vmem:[%s277 + $0x198] sm:$0xff]
        %v2529 = vld [vmem:[%s277 + $0x1a0] sm:$0xff]
        %v2530 = vld [vmem:[%s277 + $0x1a8] sm:$0xff]
        %v2531 = vld [vmem:[%s277 + $0x1b0] sm:$0xff]
        %v2532 = vld [vmem:[%s277 + $0x1b8] sm:$0xff]
        %v2533 = vld [vmem:[%s277 + $0x1c0] sm:$0xff]
        %v2534 = vld [vmem:[%s277 + $0x1c8] sm:$0xff]
        %v2535 = vld [vmem:[%s277 + $0x1d0] sm:$0xff]
        %v2536 = vld [vmem:[%s277 + $0x1d8] sm:$0xff]
        %v2537 = vld [vmem:[%s277 + $0x1e0] sm:$0xff]
        %v2538 = vld [vmem:[%s277 + $0x1e8] sm:$0xff]
        %v2539 = vld [vmem:[%s277 + $0x1f0] sm:$0xff]
        %v2540 = vld [vmem:[%s277 + $0x1f8] sm:$0xff]
        %vm2541 = vcmp.gt.f32.partialorder %v2477, 0.5
        %vm2542 = vcmp.gt.f32.partialorder %v2478, 0.5
        %vm2543 = vcmp.gt.f32.partialorder %v2479, 0.5
        %vm2544 = vcmp.gt.f32.partialorder %v2480, 0.5
        %vm2545 = vcmp.gt.f32.partialorder %v2481, 0.5
        %vm2546 = vcmp.gt.f32.partialorder %v2482, 0.5
        %vm2547 = vcmp.gt.f32.partialorder %v2483, 0.5
        %vm2548 = vcmp.gt.f32.partialorder %v2484, 0.5
        %vm2549 = vcmp.gt.f32.partialorder %v2485, 0.5
        %vm2550 = vcmp.gt.f32.partialorder %v2486, 0.5
        %vm2551 = vcmp.gt.f32.partialorder %v2487, 0.5
        %vm2552 = vcmp.gt.f32.partialorder %v2488, 0.5
        %vm2553 = vcmp.gt.f32.partialorder %v2489, 0.5
        %vm2554 = vcmp.gt.f32.partialorder %v2490, 0.5
        %vm2555 = vcmp.gt.f32.partialorder %v2491, 0.5
        %vm2556 = vcmp.gt.f32.partialorder %v2492, 0.5
        %vm2557 = vcmp.gt.f32.partialorder %v2493, 0.5
        %vm2558 = vcmp.gt.f32.partialorder %v2494, 0.5
        %vm2559 = vcmp.gt.f32.partialorder %v2495, 0.5
        %vm2560 = vcmp.gt.f32.partialorder %v2496, 0.5
        %vm2561 = vcmp.gt.f32.partialorder %v2497, 0.5
        %vm2562 = vcmp.gt.f32.partialorder %v2498, 0.5
        %vm2563 = vcmp.gt.f32.partialorder %v2499, 0.5
        %vm2564 = vcmp.gt.f32.partialorder %v2500, 0.5
        %vm2565 = vcmp.gt.f32.partialorder %v2501, 0.5
        %vm2566 = vcmp.gt.f32.partialorder %v2502, 0.5
        %vm2567 = vcmp.gt.f32.partialorder %v2503, 0.5
        %vm2568 = vcmp.gt.f32.partialorder %v2504, 0.5
        %vm2569 = vcmp.gt.f32.partialorder %v2505, 0.5
        %vm2570 = vcmp.gt.f32.partialorder %v2506, 0.5
        %vm2571 = vcmp.gt.f32.partialorder %v2507, 0.5
        %vm2572 = vcmp.gt.f32.partialorder %v2508, 0.5
        %vm2573 = vcmp.gt.f32.partialorder %v2509, 0.5
        %vm2574 = vcmp.gt.f32.partialorder %v2510, 0.5
        %vm2575 = vcmp.gt.f32.partialorder %v2511, 0.5
        %vm2576 = vcmp.gt.f32.partialorder %v2512, 0.5
        %vm2577 = vcmp.gt.f32.partialorder %v2513, 0.5
        %vm2578 = vcmp.gt.f32.partialorder %v2514, 0.5
        %vm2579 = vcmp.gt.f32.partialorder %v2515, 0.5
        %vm2580 = vcmp.gt.f32.partialorder %v2516, 0.5
        %vm2581 = vcmp.gt.f32.partialorder %v2517, 0.5
        %vm2582 = vcmp.gt.f32.partialorder %v2518, 0.5
        %vm2583 = vcmp.gt.f32.partialorder %v2519, 0.5
        %vm2584 = vcmp.gt.f32.partialorder %v2520, 0.5
        %vm2585 = vcmp.gt.f32.partialorder %v2521, 0.5
        %vm2586 = vcmp.gt.f32.partialorder %v2522, 0.5
        %vm2587 = vcmp.gt.f32.partialorder %v2523, 0.5
        %vm2588 = vcmp.gt.f32.partialorder %v2524, 0.5
        %vm2589 = vcmp.gt.f32.partialorder %v2525, 0.5
        %vm2590 = vcmp.gt.f32.partialorder %v2526, 0.5
        %vm2591 = vcmp.gt.f32.partialorder %v2527, 0.5
        %vm2592 = vcmp.gt.f32.partialorder %v2528, 0.5
        %vm2593 = vcmp.gt.f32.partialorder %v2529, 0.5
        %vm2594 = vcmp.gt.f32.partialorder %v2530, 0.5
        %vm2595 = vcmp.gt.f32.partialorder %v2531, 0.5
        %vm2596 = vcmp.gt.f32.partialorder %v2532, 0.5
        %vm2597 = vcmp.gt.f32.partialorder %v2533, 0.5
        %vm2598 = vcmp.gt.f32.partialorder %v2534, 0.5
        %vm2599 = vcmp.gt.f32.partialorder %v2535, 0.5
        %vm2600 = vcmp.gt.f32.partialorder %v2536, 0.5
        %vm2601 = vcmp.gt.f32.partialorder %v2537, 0.5
        %vm2602 = vcmp.gt.f32.partialorder %v2538, 0.5
        %vm2603 = vcmp.gt.f32.partialorder %v2539, 0.5
        %vm2604 = vcmp.gt.f32.partialorder %v2540, 0.5
        %vm2605 = vmand %vm2413, %vm2541
        %vm2606 = vmand %vm2414, %vm2542
        %vm2607 = vmand %vm2415, %vm2543
        %vm2608 = vmand %vm2416, %vm2544
        %vm2609 = vmand %vm2417, %vm2545
        %vm2610 = vmand %vm2418, %vm2546
        %vm2611 = vmand %vm2419, %vm2547
        %vm2612 = vmand %vm2420, %vm2548
        %vm2613 = vmand %vm2421, %vm2549
        %vm2614 = vmand %vm2422, %vm2550
        %vm2615 = vmand %vm2423, %vm2551
        %vm2616 = vmand %vm2424, %vm2552
        %vm2617 = vmand %vm2425, %vm2553
        %vm2618 = vmand %vm2426, %vm2554
        %vm2619 = vmand %vm2427, %vm2555
        %vm2620 = vmand %vm2428, %vm2556
        %vm2621 = vmand %vm2429, %vm2557
        %vm2622 = vmand %vm2430, %vm2558
        %vm2623 = vmand %vm2431, %vm2559
        %vm2624 = vmand %vm2432, %vm2560
        %vm2625 = vmand %vm2433, %vm2561
        %vm2626 = vmand %vm2434, %vm2562
        %vm2627 = vmand %vm2435, %vm2563
        %vm2628 = vmand %vm2436, %vm2564
        %vm2629 = vmand %vm2437, %vm2565
        %vm2630 = vmand %vm2438, %vm2566
        %vm2631 = vmand %vm2439, %vm2567
        %vm2632 = vmand %vm2440, %vm2568
        %vm2633 = vmand %vm2441, %vm2569
        %vm2634 = vmand %vm2442, %vm2570
        %vm2635 = vmand %vm2443, %vm2571
        %vm2636 = vmand %vm2444, %vm2572
        %vm2637 = vmand %vm2445, %vm2573
        %vm2638 = vmand %vm2446, %vm2574
        %vm2639 = vmand %vm2447, %vm2575
        %vm2640 = vmand %vm2448, %vm2576
        %vm2641 = vmand %vm2449, %vm2577
        %vm2642 = vmand %vm2450, %vm2578
        %vm2643 = vmand %vm2451, %vm2579
        %vm2644 = vmand %vm2452, %vm2580
        %vm2645 = vmand %vm2453, %vm2581
        %vm2646 = vmand %vm2454, %vm2582
        %vm2647 = vmand %vm2455, %vm2583
        %vm2648 = vmand %vm2456, %vm2584
        %vm2649 = vmand %vm2457, %vm2585
        %vm2650 = vmand %vm2458, %vm2586
        %vm2651 = vmand %vm2459, %vm2587
        %vm2652 = vmand %vm2460, %vm2588
        %vm2653 = vmand %vm2461, %vm2589
        %vm2654 = vmand %vm2462, %vm2590
        %vm2655 = vmand %vm2463, %vm2591
        %vm2656 = vmand %vm2464, %vm2592
        %vm2657 = vmand %vm2465, %vm2593
        %vm2658 = vmand %vm2466, %vm2594
        %vm2659 = vmand %vm2467, %vm2595
        %vm2660 = vmand %vm2468, %vm2596
        %vm2661 = vmand %vm2469, %vm2597
        %vm2662 = vmand %vm2470, %vm2598
        %vm2663 = vmand %vm2471, %vm2599
        %vm2664 = vmand %vm2472, %vm2600
        %vm2665 = vmand %vm2473, %vm2601
        %vm2666 = vmand %vm2474, %vm2602
        %vm2667 = vmand %vm2475, %vm2603
        %vm2668 = vmand %vm2476, %vm2604
        %v2669 = vsel %vm2605, 1, 0
        %v2670 = vsel %vm2606, 1, 0
        %v2671 = vsel %vm2607, 1, 0
        %v2672 = vsel %vm2608, 1, 0
        %v2673 = vsel %vm2609, 1, 0
        %v2674 = vsel %vm2610, 1, 0
        %v2675 = vsel %vm2611, 1, 0
        %v2676 = vsel %vm2612, 1, 0
        %v2677 = vsel %vm2613, 1, 0
        %v2678 = vsel %vm2614, 1, 0
        %v2679 = vsel %vm2615, 1, 0
        %v2680 = vsel %vm2616, 1, 0
        %v2681 = vsel %vm2617, 1, 0
        %v2682 = vsel %vm2618, 1, 0
        %v2683 = vsel %vm2619, 1, 0
        %v2684 = vsel %vm2620, 1, 0
        %v2685 = vsel %vm2621, 1, 0
        %v2686 = vsel %vm2622, 1, 0
        %v2687 = vsel %vm2623, 1, 0
        %v2688 = vsel %vm2624, 1, 0
        %v2689 = vsel %vm2625, 1, 0
        %v2690 = vsel %vm2626, 1, 0
        %v2691 = vsel %vm2627, 1, 0
        %v2692 = vsel %vm2628, 1, 0
        %v2693 = vsel %vm2629, 1, 0
        %v2694 = vsel %vm2630, 1, 0
        %v2695 = vsel %vm2631, 1, 0
        %v2696 = vsel %vm2632, 1, 0
        %v2697 = vsel %vm2633, 1, 0
        %v2698 = vsel %vm2634, 1, 0
        %v2699 = vsel %vm2635, 1, 0
        %v2700 = vsel %vm2636, 1, 0
        %v2701 = vsel %vm2637, 1, 0
        %v2702 = vsel %vm2638, 1, 0
        %v2703 = vsel %vm2639, 1, 0
        %v2704 = vsel %vm2640, 1, 0
        %v2705 = vsel %vm2641, 1, 0
        %v2706 = vsel %vm2642, 1, 0
        %v2707 = vsel %vm2643, 1, 0
        %v2708 = vsel %vm2644, 1, 0
        %v2709 = vsel %vm2645, 1, 0
        %v2710 = vsel %vm2646, 1, 0
        %v2711 = vsel %vm2647, 1, 0
        %v2712 = vsel %vm2648, 1, 0
        %v2713 = vsel %vm2649, 1, 0
        %v2714 = vsel %vm2650, 1, 0
        %v2715 = vsel %vm2651, 1, 0
        %v2716 = vsel %vm2652, 1, 0
        %v2717 = vsel %vm2653, 1, 0
        %v2718 = vsel %vm2654, 1, 0
        %v2719 = vsel %vm2655, 1, 0
        %v2720 = vsel %vm2656, 1, 0
        %v2721 = vsel %vm2657, 1, 0
        %v2722 = vsel %vm2658, 1, 0
        %v2723 = vsel %vm2659, 1, 0
        %v2724 = vsel %vm2660, 1, 0
        %v2725 = vsel %vm2661, 1, 0
        %v2726 = vsel %vm2662, 1, 0
        %v2727 = vsel %vm2663, 1, 0
        %v2728 = vsel %vm2664, 1, 0
        %v2729 = vsel %vm2665, 1, 0
        %v2730 = vsel %vm2666, 1, 0
        %v2731 = vsel %vm2667, 1, 0
        %v2732 = vsel %vm2668, 1, 0
        %v2733 = vcvt.s32.f32 %v2669
        %v2734 = vcvt.s32.f32 %v2670
        %v2735 = vcvt.s32.f32 %v2671
        %v2736 = vcvt.s32.f32 %v2672
        %v2737 = vcvt.s32.f32 %v2673
        %v2738 = vcvt.s32.f32 %v2674
        %v2739 = vcvt.s32.f32 %v2675
        %v2740 = vcvt.s32.f32 %v2676
        %v2741 = vcvt.s32.f32 %v2677
        %v2742 = vcvt.s32.f32 %v2678
        %v2743 = vcvt.s32.f32 %v2679
        %v2744 = vcvt.s32.f32 %v2680
        %v2745 = vcvt.s32.f32 %v2681
        %v2746 = vcvt.s32.f32 %v2682
        %v2747 = vcvt.s32.f32 %v2683
        %v2748 = vcvt.s32.f32 %v2684
        %v2749 = vcvt.s32.f32 %v2685
        %v2750 = vcvt.s32.f32 %v2686
        %v2751 = vcvt.s32.f32 %v2687
        %v2752 = vcvt.s32.f32 %v2688
        %v2753 = vcvt.s32.f32 %v2689
        %v2754 = vcvt.s32.f32 %v2690
        %v2755 = vcvt.s32.f32 %v2691
        %v2756 = vcvt.s32.f32 %v2692
        %v2757 = vcvt.s32.f32 %v2693
        %v2758 = vcvt.s32.f32 %v2694
        %v2759 = vcvt.s32.f32 %v2695
        %v2760 = vcvt.s32.f32 %v2696
        %v2761 = vcvt.s32.f32 %v2697
        %v2762 = vcvt.s32.f32 %v2698
        %v2763 = vcvt.s32.f32 %v2699
        %v2764 = vcvt.s32.f32 %v2700
        %v2765 = vcvt.s32.f32 %v2701
        %v2766 = vcvt.s32.f32 %v2702
        %v2767 = vcvt.s32.f32 %v2703
        %v2768 = vcvt.s32.f32 %v2704
        %v2769 = vcvt.s32.f32 %v2705
        %v2770 = vcvt.s32.f32 %v2706
        %v2771 = vcvt.s32.f32 %v2707
        %v2772 = vcvt.s32.f32 %v2708
        %v2773 = vcvt.s32.f32 %v2709
        %v2774 = vcvt.s32.f32 %v2710
        %v2775 = vcvt.s32.f32 %v2711
        %v2776 = vcvt.s32.f32 %v2712
        %v2777 = vcvt.s32.f32 %v2713
        %v2778 = vcvt.s32.f32 %v2714
        %v2779 = vcvt.s32.f32 %v2715
        %v2780 = vcvt.s32.f32 %v2716
        %v2781 = vcvt.s32.f32 %v2717
        %v2782 = vcvt.s32.f32 %v2718
        %v2783 = vcvt.s32.f32 %v2719
        %v2784 = vcvt.s32.f32 %v2720
        %v2785 = vcvt.s32.f32 %v2721
        %v2786 = vcvt.s32.f32 %v2722
        %v2787 = vcvt.s32.f32 %v2723
        %v2788 = vcvt.s32.f32 %v2724
        %v2789 = vcvt.s32.f32 %v2725
        %v2790 = vcvt.s32.f32 %v2726
        %v2791 = vcvt.s32.f32 %v2727
        %v2792 = vcvt.s32.f32 %v2728
        %v2793 = vcvt.s32.f32 %v2729
        %v2794 = vcvt.s32.f32 %v2730
        %v2795 = vcvt.s32.f32 %v2731
        %v2796 = vcvt.s32.f32 %v2732
        %v2797 = vpack.c.bf16 %v2734, %v2733
        %v2798 = vpack.c.bf16 %v2736, %v2735
        %v2799 = vpack.c.bf16 %v2738, %v2737
        %v2800 = vpack.c.bf16 %v2740, %v2739
        %v2801 = vpack.c.bf16 %v2742, %v2741
        %v2802 = vpack.c.bf16 %v2744, %v2743
        %v2803 = vpack.c.bf16 %v2746, %v2745
        %v2804 = vpack.c.bf16 %v2748, %v2747
        %v2805 = vpack.c.bf16 %v2750, %v2749
        %v2806 = vpack.c.bf16 %v2752, %v2751
        %v2807 = vpack.c.bf16 %v2754, %v2753
        %v2808 = vpack.c.bf16 %v2756, %v2755
        %v2809 = vpack.c.bf16 %v2758, %v2757
        %v2810 = vpack.c.bf16 %v2760, %v2759
        %v2811 = vpack.c.bf16 %v2762, %v2761
        %v2812 = vpack.c.bf16 %v2764, %v2763
        %v2813 = vpack.c.bf16 %v2766, %v2765
        %v2814 = vpack.c.bf16 %v2768, %v2767
        %v2815 = vpack.c.bf16 %v2770, %v2769
        %v2816 = vpack.c.bf16 %v2772, %v2771
        %v2817 = vpack.c.bf16 %v2774, %v2773
        %v2818 = vpack.c.bf16 %v2776, %v2775
        %v2819 = vpack.c.bf16 %v2778, %v2777
        %v2820 = vpack.c.bf16 %v2780, %v2779
        %v2821 = vpack.c.bf16 %v2782, %v2781
        %v2822 = vpack.c.bf16 %v2784, %v2783
        %v2823 = vpack.c.bf16 %v2786, %v2785
        %v2824 = vpack.c.bf16 %v2788, %v2787
        %v2825 = vpack.c.bf16 %v2790, %v2789
        %v2826 = vpack.c.bf16 %v2792, %v2791
        %v2827 = vpack.c.bf16 %v2794, %v2793
        %v2828 = vpack.c.bf16 %v2796, %v2795
        %2861 = vrot.lane.b32.xlu0 %v2317, 8
        %v2862 = vpop.permute.xlu0 %2861
        %2863 = vrot.lane.b32.xlu0 %v2318, 8
        %v2864 = vpop.permute.xlu0 %2863
        %2865 = vrot.lane.b32.xlu0 %v2319, 8
        %v2866 = vpop.permute.xlu0 %2865
        %2867 = vrot.lane.b32.xlu0 %v2320, 8
        %v2868 = vpop.permute.xlu0 %2867
        %2869 = vrot.lane.b32.xlu0 %v2321, 8
        %v2870 = vpop.permute.xlu0 %2869
        %2871 = vrot.lane.b32.xlu0 %v2322, 8
        %v2872 = vpop.permute.xlu0 %2871
        %2873 = vrot.lane.b32.xlu0 %v2323, 8
        %v2874 = vpop.permute.xlu0 %2873
        %2875 = vrot.lane.b32.xlu0 %v2324, 8
        %v2876 = vpop.permute.xlu0 %2875
        %2877 = vrot.lane.b32.xlu0 %v2325, 8
        %v2878 = vpop.permute.xlu0 %2877
        %2879 = vrot.lane.b32.xlu0 %v2326, 8
        %v2880 = vpop.permute.xlu0 %2879
        %2881 = vrot.lane.b32.xlu0 %v2327, 8
        %v2882 = vpop.permute.xlu0 %2881
        %2883 = vrot.lane.b32.xlu0 %v2328, 8
        %v2884 = vpop.permute.xlu0 %2883
        %2885 = vrot.lane.b32.xlu0 %v2329, 8
        %v2886 = vpop.permute.xlu0 %2885
        %2887 = vrot.lane.b32.xlu0 %v2330, 8
        %v2888 = vpop.permute.xlu0 %2887
        %2889 = vrot.lane.b32.xlu0 %v2331, 8
        %v2890 = vpop.permute.xlu0 %2889
        %2891 = vrot.lane.b32.xlu0 %v2332, 8
        %v2892 = vpop.permute.xlu0 %2891
        %2893 = vrot.lane.b32.xlu0 %v2333, 8
        %v2894 = vpop.permute.xlu0 %2893
        %2895 = vrot.lane.b32.xlu0 %v2334, 8
        %v2896 = vpop.permute.xlu0 %2895
        %2897 = vrot.lane.b32.xlu0 %v2335, 8
        %v2898 = vpop.permute.xlu0 %2897
        %2899 = vrot.lane.b32.xlu0 %v2336, 8
        %v2900 = vpop.permute.xlu0 %2899
        %2901 = vrot.lane.b32.xlu0 %v2337, 8
        %v2902 = vpop.permute.xlu0 %2901
        %2903 = vrot.lane.b32.xlu0 %v2338, 8
        %v2904 = vpop.permute.xlu0 %2903
        %2905 = vrot.lane.b32.xlu0 %v2339, 8
        %v2906 = vpop.permute.xlu0 %2905
        %2907 = vrot.lane.b32.xlu0 %v2340, 8
        %v2908 = vpop.permute.xlu0 %2907
        %2909 = vrot.lane.b32.xlu0 %v2341, 8
        %v2910 = vpop.permute.xlu0 %2909
        %2911 = vrot.lane.b32.xlu0 %v2342, 8
        %v2912 = vpop.permute.xlu0 %2911
        %2913 = vrot.lane.b32.xlu0 %v2343, 8
        %v2914 = vpop.permute.xlu0 %2913
        %2915 = vrot.lane.b32.xlu0 %v2344, 8
        %v2916 = vpop.permute.xlu0 %2915
        %2917 = vrot.lane.b32.xlu0 %v2345, 8
        %v2918 = vpop.permute.xlu0 %2917
        %2919 = vrot.lane.b32.xlu0 %v2346, 8
        %v2920 = vpop.permute.xlu0 %2919
        %2921 = vrot.lane.b32.xlu0 %v2347, 8
        %v2922 = vpop.permute.xlu0 %2921
        %2923 = vrot.lane.b32.xlu0 %v2348, 8
        %v2924 = vpop.permute.xlu0 %2923
        %2957 = vrot.lane.b32.xlu0 %v2797, 30
        %v2958 = vpop.permute.xlu0 %2957
        %2959 = vrot.lane.b32.xlu0 %v2798, 30
        %v2960 = vpop.permute.xlu0 %2959
        %2961 = vrot.lane.b32.xlu0 %v2799, 30
        %v2962 = vpop.permute.xlu0 %2961
        %2963 = vrot.lane.b32.xlu0 %v2800, 30
        %v2964 = vpop.permute.xlu0 %2963
        %2965 = vrot.lane.b32.xlu0 %v2801, 30
        %v2966 = vpop.permute.xlu0 %2965
        %2967 = vrot.lane.b32.xlu0 %v2802, 30
        %v2968 = vpop.permute.xlu0 %2967
        %2969 = vrot.lane.b32.xlu0 %v2803, 30
        %v2970 = vpop.permute.xlu0 %2969
        %2971 = vrot.lane.b32.xlu0 %v2804, 30
        %v2972 = vpop.permute.xlu0 %2971
        %2973 = vrot.lane.b32.xlu0 %v2805, 30
        %v2974 = vpop.permute.xlu0 %2973
        %2975 = vrot.lane.b32.xlu0 %v2806, 30
        %v2976 = vpop.permute.xlu0 %2975
        %2977 = vrot.lane.b32.xlu0 %v2807, 30
        %v2978 = vpop.permute.xlu0 %2977
        %2979 = vrot.lane.b32.xlu0 %v2808, 30
        %v2980 = vpop.permute.xlu0 %2979
        %2981 = vrot.lane.b32.xlu0 %v2809, 30
        %v2982 = vpop.permute.xlu0 %2981
        %2983 = vrot.lane.b32.xlu0 %v2810, 30
        %v2984 = vpop.permute.xlu0 %2983
        %2985 = vrot.lane.b32.xlu0 %v2811, 30
        %v2986 = vpop.permute.xlu0 %2985
        %2987 = vrot.lane.b32.xlu0 %v2812, 30
        %v2988 = vpop.permute.xlu0 %2987
        %2989 = vrot.lane.b32.xlu0 %v2813, 30
        %v2990 = vpop.permute.xlu0 %2989
        %2991 = vrot.lane.b32.xlu0 %v2814, 30
        %v2992 = vpop.permute.xlu0 %2991
        %2993 = vrot.lane.b32.xlu0 %v2815, 30
        %v2994 = vpop.permute.xlu0 %2993
        %2995 = vrot.lane.b32.xlu0 %v2816, 30
        %v2996 = vpop.permute.xlu0 %2995
        %2997 = vrot.lane.b32.xlu0 %v2817, 30
        %v2998 = vpop.permute.xlu0 %2997
        %2999 = vrot.lane.b32.xlu0 %v2818, 30
        %v3000 = vpop.permute.xlu0 %2999
        %3001 = vrot.lane.b32.xlu0 %v2819, 30
        %v3002 = vpop.permute.xlu0 %3001
        %3003 = vrot.lane.b32.xlu0 %v2820, 30
        %v3004 = vpop.permute.xlu0 %3003
        %3005 = vrot.lane.b32.xlu0 %v2821, 30
        %v3006 = vpop.permute.xlu0 %3005
        %3007 = vrot.lane.b32.xlu0 %v2822, 30
        %v3008 = vpop.permute.xlu0 %3007
        %3009 = vrot.lane.b32.xlu0 %v2823, 30
        %v3010 = vpop.permute.xlu0 %3009
        %3011 = vrot.lane.b32.xlu0 %v2824, 30
        %v3012 = vpop.permute.xlu0 %3011
        %3013 = vrot.lane.b32.xlu0 %v2825, 30
        %v3014 = vpop.permute.xlu0 %3013
        %3015 = vrot.lane.b32.xlu0 %v2826, 30
        %v3016 = vpop.permute.xlu0 %3015
        %3017 = vrot.lane.b32.xlu0 %v2827, 30
        %v3018 = vpop.permute.xlu0 %3017
        %3019 = vrot.lane.b32.xlu0 %v2828, 30
        %v3020 = vpop.permute.xlu0 %3019
        %vm3021 = vcmask 64512
        %v3024 = vsel %vm3021, %v2285, %v2862
        %v3027 = vsel %vm3021, %v2286, %v2864
        %v3030 = vsel %vm3021, %v2287, %v2866
        %v3033 = vsel %vm3021, %v2288, %v2868
        %v3036 = vsel %vm3021, %v2289, %v2870
        %v3039 = vsel %vm3021, %v2290, %v2872
        %v3042 = vsel %vm3021, %v2291, %v2874
        %v3045 = vsel %vm3021, %v2292, %v2876
        %v3048 = vsel %vm3021, %v2293, %v2878
        %v3051 = vsel %vm3021, %v2294, %v2880
        %v3054 = vsel %vm3021, %v2295, %v2882
        %v3057 = vsel %vm3021, %v2296, %v2884
        %v3060 = vsel %vm3021, %v2297, %v2886
        %v3063 = vsel %vm3021, %v2298, %v2888
        %v3066 = vsel %vm3021, %v2299, %v2890
        %v3069 = vsel %vm3021, %v2300, %v2892
        %v3072 = vsel %vm3021, %v2301, %v2894
        %v3075 = vsel %vm3021, %v2302, %v2896
        %v3078 = vsel %vm3021, %v2303, %v2898
        %v3081 = vsel %vm3021, %v2304, %v2900
        %v3084 = vsel %vm3021, %v2305, %v2902
        %v3087 = vsel %vm3021, %v2306, %v2904
        %v3090 = vsel %vm3021, %v2307, %v2906
        %v3093 = vsel %vm3021, %v2308, %v2908
        %v3096 = vsel %vm3021, %v2309, %v2910
        %v3099 = vsel %vm3021, %v2310, %v2912
        %v3102 = vsel %vm3021, %v2311, %v2914
        %v3105 = vsel %vm3021, %v2312, %v2916
        %v3108 = vsel %vm3021, %v2313, %v2918
        %v3111 = vsel %vm3021, %v2314, %v2920
        %v3114 = vsel %vm3021, %v2315, %v2922
        %v3117 = vsel %vm3021, %v2316, %v2924
        %vm3118 = vcmask 244736
        %v3120 = vsel %vm3118, %v3024, %v2958
        %v3122 = vsel %vm3118, %v3027, %v2960
        %v3124 = vsel %vm3118, %v3030, %v2962
        %v3126 = vsel %vm3118, %v3033, %v2964
        %v3128 = vsel %vm3118, %v3036, %v2966
        %v3130 = vsel %vm3118, %v3039, %v2968
        %v3132 = vsel %vm3118, %v3042, %v2970
        %v3134 = vsel %vm3118, %v3045, %v2972
        %v3136 = vsel %vm3118, %v3048, %v2974
        %v3138 = vsel %vm3118, %v3051, %v2976
        %v3140 = vsel %vm3118, %v3054, %v2978
        %v3142 = vsel %vm3118, %v3057, %v2980
        %v3144 = vsel %vm3118, %v3060, %v2982
        %v3146 = vsel %vm3118, %v3063, %v2984
        %v3148 = vsel %vm3118, %v3066, %v2986
        %v3150 = vsel %vm3118, %v3069, %v2988
        %v3152 = vsel %vm3118, %v3072, %v2990
        %v3154 = vsel %vm3118, %v3075, %v2992
        %v3156 = vsel %vm3118, %v3078, %v2994
        %v3158 = vsel %vm3118, %v3081, %v2996
        %v3160 = vsel %vm3118, %v3084, %v2998
        %v3162 = vsel %vm3118, %v3087, %v3000
        %v3164 = vsel %vm3118, %v3090, %v3002
        %v3166 = vsel %vm3118, %v3093, %v3004
        %v3168 = vsel %vm3118, %v3096, %v3006
        %v3170 = vsel %vm3118, %v3099, %v3008
        %v3172 = vsel %vm3118, %v3102, %v3010
        %v3174 = vsel %vm3118, %v3105, %v3012
        %v3176 = vsel %vm3118, %v3108, %v3014
        %v3178 = vsel %vm3118, %v3111, %v3016
        %v3180 = vsel %vm3118, %v3114, %v3018
        %v3182 = vsel %vm3118, %v3117, %v3020
        %vm3183 = vcmask 252928
        %v3185 = vsel %vm3183, %v3120, 0
        %v3186 = vsel %vm3183, %v3122, 0
        %v3187 = vsel %vm3183, %v3124, 0
        %v3188 = vsel %vm3183, %v3126, 0
        %v3189 = vsel %vm3183, %v3128, 0
        %v3190 = vsel %vm3183, %v3130, 0
        %v3191 = vsel %vm3183, %v3132, 0
        %v3192 = vsel %vm3183, %v3134, 0
        %v3193 = vsel %vm3183, %v3136, 0
        %v3194 = vsel %vm3183, %v3138, 0
        %v3195 = vsel %vm3183, %v3140, 0
        %v3196 = vsel %vm3183, %v3142, 0
        %v3197 = vsel %vm3183, %v3144, 0
        %v3198 = vsel %vm3183, %v3146, 0
        %v3199 = vsel %vm3183, %v3148, 0
        %v3200 = vsel %vm3183, %v3150, 0
        %v3201 = vsel %vm3183, %v3152, 0
        %v3202 = vsel %vm3183, %v3154, 0
        %v3203 = vsel %vm3183, %v3156, 0
        %v3204 = vsel %vm3183, %v3158, 0
        %v3205 = vsel %vm3183, %v3160, 0
        %v3206 = vsel %vm3183, %v3162, 0
        %v3207 = vsel %vm3183, %v3164, 0
        %v3208 = vsel %vm3183, %v3166, 0
        %v3209 = vsel %vm3183, %v3168, 0
        %v3210 = vsel %vm3183, %v3170, 0
        %v3211 = vsel %vm3183, %v3172, 0
        %v3212 = vsel %vm3183, %v3174, 0
        %v3213 = vsel %vm3183, %v3176, 0
        %v3214 = vsel %vm3183, %v3178, 0
        %v3215 = vsel %vm3183, %v3180, 0
        %v3216 = vsel %vm3183, %v3182, 0
        %v3249 = vunpack.c.l.b16 %v3185
        %v3250 = vunpack.c.h.b16 %v3185
        %v3251 = vunpack.c.l.b16 %v3186
        %v3252 = vunpack.c.h.b16 %v3186
        %v3253 = vunpack.c.l.b16 %v3187
        %v3254 = vunpack.c.h.b16 %v3187
        %v3255 = vunpack.c.l.b16 %v3188
        %v3256 = vunpack.c.h.b16 %v3188
        %v3257 = vunpack.c.l.b16 %v3189
        %v3258 = vunpack.c.h.b16 %v3189
        %v3259 = vunpack.c.l.b16 %v3190
        %v3260 = vunpack.c.h.b16 %v3190
        %v3261 = vunpack.c.l.b16 %v3191
        %v3262 = vunpack.c.h.b16 %v3191
        %v3263 = vunpack.c.l.b16 %v3192
        %v3264 = vunpack.c.h.b16 %v3192
        %v3265 = vunpack.c.l.b16 %v3193
        %v3266 = vunpack.c.h.b16 %v3193
        %v3267 = vunpack.c.l.b16 %v3194
        %v3268 = vunpack.c.h.b16 %v3194
        %v3269 = vunpack.c.l.b16 %v3195
        %v3270 = vunpack.c.h.b16 %v3195
        %v3271 = vunpack.c.l.b16 %v3196
        %v3272 = vunpack.c.h.b16 %v3196
        %v3273 = vunpack.c.l.b16 %v3197
        %v3274 = vunpack.c.h.b16 %v3197
        %v3275 = vunpack.c.l.b16 %v3198
        %v3276 = vunpack.c.h.b16 %v3198
        %v3277 = vunpack.c.l.b16 %v3199
        %v3278 = vunpack.c.h.b16 %v3199
        %v3279 = vunpack.c.l.b16 %v3200
        %v3280 = vunpack.c.h.b16 %v3200
        %v3281 = vunpack.c.l.b16 %v3201
        %v3282 = vunpack.c.h.b16 %v3201
        %v3283 = vunpack.c.l.b16 %v3202
        %v3284 = vunpack.c.h.b16 %v3202
        %v3285 = vunpack.c.l.b16 %v3203
        %v3286 = vunpack.c.h.b16 %v3203
        %v3287 = vunpack.c.l.b16 %v3204
        %v3288 = vunpack.c.h.b16 %v3204
        %v3289 = vunpack.c.l.b16 %v3205
        %v3290 = vunpack.c.h.b16 %v3205
        %v3291 = vunpack.c.l.b16 %v3206
        %v3292 = vunpack.c.h.b16 %v3206
        %v3293 = vunpack.c.l.b16 %v3207
        %v3294 = vunpack.c.h.b16 %v3207
        %v3295 = vunpack.c.l.b16 %v3208
        %v3296 = vunpack.c.h.b16 %v3208
        %v3297 = vunpack.c.l.b16 %v3209
        %v3298 = vunpack.c.h.b16 %v3209
        %v3299 = vunpack.c.l.b16 %v3210
        %v3300 = vunpack.c.h.b16 %v3210
        %v3301 = vunpack.c.l.b16 %v3211
        %v3302 = vunpack.c.h.b16 %v3211
        %v3303 = vunpack.c.l.b16 %v3212
        %v3304 = vunpack.c.h.b16 %v3212
        %v3305 = vunpack.c.l.b16 %v3213
        %v3306 = vunpack.c.h.b16 %v3213
        %v3307 = vunpack.c.l.b16 %v3214
        %v3308 = vunpack.c.h.b16 %v3214
        %v3309 = vunpack.c.l.b16 %v3215
        %v3310 = vunpack.c.h.b16 %v3215
        %v3311 = vunpack.c.l.b16 %v3216
        %v3312 = vunpack.c.h.b16 %v3216
        %v3313 = vpack.c.b16 %v3249, %v3249
        %v3314 = vpack.c.b16 %v3250, %v3250
        %v3315 = vpack.c.b16 %v3251, %v3251
        %v3316 = vpack.c.b16 %v3252, %v3252
        %v3317 = vpack.c.b16 %v3253, %v3253
        %v3318 = vpack.c.b16 %v3254, %v3254
        %v3319 = vpack.c.b16 %v3255, %v3255
        %v3320 = vpack.c.b16 %v3256, %v3256
        %v3321 = vpack.c.b16 %v3257, %v3257
        %v3322 = vpack.c.b16 %v3258, %v3258
        %v3323 = vpack.c.b16 %v3259, %v3259
        %v3324 = vpack.c.b16 %v3260, %v3260
        %v3325 = vpack.c.b16 %v3261, %v3261
        %v3326 = vpack.c.b16 %v3262, %v3262
        %v3327 = vpack.c.b16 %v3263, %v3263
        %v3328 = vpack.c.b16 %v3264, %v3264
        %v3329 = vpack.c.b16 %v3265, %v3265
        %v3330 = vpack.c.b16 %v3266, %v3266
        %v3331 = vpack.c.b16 %v3267, %v3267
        %v3332 = vpack.c.b16 %v3268, %v3268
        %v3333 = vpack.c.b16 %v3269, %v3269
        %v3334 = vpack.c.b16 %v3270, %v3270
        %v3335 = vpack.c.b16 %v3271, %v3271
        %v3336 = vpack.c.b16 %v3272, %v3272
        %v3337 = vpack.c.b16 %v3273, %v3273
        %v3338 = vpack.c.b16 %v3274, %v3274
        %v3339 = vpack.c.b16 %v3275, %v3275
        %v3340 = vpack.c.b16 %v3276, %v3276
        %v3341 = vpack.c.b16 %v3277, %v3277
        %v3342 = vpack.c.b16 %v3278, %v3278
        %v3343 = vpack.c.b16 %v3279, %v3279
        %v3344 = vpack.c.b16 %v3280, %v3280
        %v3345 = vpack.c.b16 %v3281, %v3281
        %v3346 = vpack.c.b16 %v3282, %v3282
        %v3347 = vpack.c.b16 %v3283, %v3283
        %v3348 = vpack.c.b16 %v3284, %v3284
        %v3349 = vpack.c.b16 %v3285, %v3285
        %v3350 = vpack.c.b16 %v3286, %v3286
        %v3351 = vpack.c.b16 %v3287, %v3287
        %v3352 = vpack.c.b16 %v3288, %v3288
        %v3353 = vpack.c.b16 %v3289, %v3289
        %v3354 = vpack.c.b16 %v3290, %v3290
        %v3355 = vpack.c.b16 %v3291, %v3291
        %v3356 = vpack.c.b16 %v3292, %v3292
        %v3357 = vpack.c.b16 %v3293, %v3293
        %v3358 = vpack.c.b16 %v3294, %v3294
        %v3359 = vpack.c.b16 %v3295, %v3295
        %v3360 = vpack.c.b16 %v3296, %v3296
        %v3361 = vpack.c.b16 %v3297, %v3297
        %v3362 = vpack.c.b16 %v3298, %v3298
        %v3363 = vpack.c.b16 %v3299, %v3299
        %v3364 = vpack.c.b16 %v3300, %v3300
        %v3365 = vpack.c.b16 %v3301, %v3301
        %v3366 = vpack.c.b16 %v3302, %v3302
        %v3367 = vpack.c.b16 %v3303, %v3303
        %v3368 = vpack.c.b16 %v3304, %v3304
        %v3369 = vpack.c.b16 %v3305, %v3305
        %v3370 = vpack.c.b16 %v3306, %v3306
        %v3371 = vpack.c.b16 %v3307, %v3307
        %v3372 = vpack.c.b16 %v3308, %v3308
        %v3373 = vpack.c.b16 %v3309, %v3309
        %v3374 = vpack.c.b16 %v3310, %v3310
        %v3375 = vpack.c.b16 %v3311, %v3311
        %v3376 = vpack.c.b16 %v3312, %v3312
        %vm3441 = vcmask 257024
        %3442 = vst.msk [vmem:[%s254] sm:$0xf] %vm3441, %v3313
        %3443 = vst.msk [vmem:[%s254 + $0x4] sm:$0xf] %vm3441, %v3314
        %3444 = vst.msk [vmem:[%s254 + $0x8] sm:$0xf] %vm3441, %v3315
        %3445 = vst.msk [vmem:[%s254 + $0xc] sm:$0xf] %vm3441, %v3316
        %3446 = vst.msk [vmem:[%s254 + $0x10] sm:$0xf] %vm3441, %v3317
        %3447 = vst.msk [vmem:[%s254 + $0x14] sm:$0xf] %vm3441, %v3318
        %3448 = vst.msk [vmem:[%s254 + $0x18] sm:$0xf] %vm3441, %v3319
        %3449 = vst.msk [vmem:[%s254 + $0x1c] sm:$0xf] %vm3441, %v3320
        %3450 = vst.msk [vmem:[%s254 + $0x20] sm:$0xf] %vm3441, %v3321
        %3451 = vst.msk [vmem:[%s254 + $0x24] sm:$0xf] %vm3441, %v3322
        %3452 = vst.msk [vmem:[%s254 + $0x28] sm:$0xf] %vm3441, %v3323
        %3453 = vst.msk [vmem:[%s254 + $0x2c] sm:$0xf] %vm3441, %v3324
        %3454 = vst.msk [vmem:[%s254 + $0x30] sm:$0xf] %vm3441, %v3325
        %3455 = vst.msk [vmem:[%s254 + $0x34] sm:$0xf] %vm3441, %v3326
        %3456 = vst.msk [vmem:[%s254 + $0x38] sm:$0xf] %vm3441, %v3327
        %3457 = vst.msk [vmem:[%s254 + $0x3c] sm:$0xf] %vm3441, %v3328
        %3458 = vst.msk [vmem:[%s254 + $0x40] sm:$0xf] %vm3441, %v3329
        %3459 = vst.msk [vmem:[%s254 + $0x44] sm:$0xf] %vm3441, %v3330
        %3460 = vst.msk [vmem:[%s254 + $0x48] sm:$0xf] %vm3441, %v3331
        %3461 = vst.msk [vmem:[%s254 + $0x4c] sm:$0xf] %vm3441, %v3332
        %3462 = vst.msk [vmem:[%s254 + $0x50] sm:$0xf] %vm3441, %v3333
        %3463 = vst.msk [vmem:[%s254 + $0x54] sm:$0xf] %vm3441, %v3334
        %3464 = vst.msk [vmem:[%s254 + $0x58] sm:$0xf] %vm3441, %v3335
        %3465 = vst.msk [vmem:[%s254 + $0x5c] sm:$0xf] %vm3441, %v3336
        %3466 = vst.msk [vmem:[%s254 + $0x60] sm:$0xf] %vm3441, %v3337
        %3467 = vst.msk [vmem:[%s254 + $0x64] sm:$0xf] %vm3441, %v3338
        %3468 = vst.msk [vmem:[%s254 + $0x68] sm:$0xf] %vm3441, %v3339
        %3469 = vst.msk [vmem:[%s254 + $0x6c] sm:$0xf] %vm3441, %v3340
        %3470 = vst.msk [vmem:[%s254 + $0x70] sm:$0xf] %vm3441, %v3341
        %3471 = vst.msk [vmem:[%s254 + $0x74] sm:$0xf] %vm3441, %v3342
        %3472 = vst.msk [vmem:[%s254 + $0x78] sm:$0xf] %vm3441, %v3343
        %3473 = vst.msk [vmem:[%s254 + $0x7c] sm:$0xf] %vm3441, %v3344
        %3474 = vst.msk [vmem:[%s254 + $0x80] sm:$0xf] %vm3441, %v3345
        %3475 = vst.msk [vmem:[%s254 + $0x84] sm:$0xf] %vm3441, %v3346
        %3476 = vst.msk [vmem:[%s254 + $0x88] sm:$0xf] %vm3441, %v3347
        %3477 = vst.msk [vmem:[%s254 + $0x8c] sm:$0xf] %vm3441, %v3348
        %3478 = vst.msk [vmem:[%s254 + $0x90] sm:$0xf] %vm3441, %v3349
        %3479 = vst.msk [vmem:[%s254 + $0x94] sm:$0xf] %vm3441, %v3350
        %3480 = vst.msk [vmem:[%s254 + $0x98] sm:$0xf] %vm3441, %v3351
        %3481 = vst.msk [vmem:[%s254 + $0x9c] sm:$0xf] %vm3441, %v3352
        %3482 = vst.msk [vmem:[%s254 + $0xa0] sm:$0xf] %vm3441, %v3353
        %3483 = vst.msk [vmem:[%s254 + $0xa4] sm:$0xf] %vm3441, %v3354
        %3484 = vst.msk [vmem:[%s254 + $0xa8] sm:$0xf] %vm3441, %v3355
        %3485 = vst.msk [vmem:[%s254 + $0xac] sm:$0xf] %vm3441, %v3356
        %3486 = vst.msk [vmem:[%s254 + $0xb0] sm:$0xf] %vm3441, %v3357
        %3487 = vst.msk [vmem:[%s254 + $0xb4] sm:$0xf] %vm3441, %v3358
        %3488 = vst.msk [vmem:[%s254 + $0xb8] sm:$0xf] %vm3441, %v3359
        %3489 = vst.msk [vmem:[%s254 + $0xbc] sm:$0xf] %vm3441, %v3360
        %3490 = vst.msk [vmem:[%s254 + $0xc0] sm:$0xf] %vm3441, %v3361
        %3491 = vst.msk [vmem:[%s254 + $0xc4] sm:$0xf] %vm3441, %v3362
        %3492 = vst.msk [vmem:[%s254 + $0xc8] sm:$0xf] %vm3441, %v3363
        %3493 = vst.msk [vmem:[%s254 + $0xcc] sm:$0xf] %vm3441, %v3364
        %3494 = vst.msk [vmem:[%s254 + $0xd0] sm:$0xf] %vm3441, %v3365
        %3495 = vst.msk [vmem:[%s254 + $0xd4] sm:$0xf] %vm3441, %v3366
        %3496 = vst.msk [vmem:[%s254 + $0xd8] sm:$0xf] %vm3441, %v3367
        %3497 = vst.msk [vmem:[%s254 + $0xdc] sm:$0xf] %vm3441, %v3368
        %3498 = vst.msk [vmem:[%s254 + $0xe0] sm:$0xf] %vm3441, %v3369
        %3499 = vst.msk [vmem:[%s254 + $0xe4] sm:$0xf] %vm3441, %v3370
        %3500 = vst.msk [vmem:[%s254 + $0xe8] sm:$0xf] %vm3441, %v3371
        %3501 = vst.msk [vmem:[%s254 + $0xec] sm:$0xf] %vm3441, %v3372
        %3502 = vst.msk [vmem:[%s254 + $0xf0] sm:$0xf] %vm3441, %v3373
        %3503 = vst.msk [vmem:[%s254 + $0xf4] sm:$0xf] %vm3441, %v3374
        %3504 = vst.msk [vmem:[%s254 + $0xf8] sm:$0xf] %vm3441, %v3375
        %3505 = vst.msk [vmem:[%s254 + $0xfc] sm:$0xf] %vm3441, %v3376
        %s3506 = sand.u32 %s139, 1
        %s3507 = sand.u32 %s139, 1
        %s3508 = smul.addr %s3507, 256
        %s3509 = scalar_lea.vmem [#allocation2], %s3508
        // Predicated region
        $region41: #{tpu_custom_call.1} parent=39 // pred_check
          %p3510 = pneg %p149
        $region42: #{tpu_custom_call.1} parent=39 // pred_check_branch
          %3512 = sbr.rel (%p3510) target = $region44
        $region43: #{tpu_custom_call.1} parent=39 // pred_region
          %s3513 = smul.u32 64, %s16
          %s3514 = ssub.s32 125, %s3513
          %p3515 = scmp.lt.s32.totalorder %s3514, 64
          %s3516 = scalar_select %p3515, %s3514, 64
          %s3517 = smul.u32 64, %s3516
          %p3518 = scmp.ne.s32.totalorder 0, %s3517
          %s3519 = smul.addr %s3513, 4
          %s3520 = scalar_lea.vmem %s5, %s3519
          // Predicated region
          $region45: #{tpu_custom_call.1} parent=43 // pred_check
            %p3521 = pneg %p3518
          $region46: #{tpu_custom_call.1} parent=43 // pred_check_branch
            %3523 = sbr.rel (%p3521) target = $region48
          $region47: #{tpu_custom_call.1} parent=43 // pred_region
            // Predicated region
            $region49: #{tpu_custom_call.1} parent=47 // pred_check
              _
            $region50: #{tpu_custom_call.1} parent=47 // pred_check_branch
              %3525 = sbr.rel target = $region52
            $region51: #{tpu_custom_call.1} parent=47 // pred_region
              // Predicated region
              $region71: #{tpu_custom_call.1} parent=51 // pred_check
                _
              $region72: #{tpu_custom_call.1} parent=51 // pred_check_branch
                %3700 = sbr.rel (0) target = $region74
              $region73: #{tpu_custom_call.1} parent=51 // pred_region
                %s3702 = sshrl.u32 %s3516, 6
                // While loop
                $region75: #{tpu_custom_call.1} parent=73 // loop_pre_header
                  _
                $region76: #{tpu_custom_call.1} parent=73 // loop_header
                  %s3704 = sphi 0, %s3706
                  %p3705 = scmp.ge.s32.totalorder %s3704, %s3702
                  %s3709 = sphi 0, %s3842
                  %s3710 = sphi %s3509, %s3845
                  %s3711 = sphi %s3520, %s3846
                $region77: #{tpu_custom_call.1} parent=73 // loop_header_branch
                  %3708 = sbr.rel (%p3705) target = $region81
                $region78: #{tpu_custom_call.1} parent=73 // loop_body
                  %v3712 = vld [vmem:[%s3710] sm:$0xf]
                  %3713 = vst [vmem:[%s3711] sm:$0xf] %v3712
                  %v3714 = vld [vmem:[%s3710 + $0x4] sm:$0xf]
                  %3715 = vst [vmem:[%s3711 + $0x4] sm:$0xf] %v3714
                  %v3716 = vld [vmem:[%s3710 + $0x8] sm:$0xf]
                  %3717 = vst [vmem:[%s3711 + $0x8] sm:$0xf] %v3716
                  %v3718 = vld [vmem:[%s3710 + $0xc] sm:$0xf]
                  %3719 = vst [vmem:[%s3711 + $0xc] sm:$0xf] %v3718
                  %v3720 = vld [vmem:[%s3710 + $0x10] sm:$0xf]
                  %3721 = vst [vmem:[%s3711 + $0x10] sm:$0xf] %v3720
                  %v3722 = vld [vmem:[%s3710 + $0x14] sm:$0xf]
                  %3723 = vst [vmem:[%s3711 + $0x14] sm:$0xf] %v3722
                  %v3724 = vld [vmem:[%s3710 + $0x18] sm:$0xf]
                  %3725 = vst [vmem:[%s3711 + $0x18] sm:$0xf] %v3724
                  %v3726 = vld [vmem:[%s3710 + $0x1c] sm:$0xf]
                  %3727 = vst [vmem:[%s3711 + $0x1c] sm:$0xf] %v3726
                  %v3728 = vld [vmem:[%s3710 + $0x20] sm:$0xf]
                  %3729 = vst [vmem:[%s3711 + $0x20] sm:$0xf] %v3728
                  %v3730 = vld [vmem:[%s3710 + $0x24] sm:$0xf]
                  %3731 = vst [vmem:[%s3711 + $0x24] sm:$0xf] %v3730
                  %v3732 = vld [vmem:[%s3710 + $0x28] sm:$0xf]
                  %3733 = vst [vmem:[%s3711 + $0x28] sm:$0xf] %v3732
                  %v3734 = vld [vmem:[%s3710 + $0x2c] sm:$0xf]
                  %3735 = vst [vmem:[%s3711 + $0x2c] sm:$0xf] %v3734
                  %v3736 = vld [vmem:[%s3710 + $0x30] sm:$0xf]
                  %3737 = vst [vmem:[%s3711 + $0x30] sm:$0xf] %v3736
                  %v3738 = vld [vmem:[%s3710 + $0x34] sm:$0xf]
                  %3739 = vst [vmem:[%s3711 + $0x34] sm:$0xf] %v3738
                  %v3740 = vld [vmem:[%s3710 + $0x38] sm:$0xf]
                  %3741 = vst [vmem:[%s3711 + $0x38] sm:$0xf] %v3740
                  %v3742 = vld [vmem:[%s3710 + $0x3c] sm:$0xf]
                  %3743 = vst [vmem:[%s3711 + $0x3c] sm:$0xf] %v3742
                  %v3744 = vld [vmem:[%s3710 + $0x40] sm:$0xf]
                  %3745 = vst [vmem:[%s3711 + $0x40] sm:$0xf] %v3744
                  %v3746 = vld [vmem:[%s3710 + $0x44] sm:$0xf]
                  %3747 = vst [vmem:[%s3711 + $0x44] sm:$0xf] %v3746
                  %v3748 = vld [vmem:[%s3710 + $0x48] sm:$0xf]
                  %3749 = vst [vmem:[%s3711 + $0x48] sm:$0xf] %v3748
                  %v3750 = vld [vmem:[%s3710 + $0x4c] sm:$0xf]
                  %3751 = vst [vmem:[%s3711 + $0x4c] sm:$0xf] %v3750
                  %v3752 = vld [vmem:[%s3710 + $0x50] sm:$0xf]
                  %3753 = vst [vmem:[%s3711 + $0x50] sm:$0xf] %v3752
                  %v3754 = vld [vmem:[%s3710 + $0x54] sm:$0xf]
                  %3755 = vst [vmem:[%s3711 + $0x54] sm:$0xf] %v3754
                  %v3756 = vld [vmem:[%s3710 + $0x58] sm:$0xf]
                  %3757 = vst [vmem:[%s3711 + $0x58] sm:$0xf] %v3756
                  %v3758 = vld [vmem:[%s3710 + $0x5c] sm:$0xf]
                  %3759 = vst [vmem:[%s3711 + $0x5c] sm:$0xf] %v3758
                  %v3760 = vld [vmem:[%s3710 + $0x60] sm:$0xf]
                  %3761 = vst [vmem:[%s3711 + $0x60] sm:$0xf] %v3760
                  %v3762 = vld [vmem:[%s3710 + $0x64] sm:$0xf]
                  %3763 = vst [vmem:[%s3711 + $0x64] sm:$0xf] %v3762
                  %v3764 = vld [vmem:[%s3710 + $0x68] sm:$0xf]
                  %3765 = vst [vmem:[%s3711 + $0x68] sm:$0xf] %v3764
                  %v3766 = vld [vmem:[%s3710 + $0x6c] sm:$0xf]
                  %3767 = vst [vmem:[%s3711 + $0x6c] sm:$0xf] %v3766
                  %v3768 = vld [vmem:[%s3710 + $0x70] sm:$0xf]
                  %3769 = vst [vmem:[%s3711 + $0x70] sm:$0xf] %v3768
                  %v3770 = vld [vmem:[%s3710 + $0x74] sm:$0xf]
                  %3771 = vst [vmem:[%s3711 + $0x74] sm:$0xf] %v3770
                  %v3772 = vld [vmem:[%s3710 + $0x78] sm:$0xf]
                  %3773 = vst [vmem:[%s3711 + $0x78] sm:$0xf] %v3772
                  %v3774 = vld [vmem:[%s3710 + $0x7c] sm:$0xf]
                  %3775 = vst [vmem:[%s3711 + $0x7c] sm:$0xf] %v3774
                  %v3776 = vld [vmem:[%s3710 + $0x80] sm:$0xf]
                  %3777 = vst [vmem:[%s3711 + $0x80] sm:$0xf] %v3776
                  %v3778 = vld [vmem:[%s3710 + $0x84] sm:$0xf]
                  %3779 = vst [vmem:[%s3711 + $0x84] sm:$0xf] %v3778
                  %v3780 = vld [vmem:[%s3710 + $0x88] sm:$0xf]
                  %3781 = vst [vmem:[%s3711 + $0x88] sm:$0xf] %v3780
                  %v3782 = vld [vmem:[%s3710 + $0x8c] sm:$0xf]
                  %3783 = vst [vmem:[%s3711 + $0x8c] sm:$0xf] %v3782
                  %v3784 = vld [vmem:[%s3710 + $0x90] sm:$0xf]
                  %3785 = vst [vmem:[%s3711 + $0x90] sm:$0xf] %v3784
                  %v3786 = vld [vmem:[%s3710 + $0x94] sm:$0xf]
                  %3787 = vst [vmem:[%s3711 + $0x94] sm:$0xf] %v3786
                  %v3788 = vld [vmem:[%s3710 + $0x98] sm:$0xf]
                  %3789 = vst [vmem:[%s3711 + $0x98] sm:$0xf] %v3788
                  %v3790 = vld [vmem:[%s3710 + $0x9c] sm:$0xf]
                  %3791 = vst [vmem:[%s3711 + $0x9c] sm:$0xf] %v3790
                  %v3792 = vld [vmem:[%s3710 + $0xa0] sm:$0xf]
                  %3793 = vst [vmem:[%s3711 + $0xa0] sm:$0xf] %v3792
                  %v3794 = vld [vmem:[%s3710 + $0xa4] sm:$0xf]
                  %3795 = vst [vmem:[%s3711 + $0xa4] sm:$0xf] %v3794
                  %v3796 = vld [vmem:[%s3710 + $0xa8] sm:$0xf]
                  %3797 = vst [vmem:[%s3711 + $0xa8] sm:$0xf] %v3796
                  %v3798 = vld [vmem:[%s3710 + $0xac] sm:$0xf]
                  %3799 = vst [vmem:[%s3711 + $0xac] sm:$0xf] %v3798
                  %v3800 = vld [vmem:[%s3710 + $0xb0] sm:$0xf]
                  %3801 = vst [vmem:[%s3711 + $0xb0] sm:$0xf] %v3800
                  %v3802 = vld [vmem:[%s3710 + $0xb4] sm:$0xf]
                  %3803 = vst [vmem:[%s3711 + $0xb4] sm:$0xf] %v3802
                  %v3804 = vld [vmem:[%s3710 + $0xb8] sm:$0xf]
                  %3805 = vst [vmem:[%s3711 + $0xb8] sm:$0xf] %v3804
                  %v3806 = vld [vmem:[%s3710 + $0xbc] sm:$0xf]
                  %3807 = vst [vmem:[%s3711 + $0xbc] sm:$0xf] %v3806
                  %v3808 = vld [vmem:[%s3710 + $0xc0] sm:$0xf]
                  %3809 = vst [vmem:[%s3711 + $0xc0] sm:$0xf] %v3808
                  %v3810 = vld [vmem:[%s3710 + $0xc4] sm:$0xf]
                  %3811 = vst [vmem:[%s3711 + $0xc4] sm:$0xf] %v3810
                  %v3812 = vld [vmem:[%s3710 + $0xc8] sm:$0xf]
                  %3813 = vst [vmem:[%s3711 + $0xc8] sm:$0xf] %v3812
                  %v3814 = vld [vmem:[%s3710 + $0xcc] sm:$0xf]
                  %3815 = vst [vmem:[%s3711 + $0xcc] sm:$0xf] %v3814
                  %v3816 = vld [vmem:[%s3710 + $0xd0] sm:$0xf]
                  %3817 = vst [vmem:[%s3711 + $0xd0] sm:$0xf] %v3816
                  %v3818 = vld [vmem:[%s3710 + $0xd4] sm:$0xf]
                  %3819 = vst [vmem:[%s3711 + $0xd4] sm:$0xf] %v3818
                  %v3820 = vld [vmem:[%s3710 + $0xd8] sm:$0xf]
                  %3821 = vst [vmem:[%s3711 + $0xd8] sm:$0xf] %v3820
                  %v3822 = vld [vmem:[%s3710 + $0xdc] sm:$0xf]
                  %3823 = vst [vmem:[%s3711 + $0xdc] sm:$0xf] %v3822
                  %v3824 = vld [vmem:[%s3710 + $0xe0] sm:$0xf]
                  %3825 = vst [vmem:[%s3711 + $0xe0] sm:$0xf] %v3824
                  %v3826 = vld [vmem:[%s3710 + $0xe4] sm:$0xf]
                  %3827 = vst [vmem:[%s3711 + $0xe4] sm:$0xf] %v3826
                  %v3828 = vld [vmem:[%s3710 + $0xe8] sm:$0xf]
                  %3829 = vst [vmem:[%s3711 + $0xe8] sm:$0xf] %v3828
                  %v3830 = vld [vmem:[%s3710 + $0xec] sm:$0xf]
                  %3831 = vst [vmem:[%s3711 + $0xec] sm:$0xf] %v3830
                  %v3832 = vld [vmem:[%s3710 + $0xf0] sm:$0xf]
                  %3833 = vst [vmem:[%s3711 + $0xf0] sm:$0xf] %v3832
                  %v3834 = vld [vmem:[%s3710 + $0xf4] sm:$0xf]
                  %3835 = vst [vmem:[%s3711 + $0xf4] sm:$0xf] %v3834
                  %v3836 = vld [vmem:[%s3710 + $0xf8] sm:$0xf]
                  %3837 = vst [vmem:[%s3711 + $0xf8] sm:$0xf] %v3836
                  %v3838 = vld [vmem:[%s3710 + $0xfc] sm:$0xf]
                  %3839 = vst [vmem:[%s3711 + $0xfc] sm:$0xf] %v3838
                  %s3840 = sadd.s32 1, %s3709
                  %p3841 = scmp.ge.s32.totalorder %s3840, %s3702
                  %s3842 = scalar_select %p3841, 0, %s3840
                  %s3843 = smul.u32 %s3842, 256
                  %s3844 = smul.u32 %s3842, 256
                  %s3845 = scalar_lea.vmem %s3509, %s3843 [#allocation2]
                  %s3846 = scalar_lea.vmem %s3520, %s3844
                $region79: #{tpu_custom_call.1} parent=73 // loop_footer
                  %s3706 = sadd.s32 %s3704, 1
                $region80: #{tpu_custom_call.1} parent=73 // loop_footer_branch
                  %3703 = sbr.rel target = $region76
                $region81: #{tpu_custom_call.1} parent=73 // loop_exit
                  _
                %s3847 = sshrl.u32 %s3516, 6
                %s3848 = sand.u32 %s3516, 63
                %s3849 = smul.u32 %s3847, 64
                %s3850 = smul.u32 4, %s3849
                %s3851 = scalar_lea.vmem %s3509, %s3850 [#allocation2]
                %s3852 = smul.u32 4, %s3849
                %s3853 = scalar_lea.vmem %s3520, %s3852
                // While loop
                $region82: #{tpu_custom_call.1} parent=73 // loop_pre_header
                  _
                $region83: #{tpu_custom_call.1} parent=73 // loop_header
                  %s3855 = sphi 0, %s3857
                  %p3856 = scmp.ge.s32.totalorder %s3855, %s3848
                  %s3860 = sphi 0, %s3867
                  %s3861 = sphi %s3851, %s3870
                  %s3862 = sphi %s3853, %s3871
                $region84: #{tpu_custom_call.1} parent=73 // loop_header_branch
                  %3859 = sbr.rel (%p3856) target = $region88
                $region85: #{tpu_custom_call.1} parent=73 // loop_body
                  %v3863 = vld [vmem:[%s3861] sm:$0xf]
                  %3864 = vst [vmem:[%s3862] sm:$0xf] %v3863
                  %s3865 = sadd.s32 1, %s3860
                  %p3866 = scmp.ge.s32.totalorder %s3865, %s3848
                  %s3867 = scalar_select %p3866, 0, %s3865
                  %s3868 = smul.u32 %s3867, 4
                  %s3869 = smul.u32 %s3867, 4
                  %s3870 = scalar_lea.vmem %s3851, %s3868 [#allocation2]
                  %s3871 = scalar_lea.vmem %s3853, %s3869
                $region86: #{tpu_custom_call.1} parent=73 // loop_footer
                  %s3857 = sadd.s32 %s3855, 1
                $region87: #{tpu_custom_call.1} parent=73 // loop_footer_branch
                  %3854 = sbr.rel target = $region83
                $region88: #{tpu_custom_call.1} parent=73 // loop_exit
                  _
              $region74: #{tpu_custom_call.1} parent=51 // pred_fallthru
                _
            $region52: #{tpu_custom_call.1} parent=47 // pred_fallthru
              _
            // Predicated region
            $region53: #{tpu_custom_call.1} parent=47 // pred_check
              _
            $region54: #{tpu_custom_call.1} parent=47 // pred_check_branch
              %3527 = sbr.rel (0) target = $region56
            $region55: #{tpu_custom_call.1} parent=47 // pred_region
              %s3529 = sshrl.u32 %s3516, 6
              // While loop
              $region57: #{tpu_custom_call.1} parent=55 // loop_pre_header
                _
              $region58: #{tpu_custom_call.1} parent=55 // loop_header
                %s3531 = sphi 0, %s3533
                %p3532 = scmp.ge.s32.totalorder %s3531, %s3529
                %s3536 = sphi 0, %s3669
                %s3537 = sphi %s3509, %s3672
                %s3538 = sphi %s3520, %s3673
              $region59: #{tpu_custom_call.1} parent=55 // loop_header_branch
                %3535 = sbr.rel (%p3532) target = $region63
              $region60: #{tpu_custom_call.1} parent=55 // loop_body
                %v3539 = vld [vmem:[%s3537] sm:$0xf]
                %3540 = vst [vmem:[%s3538] sm:$0xf] %v3539
                %v3541 = vld [vmem:[%s3537 + $0x4] sm:$0xf]
                %3542 = vst [vmem:[%s3538 + $0x4] sm:$0xf] %v3541
                %v3543 = vld [vmem:[%s3537 + $0x8] sm:$0xf]
                %3544 = vst [vmem:[%s3538 + $0x8] sm:$0xf] %v3543
                %v3545 = vld [vmem:[%s3537 + $0xc] sm:$0xf]
                %3546 = vst [vmem:[%s3538 + $0xc] sm:$0xf] %v3545
                %v3547 = vld [vmem:[%s3537 + $0x10] sm:$0xf]
                %3548 = vst [vmem:[%s3538 + $0x10] sm:$0xf] %v3547
                %v3549 = vld [vmem:[%s3537 + $0x14] sm:$0xf]
                %3550 = vst [vmem:[%s3538 + $0x14] sm:$0xf] %v3549
                %v3551 = vld [vmem:[%s3537 + $0x18] sm:$0xf]
                %3552 = vst [vmem:[%s3538 + $0x18] sm:$0xf] %v3551
                %v3553 = vld [vmem:[%s3537 + $0x1c] sm:$0xf]
                %3554 = vst [vmem:[%s3538 + $0x1c] sm:$0xf] %v3553
                %v3555 = vld [vmem:[%s3537 + $0x20] sm:$0xf]
                %3556 = vst [vmem:[%s3538 + $0x20] sm:$0xf] %v3555
                %v3557 = vld [vmem:[%s3537 + $0x24] sm:$0xf]
                %3558 = vst [vmem:[%s3538 + $0x24] sm:$0xf] %v3557
                %v3559 = vld [vmem:[%s3537 + $0x28] sm:$0xf]
                %3560 = vst [vmem:[%s3538 + $0x28] sm:$0xf] %v3559
                %v3561 = vld [vmem:[%s3537 + $0x2c] sm:$0xf]
                %3562 = vst [vmem:[%s3538 + $0x2c] sm:$0xf] %v3561
                %v3563 = vld [vmem:[%s3537 + $0x30] sm:$0xf]
                %3564 = vst [vmem:[%s3538 + $0x30] sm:$0xf] %v3563
                %v3565 = vld [vmem:[%s3537 + $0x34] sm:$0xf]
                %3566 = vst [vmem:[%s3538 + $0x34] sm:$0xf] %v3565
                %v3567 = vld [vmem:[%s3537 + $0x38] sm:$0xf]
                %3568 = vst [vmem:[%s3538 + $0x38] sm:$0xf] %v3567
                %v3569 = vld [vmem:[%s3537 + $0x3c] sm:$0xf]
                %3570 = vst [vmem:[%s3538 + $0x3c] sm:$0xf] %v3569
                %v3571 = vld [vmem:[%s3537 + $0x40] sm:$0xf]
                %3572 = vst [vmem:[%s3538 + $0x40] sm:$0xf] %v3571
                %v3573 = vld [vmem:[%s3537 + $0x44] sm:$0xf]
                %3574 = vst [vmem:[%s3538 + $0x44] sm:$0xf] %v3573
                %v3575 = vld [vmem:[%s3537 + $0x48] sm:$0xf]
                %3576 = vst [vmem:[%s3538 + $0x48] sm:$0xf] %v3575
                %v3577 = vld [vmem:[%s3537 + $0x4c] sm:$0xf]
                %3578 = vst [vmem:[%s3538 + $0x4c] sm:$0xf] %v3577
                %v3579 = vld [vmem:[%s3537 + $0x50] sm:$0xf]
                %3580 = vst [vmem:[%s3538 + $0x50] sm:$0xf] %v3579
                %v3581 = vld [vmem:[%s3537 + $0x54] sm:$0xf]
                %3582 = vst [vmem:[%s3538 + $0x54] sm:$0xf] %v3581
                %v3583 = vld [vmem:[%s3537 + $0x58] sm:$0xf]
                %3584 = vst [vmem:[%s3538 + $0x58] sm:$0xf] %v3583
                %v3585 = vld [vmem:[%s3537 + $0x5c] sm:$0xf]
                %3586 = vst [vmem:[%s3538 + $0x5c] sm:$0xf] %v3585
                %v3587 = vld [vmem:[%s3537 + $0x60] sm:$0xf]
                %3588 = vst [vmem:[%s3538 + $0x60] sm:$0xf] %v3587
                %v3589 = vld [vmem:[%s3537 + $0x64] sm:$0xf]
                %3590 = vst [vmem:[%s3538 + $0x64] sm:$0xf] %v3589
                %v3591 = vld [vmem:[%s3537 + $0x68] sm:$0xf]
                %3592 = vst [vmem:[%s3538 + $0x68] sm:$0xf] %v3591
                %v3593 = vld [vmem:[%s3537 + $0x6c] sm:$0xf]
                %3594 = vst [vmem:[%s3538 + $0x6c] sm:$0xf] %v3593
                %v3595 = vld [vmem:[%s3537 + $0x70] sm:$0xf]
                %3596 = vst [vmem:[%s3538 + $0x70] sm:$0xf] %v3595
                %v3597 = vld [vmem:[%s3537 + $0x74] sm:$0xf]
                %3598 = vst [vmem:[%s3538 + $0x74] sm:$0xf] %v3597
                %v3599 = vld [vmem:[%s3537 + $0x78] sm:$0xf]
                %3600 = vst [vmem:[%s3538 + $0x78] sm:$0xf] %v3599
                %v3601 = vld [vmem:[%s3537 + $0x7c] sm:$0xf]
                %3602 = vst [vmem:[%s3538 + $0x7c] sm:$0xf] %v3601
                %v3603 = vld [vmem:[%s3537 + $0x80] sm:$0xf]
                %3604 = vst [vmem:[%s3538 + $0x80] sm:$0xf] %v3603
                %v3605 = vld [vmem:[%s3537 + $0x84] sm:$0xf]
                %3606 = vst [vmem:[%s3538 + $0x84] sm:$0xf] %v3605
                %v3607 = vld [vmem:[%s3537 + $0x88] sm:$0xf]
                %3608 = vst [vmem:[%s3538 + $0x88] sm:$0xf] %v3607
                %v3609 = vld [vmem:[%s3537 + $0x8c] sm:$0xf]
                %3610 = vst [vmem:[%s3538 + $0x8c] sm:$0xf] %v3609
                %v3611 = vld [vmem:[%s3537 + $0x90] sm:$0xf]
                %3612 = vst [vmem:[%s3538 + $0x90] sm:$0xf] %v3611
                %v3613 = vld [vmem:[%s3537 + $0x94] sm:$0xf]
                %3614 = vst [vmem:[%s3538 + $0x94] sm:$0xf] %v3613
                %v3615 = vld [vmem:[%s3537 + $0x98] sm:$0xf]
                %3616 = vst [vmem:[%s3538 + $0x98] sm:$0xf] %v3615
                %v3617 = vld [vmem:[%s3537 + $0x9c] sm:$0xf]
                %3618 = vst [vmem:[%s3538 + $0x9c] sm:$0xf] %v3617
                %v3619 = vld [vmem:[%s3537 + $0xa0] sm:$0xf]
                %3620 = vst [vmem:[%s3538 + $0xa0] sm:$0xf] %v3619
                %v3621 = vld [vmem:[%s3537 + $0xa4] sm:$0xf]
                %3622 = vst [vmem:[%s3538 + $0xa4] sm:$0xf] %v3621
                %v3623 = vld [vmem:[%s3537 + $0xa8] sm:$0xf]
                %3624 = vst [vmem:[%s3538 + $0xa8] sm:$0xf] %v3623
                %v3625 = vld [vmem:[%s3537 + $0xac] sm:$0xf]
                %3626 = vst [vmem:[%s3538 + $0xac] sm:$0xf] %v3625
                %v3627 = vld [vmem:[%s3537 + $0xb0] sm:$0xf]
                %3628 = vst [vmem:[%s3538 + $0xb0] sm:$0xf] %v3627
                %v3629 = vld [vmem:[%s3537 + $0xb4] sm:$0xf]
                %3630 = vst [vmem:[%s3538 + $0xb4] sm:$0xf] %v3629
                %v3631 = vld [vmem:[%s3537 + $0xb8] sm:$0xf]
                %3632 = vst [vmem:[%s3538 + $0xb8] sm:$0xf] %v3631
                %v3633 = vld [vmem:[%s3537 + $0xbc] sm:$0xf]
                %3634 = vst [vmem:[%s3538 + $0xbc] sm:$0xf] %v3633
                %v3635 = vld [vmem:[%s3537 + $0xc0] sm:$0xf]
                %3636 = vst [vmem:[%s3538 + $0xc0] sm:$0xf] %v3635
                %v3637 = vld [vmem:[%s3537 + $0xc4] sm:$0xf]
                %3638 = vst [vmem:[%s3538 + $0xc4] sm:$0xf] %v3637
                %v3639 = vld [vmem:[%s3537 + $0xc8] sm:$0xf]
                %3640 = vst [vmem:[%s3538 + $0xc8] sm:$0xf] %v3639
                %v3641 = vld [vmem:[%s3537 + $0xcc] sm:$0xf]
                %3642 = vst [vmem:[%s3538 + $0xcc] sm:$0xf] %v3641
                %v3643 = vld [vmem:[%s3537 + $0xd0] sm:$0xf]
                %3644 = vst [vmem:[%s3538 + $0xd0] sm:$0xf] %v3643
                %v3645 = vld [vmem:[%s3537 + $0xd4] sm:$0xf]
                %3646 = vst [vmem:[%s3538 + $0xd4] sm:$0xf] %v3645
                %v3647 = vld [vmem:[%s3537 + $0xd8] sm:$0xf]
                %3648 = vst [vmem:[%s3538 + $0xd8] sm:$0xf] %v3647
                %v3649 = vld [vmem:[%s3537 + $0xdc] sm:$0xf]
                %3650 = vst [vmem:[%s3538 + $0xdc] sm:$0xf] %v3649
                %v3651 = vld [vmem:[%s3537 + $0xe0] sm:$0xf]
                %3652 = vst [vmem:[%s3538 + $0xe0] sm:$0xf] %v3651
                %v3653 = vld [vmem:[%s3537 + $0xe4] sm:$0xf]
                %3654 = vst [vmem:[%s3538 + $0xe4] sm:$0xf] %v3653
                %v3655 = vld [vmem:[%s3537 + $0xe8] sm:$0xf]
                %3656 = vst [vmem:[%s3538 + $0xe8] sm:$0xf] %v3655
                %v3657 = vld [vmem:[%s3537 + $0xec] sm:$0xf]
                %3658 = vst [vmem:[%s3538 + $0xec] sm:$0xf] %v3657
                %v3659 = vld [vmem:[%s3537 + $0xf0] sm:$0xf]
                %3660 = vst [vmem:[%s3538 + $0xf0] sm:$0xf] %v3659
                %v3661 = vld [vmem:[%s3537 + $0xf4] sm:$0xf]
                %3662 = vst [vmem:[%s3538 + $0xf4] sm:$0xf] %v3661
                %v3663 = vld [vmem:[%s3537 + $0xf8] sm:$0xf]
                %3664 = vst [vmem:[%s3538 + $0xf8] sm:$0xf] %v3663
                %v3665 = vld [vmem:[%s3537 + $0xfc] sm:$0xf]
                %3666 = vst [vmem:[%s3538 + $0xfc] sm:$0xf] %v3665
                %s3667 = sadd.s32 1, %s3536
                %p3668 = scmp.ge.s32.totalorder %s3667, %s3529
                %s3669 = scalar_select %p3668, 0, %s3667
                %s3670 = smul.u32 %s3669, 256
                %s3671 = smul.u32 %s3669, 256
                %s3672 = scalar_lea.vmem %s3509, %s3670 [#allocation2]
                %s3673 = scalar_lea.vmem %s3520, %s3671
              $region61: #{tpu_custom_call.1} parent=55 // loop_footer
                %s3533 = sadd.s32 %s3531, 1
              $region62: #{tpu_custom_call.1} parent=55 // loop_footer_branch
                %3530 = sbr.rel target = $region58
              $region63: #{tpu_custom_call.1} parent=55 // loop_exit
                _
              %s3674 = sshrl.u32 %s3516, 6
              %s3675 = sand.u32 %s3516, 63
              %s3676 = smul.u32 %s3674, 64
              %s3677 = smul.u32 4, %s3676
              %s3678 = scalar_lea.vmem %s3509, %s3677 [#allocation2]
              %s3679 = smul.u32 4, %s3676
              %s3680 = scalar_lea.vmem %s3520, %s3679
              // While loop
              $region64: #{tpu_custom_call.1} parent=55 // loop_pre_header
                _
              $region65: #{tpu_custom_call.1} parent=55 // loop_header
                %s3682 = sphi 0, %s3684
                %p3683 = scmp.ge.s32.totalorder %s3682, %s3675
                %s3687 = sphi 0, %s3694
                %s3688 = sphi %s3678, %s3697
                %s3689 = sphi %s3680, %s3698
              $region66: #{tpu_custom_call.1} parent=55 // loop_header_branch
                %3686 = sbr.rel (%p3683) target = $region70
              $region67: #{tpu_custom_call.1} parent=55 // loop_body
                %v3690 = vld [vmem:[%s3688] sm:$0xf]
                %3691 = vst [vmem:[%s3689] sm:$0xf] %v3690
                %s3692 = sadd.s32 1, %s3687
                %p3693 = scmp.ge.s32.totalorder %s3692, %s3675
                %s3694 = scalar_select %p3693, 0, %s3692
                %s3695 = smul.u32 %s3694, 4
                %s3696 = smul.u32 %s3694, 4
                %s3697 = scalar_lea.vmem %s3678, %s3695 [#allocation2]
                %s3698 = scalar_lea.vmem %s3680, %s3696
              $region68: #{tpu_custom_call.1} parent=55 // loop_footer
                %s3684 = sadd.s32 %s3682, 1
              $region69: #{tpu_custom_call.1} parent=55 // loop_footer_branch
                %3681 = sbr.rel target = $region65
              $region70: #{tpu_custom_call.1} parent=55 // loop_exit
                _
            $region56: #{tpu_custom_call.1} parent=47 // pred_fallthru
              _
          $region48: #{tpu_custom_call.1} parent=43 // pred_fallthru
            _
          %3872 = vnop
        $region44: #{tpu_custom_call.1} parent=39 // pred_fallthru
          _
      $region40: #{tpu_custom_call.1} parent=5 // pred_fallthru
        _
      %p3873 = scmp.le.s32.totalorder 2, %s11
      // Predicated region
      $region89: #{tpu_custom_call.1} parent=5 // pred_check
        %p3874 = pneg %p3873
      $region90: #{tpu_custom_call.1} parent=5 // pred_check_branch
        %3876 = sbr.rel (%p3874) target = $region92
      $region91: #{tpu_custom_call.1} parent=5 // pred_region
        %s3877 = ssub.s32 %s11, 2
        // Predicated region
        $region93: #{tpu_custom_call.1} parent=91 // pred_check
          %p3878 = pneg %p155
        $region94: #{tpu_custom_call.1} parent=91 // pred_check_branch
          %3880 = sbr.rel (%p3878) target = $region96
        $region95: #{tpu_custom_call.1} parent=91 // pred_region
          %s3881 = sand.u32 %s140, 1
          %s3882 = sand.u32 %s140, 1
          %s3883 = smul.addr %s3882, 256
          %s3884 = scalar_lea.vmem [#allocation2], %s3883
        $region96: #{tpu_custom_call.1} parent=91 // pred_fallthru
          _
      $region92: #{tpu_custom_call.1} parent=5 // pred_fallthru
        _
    $region6: #{tpu_custom_call.1} parent=1 // loop_footer
      %s15 = sadd.s32 1, %s11
    $region7: #{tpu_custom_call.1} parent=1 // loop_footer_branch
      %10 = sbr.rel target = $region3
    $region8: #{tpu_custom_call.1} parent=1 // loop_exit
      _

</llo_original>
